<compile_context>
chip_gen: v5e
topology: v5e:2x2
jax: 0.10.0
libtpu: 0.0.40
codegen_flags: <defaults>
</compile_context>

<pallas_src>
import jax
import jax.numpy as jnp
from jax.experimental import pallas as pl
from jax.experimental.pallas import tpu as pltpu


SLAB_LANES = 128  # lane-dense packed output width: [ocr | cls | aux | pad]


# ------------------------------ fused kernel --------------------------------

def ocr_fused_kernel(
        x_ref,                                            # (1, H, W, Cin)
        w3_ref, b3_ref,                                   # (9*Cin, Cmid), (1, Cmid)
        wa1_ref, ba1_ref, wa2_ref, ba2c_ref,              # aux head
        wa2p_ref, ba2p_ref,                               # aux head, slab-padded
        wq1_ref, bq1_ref, wq2_ref, bq2_ref,               # f_pixel (scale folded)
        wkv1_ref, bkv1_ref, wk2_ref, bk2_ref,             # f_object / f_down packed
        wup_ref, bup_ref,                                 # f_up
        wcatp_ref, bcatp_ref, wclsp_ref, bclsp_ref,       # concat-conv + cls, padded
        slab_ref,                                         # (1, N, SLAB_LANES)
        xpad_ref):                                        # VMEM (H+2, W+2, Cin)
    _, H, W, Cin = x_ref.shape
    N = H * W
    Ck = bq1_ref.shape[-1]

    def lin_relu(x, w_ref, b_ref):
        return jnp.maximum(
            jnp.dot(x, w_ref[...], preferred_element_type=jnp.float32) + b_ref[...],
            0.0)

    # ---- conv3x3_ocr: halo in VMEM scratch, im2col, single MXU matmul ------
    xpad_ref[...] = jnp.zeros_like(xpad_ref)
    xpad_ref[pl.ds(1, H), pl.ds(1, W), :] = x_ref[0]
    cols = [xpad_ref[pl.ds(ky, H), pl.ds(kx, W), :].reshape(N, Cin)
            for ky in range(3) for kx in range(3)]
    patch = jnp.concatenate(cols, axis=-1)                       # (N, 9*Cin)
    f = jnp.maximum(
        jnp.dot(patch, w3_ref[...], preferred_element_type=jnp.float32)
        + b3_ref[...], 0.0)                                      # (N, Cmid)

    # ---- aux head ----------------------------------------------------------
    xf = x_ref[0].reshape(N, Cin)
    h_aux = lin_relu(xf, wa1_ref, ba1_ref)                       # (N, Cin)

    # ---- SpatialGather: softmax over N in (K, N) lane-dense layout ---------
    auxT = jax.lax.dot_general(wa2_ref[...], h_aux,
                               (((0,), (1,)), ((), ())),
                               preferred_element_type=jnp.float32)  # (K, N)
    auxT = auxT + ba2c_ref[...]                                  # (K, 1) bcast
    m = jnp.max(auxT, axis=-1, keepdims=True)
    e = jnp.exp(auxT - m)
    sm = e * pl.reciprocal(jnp.sum(e, axis=-1, keepdims=True), approx=True)
    ctx = jnp.dot(sm, f, preferred_element_type=jnp.float32)     # (K, Cmid)

    # ---- ObjectAttentionBlock2D -------------------------------------------
    q = lin_relu(lin_relu(f, wq1_ref, bq1_ref), wq2_ref, bq2_ref)  # (N, Ck) *scaled*
    kv = lin_relu(ctx, wkv1_ref, bkv1_ref)                         # (K, 2*Ck)
    k1 = kv[:, :Ck]
    v = kv[:, Ck:]
    k = lin_relu(k1, wk2_ref, bk2_ref)                             # (K, Ck)

    # attention softmax in (K, N) layout (softmax over K = sublane axis)
    simT = jax.lax.dot_general(k, q, (((1,), (1,)), ((), ())),
                               preferred_element_type=jnp.float32)  # (K, N)
    mm = jnp.max(simT, axis=0, keepdims=True)
    ee = jnp.exp(simT - mm)
    att_w = ee * pl.reciprocal(jnp.sum(ee, axis=0, keepdims=True), approx=True)
    att = jax.lax.dot_general(att_w, v, (((0,), (0,)), ((), ())),
                              preferred_element_type=jnp.float32)   # (N, Ck)
    up = lin_relu(att, wup_ref, bup_ref)                            # (N, Cmid)

    # ---- concat-conv + cls head, packed into one lane-dense slab -----------
    cat = jnp.concatenate([up, f], axis=-1)                         # (N, 2*Cmid)
    ocr_pad = jnp.maximum(
        jnp.dot(cat, wcatp_ref[...], preferred_element_type=jnp.float32)
        + bcatp_ref[...], 0.0)                                      # cols [0:Cmid]
    cls_pad = (jnp.dot(ocr_pad, wclsp_ref[...],
                       preferred_element_type=jnp.float32) + bclsp_ref[...])
    aux_pad = (jnp.dot(h_aux, wa2p_ref[...],
                       preferred_element_type=jnp.float32) + ba2p_ref[...])
    slab_ref[0] = ocr_pad + cls_pad + aux_pad                       # (N, 128)


# ------------------------------ pallas_call glue -----------------------------

_KARG_NAMES = ('w3', 'b3',
               'wa1', 'ba1', 'wa2', 'ba2c', 'wa2p', 'ba2p',
               'wq1', 'bq1', 'wq2', 'bq2',
               'wkv1', 'bkv1', 'wk2', 'bk2',
               'wup', 'bup',
               'wcatp', 'bcatp', 'wclsp', 'bclsp')


def ocr_block_forward(x, K):
    """x: (B, H, W, high_level_ch) NHWC.  Returns (cls_out, aux_out, ocr_feats)."""
    B, H, W, cin = x.shape
    N = H * W
    cmid = K['b3'].shape[-1]
    ncls = K['wa2'].shape[-1]
    w_args = [K[n] for n in _KARG_NAMES]

    in_specs = ([pl.BlockSpec((1, H, W, cin), lambda b: (b, 0, 0, 0))]
                + [pl.BlockSpec(a.shape, lambda b: (0, 0)) for a in w_args])

    slab = pl.pallas_call(
        ocr_fused_kernel,
        out_shape=jax.ShapeDtypeStruct((B, N, SLAB_LANES), jnp.float32),
        grid=(B,),
        in_specs=in_specs,
        out_specs=pl.BlockSpec((1, N, SLAB_LANES), lambda b: (b, 0, 0)),
        scratch_shapes=[pltpu.VMEM((H + 2, W + 2, cin), jnp.float32)],
        compiler_params=pltpu.CompilerParams(dimension_semantics=("parallel",)),
    )(x, *w_args)

    ocr = slab[..., :cmid].reshape(B, H, W, cmid)
    cls = slab[..., cmid:cmid + ncls].reshape(B, H, W, ncls)
    aux = slab[..., cmid + ncls:cmid + 2 * ncls].reshape(B, H, W, ncls)
    return cls, aux, ocr


# ------------------------- deterministic parameters -------------------------

def init_params(key, cin, cmid, ck, ncls):
    """Logical (BN-folded) parameters, same parameterization as the reference."""
    keys = iter(jax.random.split(key, 64))

    def w(shape, scale=0.1):
        return (jax.random.normal(next(keys), shape) * scale).astype(jnp.float32)

    def bn(c):
        g = jax.random.uniform(next(keys), (c,), minval=0.5, maxval=1.5)
        bt = jax.random.normal(next(keys), (c,)) * 0.1
        m = jax.random.normal(next(keys), (c,)) * 0.1
        v = jax.random.uniform(next(keys), (c,), minval=0.5, maxval=1.5)
        return tuple(a.astype(jnp.float32) for a in (g, bt, m, v))

    def fold(wt, bias, bnp, eps=1e-5):
        g, bt, m, v = bnp
        s = g / jnp.sqrt(v + eps)
        t = bt - s * m
        b_eff = (bias * s + t) if bias is not None else t
        return wt * s, b_eff.reshape(1, -1)

    P = {}
    # conv3x3_ocr: Conv3x3(bias) + BN + ReLU (weights stored (9, Cin, Cmid))
    P['w3'], P['b3'] = fold(w((9, cin, cmid)), w((cmid,), 0.05), bn(cmid))
    # aux_head: Conv1x1(bias)+BN+ReLU , Conv1x1(bias)
    P['wa1'], P['ba1'] = fold(w((cin, cin)), w((cin,), 0.05), bn(cin))
    P['wa2'] = w((cin, ncls))
    P['ba2'] = w((ncls,), 0.05).reshape(1, -1)
    # ObjectAttentionBlock2D (convs bias=False, followed by BN+ReLU)
    P['wq1'], P['bq1'] = fold(w((cmid, ck)), None, bn(ck))    # f_pixel
    P['wq2'], P['bq2'] = fold(w((ck, ck)), None, bn(ck))
    P['wk1'], P['bk1'] = fold(w((cmid, ck)), None, bn(ck))    # f_object
    P['wk2'], P['bk2'] = fold(w((ck, ck)), None, bn(ck))
    P['wv'], P['bv'] = fold(w((cmid, ck)), None, bn(ck))      # f_down
    P['wup'], P['bup'] = fold(w((ck, cmid)), None, bn(cmid))  # f_up
    # SpatialOCR conv_bn_dropout: Conv1x1(2C->C, no bias)+BN+ReLU (+dropout=id)
    P['wcat'], P['bcat'] = fold(w((2 * cmid, cmid)), None, bn(cmid))
    # cls_head: Conv1x1 with bias
    P['wcls'] = w((cmid, ncls))
    P['bcls'] = w((ncls,), 0.05).reshape(1, -1)
    return P


def pack_params(P):
    """Kernel-ready params: im2col weight, packed k/v, folded scale,
    slab-padded (lane-dense) output weights."""
    cin = P['wa1'].shape[0]
    cmid = P['b3'].shape[-1]
    ck = P['bq1'].shape[-1]
    ncls = P['wa2'].shape[-1]
    assert cmid + 2 * ncls <= SLAB_LANES, "widen SLAB_LANES for these shapes"
    cls_off, aux_off = cmid, cmid + ncls
    s = float(ck) ** -0.5  # key-channel scale, folded into f_pixel stage 2

    K = {}
    K['w3'] = P['w3'].reshape(9 * cin, cmid)
    K['b3'] = P['b3']
    K['wa1'], K['ba1'] = P['wa1'], P['ba1']
    K['wa2'] = P['wa2']
    K['ba2c'] = P['ba2'].reshape(ncls, 1)
    K['wa2p'] = (jnp.zeros((cin, SLAB_LANES), jnp.float32)
                 .at[:, aux_off:aux_off + ncls].set(P['wa2']))
    K['ba2p'] = (jnp.zeros((1, SLAB_LANES), jnp.float32)
                 .at[:, aux_off:aux_off + ncls].set(P['ba2']))
    K['wq1'], K['bq1'] = P['wq1'], P['bq1']
    K['wq2'], K['bq2'] = P['wq2'] * s, P['bq2'] * s
    K['wkv1'] = jnp.concatenate([P['wk1'], P['wv']], axis=1)
    K['bkv1'] = jnp.concatenate([P['bk1'], P['bv']], axis=1)
    K['wk2'], K['bk2'] = P['wk2'], P['bk2']
    K['wup'], K['bup'] = P['wup'], P['bup']
    K['wcatp'] = (jnp.zeros((2 * cmid, SLAB_LANES), jnp.float32)
                  .at[:, :cmid].set(P['wcat']))
    K['bcatp'] = (jnp.zeros((1, SLAB_LANES), jnp.float32)
                  .at[:, :cmid].set(P['bcat']))
    K['wclsp'] = (jnp.zeros((SLAB_LANES, SLAB_LANES), jnp.float32)
                  .at[:cmid, cls_off:cls_off + ncls].set(P['wcls']))
    K['bclsp'] = (jnp.zeros((1, SLAB_LANES), jnp.float32)
                  .at[:, cls_off:cls_off + ncls].set(P['bcls']))
    return K


# ------------------------------ pure-JAX reference ---------------------------

def ref_forward(x, P):
    B, H, W, Cin = x.shape
    with jax.default_matmul_precision("highest"):
        xp = jnp.pad(x, ((0, 0), (1, 1), (1, 1), (0, 0)))
        Cmid = P['w3'].shape[-1]
        feats = jnp.zeros((B, H, W, Cmid), jnp.float32)
        for ky in range(3):
            for kx in range(3):
                feats = feats + jnp.einsum('bhwc,cd->bhwd',
                                           xp[:, ky:ky + H, kx:kx + W, :],
                                           P['w3'][3 * ky + kx])
        feats = jax.nn.relu(feats + P['b3'])
        ff = feats.reshape(B, H * W, Cmid)
        xf = x.reshape(B, H * W, Cin)
        h = jax.nn.relu(xf @ P['wa1'] + P['ba1'])
        aux = h @ P['wa2'] + P['ba2']
        sm = jax.nn.softmax(aux, axis=1)
        ctx = jnp.einsum('bnk,bnc->bkc', sm, ff)
        lr = lambda a, w_, b_: jax.nn.relu(a @ w_ + b_)
        q = lr(lr(ff, P['wq1'], P['bq1']), P['wq2'], P['bq2'])
        k = lr(lr(ctx, P['wk1'], P['bk1']), P['wk2'], P['bk2'])
        v = lr(ctx, P['wv'], P['bv'])
        ck = q.shape[-1]
        sim = jnp.einsum('bnd,bkd->bnk', q, k) * (float(ck) ** -0.5)
        att = jnp.einsum('bnk,bkd->bnd', jax.nn.softmax(sim, axis=-1), v)
        up = lr(att, P['wup'], P['bup'])
        cat = jnp.concatenate([up, ff], axis=-1)
        ocr = jax.nn.relu(cat @ P['wcat'] + P['bcat'])
        cls = ocr @ P['wcls'] + P['bcls']
    return (cls.reshape(B, H, W, -1), aux.reshape(B, H, W, -1),
            ocr.reshape(B, H, W, Cmid))


# ----------------------------------- main ------------------------------------

if __name__ == "__main__":
    B, H, W = 2, 16, 16
    HIGH_LEVEL_CH, OCR_MID, OCR_KEY, NUM_CLASSES = 16, 32, 16, 8

    key = jax.random.PRNGKey(0)
    kx_, kp = jax.random.split(key)
    x = jax.random.normal(kx_, (B, H, W, HIGH_LEVEL_CH), dtype=jnp.float32)
    P = init_params(kp, HIGH_LEVEL_CH, OCR_MID, OCR_KEY, NUM_CLASSES)
    K = pack_params(P)

    fwd = jax.jit(ocr_block_forward)
    cls_out, aux_out, ocr_feats = fwd(x, K)
    jax.block_until_ready((cls_out, aux_out, ocr_feats))

    rcls, raux, rocr = ref_forward(x, P)
    # Tolerance accounts for approx EUP reciprocal in the two softmaxes and
    # f32 MXU pass rounding; values are O(1).
    tol = 2e-2
    for got, want, name in ((cls_out, rcls, "cls_out"),
                            (aux_out, raux, "aux_out"),
                            (ocr_feats, rocr, "ocr_feats")):
        err = float(jnp.max(jnp.abs(got - want)))
        if err > tol:
            raise AssertionError(f"{name} mismatch: max abs err {err}")

    print("KERNEL_OK")
</pallas_src>

<mosaic_0001>
module attributes {stable_mosaic.version = 11 : i64} {
  func.func @ocr_fused_kernel(%arg0: i32, %arg1: memref<1x16x16x16xf32, #tpu.memory_space<vmem>>, %arg2: memref<144x32xf32, #tpu.memory_space<vmem>>, %arg3: memref<1x32xf32, #tpu.memory_space<vmem>>, %arg4: memref<16x16xf32, #tpu.memory_space<vmem>>, %arg5: memref<1x16xf32, #tpu.memory_space<vmem>>, %arg6: memref<16x8xf32, #tpu.memory_space<vmem>>, %arg7: memref<8x1xf32, #tpu.memory_space<vmem>>, %arg8: memref<16x128xf32, #tpu.memory_space<vmem>>, %arg9: memref<1x128xf32, #tpu.memory_space<vmem>>, %arg10: memref<32x16xf32, #tpu.memory_space<vmem>>, %arg11: memref<1x16xf32, #tpu.memory_space<vmem>>, %arg12: memref<16x16xf32, #tpu.memory_space<vmem>>, %arg13: memref<1x16xf32, #tpu.memory_space<vmem>>, %arg14: memref<32x32xf32, #tpu.memory_space<vmem>>, %arg15: memref<1x32xf32, #tpu.memory_space<vmem>>, %arg16: memref<16x16xf32, #tpu.memory_space<vmem>>, %arg17: memref<1x16xf32, #tpu.memory_space<vmem>>, %arg18: memref<16x32xf32, #tpu.memory_space<vmem>>, %arg19: memref<1x32xf32, #tpu.memory_space<vmem>>, %arg20: memref<64x128xf32, #tpu.memory_space<vmem>>, %arg21: memref<1x128xf32, #tpu.memory_space<vmem>>, %arg22: memref<128x128xf32, #tpu.memory_space<vmem>>, %arg23: memref<1x128xf32, #tpu.memory_space<vmem>>, %arg24: memref<1x256x128xf32, #tpu.memory_space<vmem>>, %arg25: memref<18x18x16xf32, #tpu.memory_space<vmem>>) attributes {dimension_semantics = [#tpu.dimension_semantics<parallel>], iteration_bounds = array<i64: 2>, scalar_prefetch = 0 : i64, scratch_operands = 1 : i64, tpu.core_type = #tpu.core_type<tc>, window_params = [{transform_indices = @transform_0, window_bounds = array<i64: 1, 16, 16, 16>}, {pipeline_mode = #tpu.pipeline_mode<synchronous>, transform_indices = @transform_1, window_bounds = array<i64: 144, 32>}, {pipeline_mode = #tpu.pipeline_mode<synchronous>, transform_indices = @transform_2, window_bounds = array<i64: 1, 32>}, {pipeline_mode = #tpu.pipeline_mode<synchronous>, transform_indices = @transform_3, window_bounds = array<i64: 16, 16>}, {pipeline_mode = #tpu.pipeline_mode<synchronous>, transform_indices = @transform_4, window_bounds = array<i64: 1, 16>}, {pipeline_mode = #tpu.pipeline_mode<synchronous>, transform_indices = @transform_5, window_bounds = array<i64: 16, 8>}, {pipeline_mode = #tpu.pipeline_mode<synchronous>, transform_indices = @transform_6, window_bounds = array<i64: 8, 1>}, {pipeline_mode = #tpu.pipeline_mode<synchronous>, transform_indices = @transform_7, window_bounds = array<i64: 16, 128>}, {pipeline_mode = #tpu.pipeline_mode<synchronous>, transform_indices = @transform_8, window_bounds = array<i64: 1, 128>}, {pipeline_mode = #tpu.pipeline_mode<synchronous>, transform_indices = @transform_9, window_bounds = array<i64: 32, 16>}, {pipeline_mode = #tpu.pipeline_mode<synchronous>, transform_indices = @transform_10, window_bounds = array<i64: 1, 16>}, {pipeline_mode = #tpu.pipeline_mode<synchronous>, transform_indices = @transform_11, window_bounds = array<i64: 16, 16>}, {pipeline_mode = #tpu.pipeline_mode<synchronous>, transform_indices = @transform_12, window_bounds = array<i64: 1, 16>}, {pipeline_mode = #tpu.pipeline_mode<synchronous>, transform_indices = @transform_13, window_bounds = array<i64: 32, 32>}, {pipeline_mode = #tpu.pipeline_mode<synchronous>, transform_indices = @transform_14, window_bounds = array<i64: 1, 32>}, {pipeline_mode = #tpu.pipeline_mode<synchronous>, transform_indices = @transform_15, window_bounds = array<i64: 16, 16>}, {pipeline_mode = #tpu.pipeline_mode<synchronous>, transform_indices = @transform_16, window_bounds = array<i64: 1, 16>}, {pipeline_mode = #tpu.pipeline_mode<synchronous>, transform_indices = @transform_17, window_bounds = array<i64: 16, 32>}, {pipeline_mode = #tpu.pipeline_mode<synchronous>, transform_indices = @transform_18, window_bounds = array<i64: 1, 32>}, {pipeline_mode = #tpu.pipeline_mode<synchronous>, transform_indices = @transform_19, window_bounds = array<i64: 64, 128>}, {pipeline_mode = #tpu.pipeline_mode<synchronous>, transform_indices = @transform_20, window_bounds = array<i64: 1, 128>}, {pipeline_mode = #tpu.pipeline_mode<synchronous>, transform_indices = @transform_21, window_bounds = array<i64: 128, 128>}, {pipeline_mode = #tpu.pipeline_mode<synchronous>, transform_indices = @transform_22, window_bounds = array<i64: 1, 128>}, {transform_indices = @transform_23, window_bounds = array<i64: 1, 256, 128>}]} {
    %cst = arith.constant 0.000000e+00 : f32
    %0 = vector.broadcast %cst : f32 to vector<18x18x16xf32>
    %c0 = arith.constant 0 : index
    %c0_0 = arith.constant 0 : index
    %c0_1 = arith.constant 0 : index
    %1 = vector.load %arg25[%c0, %c0_0, %c0_1] : memref<18x18x16xf32, #tpu.memory_space<vmem>>, vector<18x18x16xf32>
    tpu.vector_store %arg25[%c0, %c0_0, %c0_1], %0 {strides = array<i32>} : memref<18x18x16xf32, #tpu.memory_space<vmem>>, vector<18x18x16xf32>,
    %c0_2 = arith.constant 0 : index
    %c0_3 = arith.constant 0 : index
    %c0_4 = arith.constant 0 : index
    %c0_5 = arith.constant 0 : index
    %2 = vector.load %arg1[%c0_2, %c0_3, %c0_4, %c0_5] : memref<1x16x16x16xf32, #tpu.memory_space<vmem>>, vector<1x16x16x16xf32>
    %3 = vector.shape_cast %2 : vector<1x16x16x16xf32> to vector<16x16x16xf32>
    %c1 = arith.constant 1 : index
    %c1_6 = arith.constant 1 : index
    %c0_7 = arith.constant 0 : index
    %4 = vector.load %arg25[%c1, %c1_6, %c0_7] : memref<18x18x16xf32, #tpu.memory_space<vmem>>, vector<16x16x16xf32>
    tpu.vector_store %arg25[%c1, %c1_6, %c0_7], %3 {strides = array<i32>} : memref<18x18x16xf32, #tpu.memory_space<vmem>>, vector<16x16x16xf32>,
    %c0_8 = arith.constant 0 : index
    %c0_9 = arith.constant 0 : index
    %c0_10 = arith.constant 0 : index
    %5 = vector.load %arg25[%c0_8, %c0_9, %c0_10] : memref<18x18x16xf32, #tpu.memory_space<vmem>>, vector<16x16x16xf32>
    %6 = vector.shape_cast %5 : vector<16x16x16xf32> to vector<256x16xf32>
    %c0_11 = arith.constant 0 : index
    %c1_12 = arith.constant 1 : index
    %c0_13 = arith.constant 0 : index
    %7 = vector.load %arg25[%c0_11, %c1_12, %c0_13] : memref<18x18x16xf32, #tpu.memory_space<vmem>>, vector<16x16x16xf32>
    %8 = vector.shape_cast %7 : vector<16x16x16xf32> to vector<256x16xf32>
    %c0_14 = arith.constant 0 : index
    %c2 = arith.constant 2 : index
    %c0_15 = arith.constant 0 : index
    %9 = vector.load %arg25[%c0_14, %c2, %c0_15] : memref<18x18x16xf32, #tpu.memory_space<vmem>>, vector<16x16x16xf32>
    %10 = vector.shape_cast %9 : vector<16x16x16xf32> to vector<256x16xf32>
    %c1_16 = arith.constant 1 : index
    %c0_17 = arith.constant 0 : index
    %c0_18 = arith.constant 0 : index
    %11 = vector.load %arg25[%c1_16, %c0_17, %c0_18] : memref<18x18x16xf32, #tpu.memory_space<vmem>>, vector<16x16x16xf32>
    %12 = vector.shape_cast %11 : vector<16x16x16xf32> to vector<256x16xf32>
    %c1_19 = arith.constant 1 : index
    %c1_20 = arith.constant 1 : index
    %c0_21 = arith.constant 0 : index
    %13 = vector.load %arg25[%c1_19, %c1_20, %c0_21] : memref<18x18x16xf32, #tpu.memory_space<vmem>>, vector<16x16x16xf32>
    %14 = vector.shape_cast %13 : vector<16x16x16xf32> to vector<256x16xf32>
    %c1_22 = arith.constant 1 : index
    %c2_23 = arith.constant 2 : index
    %c0_24 = arith.constant 0 : index
    %15 = vector.load %arg25[%c1_22, %c2_23, %c0_24] : memref<18x18x16xf32, #tpu.memory_space<vmem>>, vector<16x16x16xf32>
    %16 = vector.shape_cast %15 : vector<16x16x16xf32> to vector<256x16xf32>
    %c2_25 = arith.constant 2 : index
    %c0_26 = arith.constant 0 : index
    %c0_27 = arith.constant 0 : index
    %17 = vector.load %arg25[%c2_25, %c0_26, %c0_27] : memref<18x18x16xf32, #tpu.memory_space<vmem>>, vector<16x16x16xf32>
    %18 = vector.shape_cast %17 : vector<16x16x16xf32> to vector<256x16xf32>
    %c2_28 = arith.constant 2 : index
    %c1_29 = arith.constant 1 : index
    %c0_30 = arith.constant 0 : index
    %19 = vector.load %arg25[%c2_28, %c1_29, %c0_30] : memref<18x18x16xf32, #tpu.memory_space<vmem>>, vector<16x16x16xf32>
    %20 = vector.shape_cast %19 : vector<16x16x16xf32> to vector<256x16xf32>
    %c2_31 = arith.constant 2 : index
    %c2_32 = arith.constant 2 : index
    %c0_33 = arith.constant 0 : index
    %21 = vector.load %arg25[%c2_31, %c2_32, %c0_33] : memref<18x18x16xf32, #tpu.memory_space<vmem>>, vector<16x16x16xf32>
    %22 = vector.shape_cast %21 : vector<16x16x16xf32> to vector<256x16xf32>
    %23 = tpu.concatenate %6, %8, %10, %12, %14, %16, %18, %20, %22 in 1 : vector<256x16xf32>, vector<256x16xf32>, vector<256x16xf32>, vector<256x16xf32>, vector<256x16xf32>, vector<256x16xf32>, vector<256x16xf32>, vector<256x16xf32>, vector<256x16xf32> -> vector<256x144xf32>
    %c0_34 = arith.constant 0 : index
    %c0_35 = arith.constant 0 : index
    %24 = vector.load %arg2[%c0_34, %c0_35] : memref<144x32xf32, #tpu.memory_space<vmem>>, vector<144x32xf32>
    %cst_36 = arith.constant dense<0.000000e+00> : vector<256x32xf32>
    %25 = tpu.matmul %23, %24, %cst_36 {dimension_numbers = #tpu.dot_dimension_numbers<[1], [0], [0], [1], [0, 0, 1, 1], [], []>} : vector<256x144xf32>, vector<144x32xf32>, vector<256x32xf32> -> vector<256x32xf32>
    %c0_37 = arith.constant 0 : index
    %c0_38 = arith.constant 0 : index
    %26 = vector.load %arg3[%c0_37, %c0_38] : memref<1x32xf32, #tpu.memory_space<vmem>>, vector<1x32xf32>
    %27 = vector.broadcast %26 : vector<1x32xf32> to vector<256x32xf32>
    %28 = arith.addf %25, %27 : vector<256x32xf32>
    %cst_39 = arith.constant 0.000000e+00 : f32
    %29 = vector.broadcast %cst_39 : f32 to vector<256x32xf32>
    %30 = arith.maximumf %28, %29 : vector<256x32xf32>
    %c0_40 = arith.constant 0 : index
    %c0_41 = arith.constant 0 : index
    %c0_42 = arith.constant 0 : index
    %c0_43 = arith.constant 0 : index
    %31 = vector.load %arg1[%c0_40, %c0_41, %c0_42, %c0_43] : memref<1x16x16x16xf32, #tpu.memory_space<vmem>>, vector<1x16x16x16xf32>
    %32 = vector.shape_cast %31 : vector<1x16x16x16xf32> to vector<16x16x16xf32>
    %33 = vector.shape_cast %32 : vector<16x16x16xf32> to vector<256x16xf32>
    %c0_44 = arith.constant 0 : index
    %c0_45 = arith.constant 0 : index
    %34 = vector.load %arg4[%c0_44, %c0_45] : memref<16x16xf32, #tpu.memory_space<vmem>>, vector<16x16xf32>
    %cst_46 = arith.constant dense<0.000000e+00> : vector<256x16xf32>
    %35 = tpu.matmul %33, %34, %cst_46 {dimension_numbers = #tpu.dot_dimension_numbers<[1], [0], [0], [1], [0, 0, 1, 1], [], []>} : vector<256x16xf32>, vector<16x16xf32>, vector<256x16xf32> -> vector<256x16xf32>
    %c0_47 = arith.constant 0 : index
    %c0_48 = arith.constant 0 : index
    %36 = vector.load %arg5[%c0_47, %c0_48] : memref<1x16xf32, #tpu.memory_space<vmem>>, vector<1x16xf32>
    %37 = vector.broadcast %36 : vector<1x16xf32> to vector<256x16xf32>
    %38 = arith.addf %35, %37 : vector<256x16xf32>
    %cst_49 = arith.constant 0.000000e+00 : f32
    %39 = vector.broadcast %cst_49 : f32 to vector<256x16xf32>
    %40 = arith.maximumf %38, %39 : vector<256x16xf32>
    %c0_50 = arith.constant 0 : index
    %c0_51 = arith.constant 0 : index
    %41 = vector.load %arg6[%c0_50, %c0_51] : memref<16x8xf32, #tpu.memory_space<vmem>>, vector<16x8xf32>
    %cst_52 = arith.constant dense<0.000000e+00> : vector<8x256xf32>
    %42 = tpu.matmul %41, %40, %cst_52 {dimension_numbers = #tpu.dot_dimension_numbers<[0], [1], [1], [0], [0, 1, 1, 0], [], []>} : vector<16x8xf32>, vector<256x16xf32>, vector<8x256xf32> -> vector<8x256xf32>
    %c0_53 = arith.constant 0 : index
    %c0_54 = arith.constant 0 : index
    %43 = vector.load %arg7[%c0_53, %c0_54] : memref<8x1xf32, #tpu.memory_space<vmem>>, vector<8x1xf32>
    %44 = vector.broadcast %43 : vector<8x1xf32> to vector<8x256xf32>
    %45 = arith.addf %42, %44 : vector<8x256xf32>
    %cst_55 = arith.constant dense<0xFF800000> : vector<8xf32>
    %46 = vector.multi_reduction <maximumf>, %45, %cst_55 [1] : vector<8x256xf32> to vector<8xf32>
    %47 = vector.shape_cast %46 : vector<8xf32> to vector<8x1xf32>
    %48 = vector.broadcast %47 : vector<8x1xf32> to vector<8x256xf32>
    %49 = arith.subf %45, %48 : vector<8x256xf32>
    %50 = math.exp %49 : vector<8x256xf32>
    %cst_56 = arith.constant dense<0.000000e+00> : vector<8xf32>
    %51 = vector.multi_reduction <add>, %50, %cst_56 [1] : vector<8x256xf32> to vector<8xf32>
    %52 = vector.shape_cast %51 : vector<8xf32> to vector<8x1xf32>
    %53 = tpu.reciprocal %52 {approx = true} : vector<8x1xf32> -> vector<8x1xf32>
    %54 = vector.broadcast %53 : vector<8x1xf32> to vector<8x256xf32>
    %55 = arith.mulf %50, %54 : vector<8x256xf32>
    %cst_57 = arith.constant dense<0.000000e+00> : vector<8x32xf32>
    %56 = tpu.matmul %55, %30, %cst_57 {dimension_numbers = #tpu.dot_dimension_numbers<[1], [0], [0], [1], [0, 0, 1, 1], [], []>} : vector<8x256xf32>, vector<256x32xf32>, vector<8x32xf32> -> vector<8x32xf32>
    %c0_58 = arith.constant 0 : index
    %c0_59 = arith.constant 0 : index
    %57 = vector.load %arg10[%c0_58, %c0_59] : memref<32x16xf32, #tpu.memory_space<vmem>>, vector<32x16xf32>
    %cst_60 = arith.constant dense<0.000000e+00> : vector<256x16xf32>
    %58 = tpu.matmul %30, %57, %cst_60 {dimension_numbers = #tpu.dot_dimension_numbers<[1], [0], [0], [1], [0, 0, 1, 1], [], []>} : vector<256x32xf32>, vector<32x16xf32>, vector<256x16xf32> -> vector<256x16xf32>
    %c0_61 = arith.constant 0 : index
    %c0_62 = arith.constant 0 : index
    %59 = vector.load %arg11[%c0_61, %c0_62] : memref<1x16xf32, #tpu.memory_space<vmem>>, vector<1x16xf32>
    %60 = vector.broadcast %59 : vector<1x16xf32> to vector<256x16xf32>
    %61 = arith.addf %58, %60 : vector<256x16xf32>
    %cst_63 = arith.constant 0.000000e+00 : f32
    %62 = vector.broadcast %cst_63 : f32 to vector<256x16xf32>
    %63 = arith.maximumf %61, %62 : vector<256x16xf32>
    %c0_64 = arith.constant 0 : index
    %c0_65 = arith.constant 0 : index
    %64 = vector.load %arg12[%c0_64, %c0_65] : memref<16x16xf32, #tpu.memory_space<vmem>>, vector<16x16xf32>
    %cst_66 = arith.constant dense<0.000000e+00> : vector<256x16xf32>
    %65 = tpu.matmul %63, %64, %cst_66 {dimension_numbers = #tpu.dot_dimension_numbers<[1], [0], [0], [1], [0, 0, 1, 1], [], []>} : vector<256x16xf32>, vector<16x16xf32>, vector<256x16xf32> -> vector<256x16xf32>
    %c0_67 = arith.constant 0 : index
    %c0_68 = arith.constant 0 : index
    %66 = vector.load %arg13[%c0_67, %c0_68] : memref<1x16xf32, #tpu.memory_space<vmem>>, vector<1x16xf32>
    %67 = vector.broadcast %66 : vector<1x16xf32> to vector<256x16xf32>
    %68 = arith.addf %65, %67 : vector<256x16xf32>
    %cst_69 = arith.constant 0.000000e+00 : f32
    %69 = vector.broadcast %cst_69 : f32 to vector<256x16xf32>
    %70 = arith.maximumf %68, %69 : vector<256x16xf32>
    %c0_70 = arith.constant 0 : index
    %c0_71 = arith.constant 0 : index
    %71 = vector.load %arg14[%c0_70, %c0_71] : memref<32x32xf32, #tpu.memory_space<vmem>>, vector<32x32xf32>
    %cst_72 = arith.constant dense<0.000000e+00> : vector<8x32xf32>
    %72 = tpu.matmul %56, %71, %cst_72 {dimension_numbers = #tpu.dot_dimension_numbers<[1], [0], [0], [1], [0, 0, 1, 1], [], []>} : vector<8x32xf32>, vector<32x32xf32>, vector<8x32xf32> -> vector<8x32xf32>
    %c0_73 = arith.constant 0 : index
    %c0_74 = arith.constant 0 : index
    %73 = vector.load %arg15[%c0_73, %c0_74] : memref<1x32xf32, #tpu.memory_space<vmem>>, vector<1x32xf32>
    %74 = vector.broadcast %73 : vector<1x32xf32> to vector<8x32xf32>
    %75 = arith.addf %72, %74 : vector<8x32xf32>
    %cst_75 = arith.constant 0.000000e+00 : f32
    %76 = vector.broadcast %cst_75 : f32 to vector<8x32xf32>
    %77 = arith.maximumf %75, %76 : vector<8x32xf32>
    %78 = vector.extract_strided_slice %77 {offsets = [0, 0], sizes = [8, 16], strides = [1, 1]} : vector<8x32xf32> to vector<8x16xf32>
    %79 = vector.extract_strided_slice %77 {offsets = [0, 16], sizes = [8, 16], strides = [1, 1]} : vector<8x32xf32> to vector<8x16xf32>
    %c0_76 = arith.constant 0 : index
    %c0_77 = arith.constant 0 : index
    %80 = vector.load %arg16[%c0_76, %c0_77] : memref<16x16xf32, #tpu.memory_space<vmem>>, vector<16x16xf32>
    %cst_78 = arith.constant dense<0.000000e+00> : vector<8x16xf32>
    %81 = tpu.matmul %78, %80, %cst_78 {dimension_numbers = #tpu.dot_dimension_numbers<[1], [0], [0], [1], [0, 0, 1, 1], [], []>} : vector<8x16xf32>, vector<16x16xf32>, vector<8x16xf32> -> vector<8x16xf32>
    %c0_79 = arith.constant 0 : index
    %c0_80 = arith.constant 0 : index
    %82 = vector.load %arg17[%c0_79, %c0_80] : memref<1x16xf32, #tpu.memory_space<vmem>>, vector<1x16xf32>
    %83 = vector.broadcast %82 : vector<1x16xf32> to vector<8x16xf32>
    %84 = arith.addf %81, %83 : vector<8x16xf32>
    %cst_81 = arith.constant 0.000000e+00 : f32
    %85 = vector.broadcast %cst_81 : f32 to vector<8x16xf32>
    %86 = arith.maximumf %84, %85 : vector<8x16xf32>
    %cst_82 = arith.constant dense<0.000000e+00> : vector<8x256xf32>
    %87 = tpu.matmul %86, %70, %cst_82 {dimension_numbers = #tpu.dot_dimension_numbers<[1], [1], [0], [0], [0, 0, 1, 0], [], []>} : vector<8x16xf32>, vector<256x16xf32>, vector<8x256xf32> -> vector<8x256xf32>
    %cst_83 = arith.constant dense<0xFF800000> : vector<256xf32>
    %88 = vector.multi_reduction <maximumf>, %87, %cst_83 [0] : vector<8x256xf32> to vector<256xf32>
    %89 = vector.shape_cast %88 : vector<256xf32> to vector<1x256xf32>
    %90 = vector.broadcast %89 : vector<1x256xf32> to vector<8x256xf32>
    %91 = arith.subf %87, %90 : vector<8x256xf32>
    %92 = math.exp %91 : vector<8x256xf32>
    %cst_84 = arith.constant dense<0.000000e+00> : vector<256xf32>
    %93 = vector.multi_reduction <add>, %92, %cst_84 [0] : vector<8x256xf32> to vector<256xf32>
    %94 = vector.shape_cast %93 : vector<256xf32> to vector<1x256xf32>
    %95 = tpu.reciprocal %94 {approx = true} : vector<1x256xf32> -> vector<1x256xf32>
    %96 = vector.broadcast %95 : vector<1x256xf32> to vector<8x256xf32>
    %97 = arith.mulf %92, %96 : vector<8x256xf32>
    %cst_85 = arith.constant dense<0.000000e+00> : vector<256x16xf32>
    %98 = tpu.matmul %97, %79, %cst_85 {dimension_numbers = #tpu.dot_dimension_numbers<[0], [0], [1], [1], [0, 1, 1, 1], [], []>} : vector<8x256xf32>, vector<8x16xf32>, vector<256x16xf32> -> vector<256x16xf32>
    %c0_86 = arith.constant 0 : index
    %c0_87 = arith.constant 0 : index
    %99 = vector.load %arg18[%c0_86, %c0_87] : memref<16x32xf32, #tpu.memory_space<vmem>>, vector<16x32xf32>
    %cst_88 = arith.constant dense<0.000000e+00> : vector<256x32xf32>
    %100 = tpu.matmul %98, %99, %cst_88 {dimension_numbers = #tpu.dot_dimension_numbers<[1], [0], [0], [1], [0, 0, 1, 1], [], []>} : vector<256x16xf32>, vector<16x32xf32>, vector<256x32xf32> -> vector<256x32xf32>
    %c0_89 = arith.constant 0 : index
    %c0_90 = arith.constant 0 : index
    %101 = vector.load %arg19[%c0_89, %c0_90] : memref<1x32xf32, #tpu.memory_space<vmem>>, vector<1x32xf32>
    %102 = vector.broadcast %101 : vector<1x32xf32> to vector<256x32xf32>
    %103 = arith.addf %100, %102 : vector<256x32xf32>
    %cst_91 = arith.constant 0.000000e+00 : f32
    %104 = vector.broadcast %cst_91 : f32 to vector<256x32xf32>
    %105 = arith.maximumf %103, %104 : vector<256x32xf32>
    %106 = tpu.concatenate %105, %30 in 1 : vector<256x32xf32>, vector<256x32xf32> -> vector<256x64xf32>
    %c0_92 = arith.constant 0 : index
    %c0_93 = arith.constant 0 : index
    %107 = vector.load %arg20[%c0_92, %c0_93] : memref<64x128xf32, #tpu.memory_space<vmem>>, vector<64x128xf32>
    %cst_94 = arith.constant dense<0.000000e+00> : vector<256x128xf32>
    %108 = tpu.matmul %106, %107, %cst_94 {dimension_numbers = #tpu.dot_dimension_numbers<[1], [0], [0], [1], [0, 0, 1, 1], [], []>} : vector<256x64xf32>, vector<64x128xf32>, vector<256x128xf32> -> vector<256x128xf32>
    %c0_95 = arith.constant 0 : index
    %c0_96 = arith.constant 0 : index
    %109 = vector.load %arg21[%c0_95, %c0_96] : memref<1x128xf32, #tpu.memory_space<vmem>>, vector<1x128xf32>
    %110 = vector.broadcast %109 : vector<1x128xf32> to vector<256x128xf32>
    %111 = arith.addf %108, %110 : vector<256x128xf32>
    %cst_97 = arith.constant 0.000000e+00 : f32
    %112 = vector.broadcast %cst_97 : f32 to vector<256x128xf32>
    %113 = arith.maximumf %111, %112 : vector<256x128xf32>
    %c0_98 = arith.constant 0 : index
    %c0_99 = arith.constant 0 : index
    %114 = vector.load %arg22[%c0_98, %c0_99] : memref<128x128xf32, #tpu.memory_space<vmem>>, vector<128x128xf32>
    %cst_100 = arith.constant dense<0.000000e+00> : vector<256x128xf32>
    %115 = tpu.matmul %113, %114, %cst_100 {dimension_numbers = #tpu.dot_dimension_numbers<[1], [0], [0], [1], [0, 0, 1, 1], [], []>} : vector<256x128xf32>, vector<128x128xf32>, vector<256x128xf32> -> vector<256x128xf32>
    %c0_101 = arith.constant 0 : index
    %c0_102 = arith.constant 0 : index
    %116 = vector.load %arg23[%c0_101, %c0_102] : memref<1x128xf32, #tpu.memory_space<vmem>>, vector<1x128xf32>
    %117 = vector.broadcast %116 : vector<1x128xf32> to vector<256x128xf32>
    %118 = arith.addf %115, %117 : vector<256x128xf32>
    %c0_103 = arith.constant 0 : index
    %c0_104 = arith.constant 0 : index
    %119 = vector.load %arg8[%c0_103, %c0_104] : memref<16x128xf32, #tpu.memory_space<vmem>>, vector<16x128xf32>
    %cst_105 = arith.constant dense<0.000000e+00> : vector<256x128xf32>
    %120 = tpu.matmul %40, %119, %cst_105 {dimension_numbers = #tpu.dot_dimension_numbers<[1], [0], [0], [1], [0, 0, 1, 1], [], []>} : vector<256x16xf32>, vector<16x128xf32>, vector<256x128xf32> -> vector<256x128xf32>
    %c0_106 = arith.constant 0 : index
    %c0_107 = arith.constant 0 : index
    %121 = vector.load %arg9[%c0_106, %c0_107] : memref<1x128xf32, #tpu.memory_space<vmem>>, vector<1x128xf32>
    %122 = vector.broadcast %121 : vector<1x128xf32> to vector<256x128xf32>
    %123 = arith.addf %120, %122 : vector<256x128xf32>
    %124 = arith.addf %113, %118 : vector<256x128xf32>
    %125 = arith.addf %124, %123 : vector<256x128xf32>
    %c0_108 = arith.constant 0 : index
    %c0_109 = arith.constant 0 : index
    %c0_110 = arith.constant 0 : index
    %126 = vector.load %arg24[%c0_108, %c0_109, %c0_110] : memref<1x256x128xf32, #tpu.memory_space<vmem>>, vector<1x256x128xf32>
    %127 = vector.shape_cast %126 : vector<1x256x128xf32> to vector<256x128xf32>
    %128 = vector.shape_cast %125 : vector<256x128xf32> to vector<1x256x128xf32>
    tpu.vector_store %arg24[%c0_108, %c0_109, %c0_110], %128 {strides = array<i32>} : memref<1x256x128xf32, #tpu.memory_space<vmem>>, vector<1x256x128xf32>,
    return
  }
  func.func @transform_0(%arg0: i32) -> (i32, i32, i32, i32) {
    %c0_i32 = arith.constant 0 : i32
    %c0_i32_0 = arith.constant 0 : i32
    %c0_i32_1 = arith.constant 0 : i32
    %c0_i32_2 = arith.constant 0 : i32
    return %arg0, %c0_i32, %c0_i32_0, %c0_i32_1 : i32, i32, i32, i32
  }
  func.func @transform_1(%arg0: i32) -> (i32, i32) {
    %c0_i32 = arith.constant 0 : i32
    %c0_i32_0 = arith.constant 0 : i32
    %c0_i32_1 = arith.constant 0 : i32
    return %c0_i32, %c0_i32_0 : i32, i32
  }
  func.func @transform_2(%arg0: i32) -> (i32, i32) {
    %c0_i32 = arith.constant 0 : i32
    %c0_i32_0 = arith.constant 0 : i32
    %c0_i32_1 = arith.constant 0 : i32
    return %c0_i32, %c0_i32_0 : i32, i32
  }
  func.func @transform_3(%arg0: i32) -> (i32, i32) {
    %c0_i32 = arith.constant 0 : i32
    %c0_i32_0 = arith.constant 0 : i32
    %c0_i32_1 = arith.constant 0 : i32
    return %c0_i32, %c0_i32_0 : i32, i32
  }
  func.func @transform_4(%arg0: i32) -> (i32, i32) {
    %c0_i32 = arith.constant 0 : i32
    %c0_i32_0 = arith.constant 0 : i32
    %c0_i32_1 = arith.constant 0 : i32
    return %c0_i32, %c0_i32_0 : i32, i32
  }
  func.func @transform_5(%arg0: i32) -> (i32, i32) {
    %c0_i32 = arith.constant 0 : i32
    %c0_i32_0 = arith.constant 0 : i32
    %c0_i32_1 = arith.constant 0 : i32
    return %c0_i32, %c0_i32_0 : i32, i32
  }
  func.func @transform_6(%arg0: i32) -> (i32, i32) {
    %c0_i32 = arith.constant 0 : i32
    %c0_i32_0 = arith.constant 0 : i32
    %c0_i32_1 = arith.constant 0 : i32
    return %c0_i32, %c0_i32_0 : i32, i32
  }
  func.func @transform_7(%arg0: i32) -> (i32, i32) {
    %c0_i32 = arith.constant 0 : i32
    %c0_i32_0 = arith.constant 0 : i32
    %c0_i32_1 = arith.constant 0 : i32
    return %c0_i32, %c0_i32_0 : i32, i32
  }
  func.func @transform_8(%arg0: i32) -> (i32, i32) {
    %c0_i32 = arith.constant 0 : i32
    %c0_i32_0 = arith.constant 0 : i32
    %c0_i32_1 = arith.constant 0 : i32
    return %c0_i32, %c0_i32_0 : i32, i32
  }
  func.func @transform_9(%arg0: i32) -> (i32, i32) {
    %c0_i32 = arith.constant 0 : i32
    %c0_i32_0 = arith.constant 0 : i32
    %c0_i32_1 = arith.constant 0 : i32
    return %c0_i32, %c0_i32_0 : i32, i32
  }
  func.func @transform_10(%arg0: i32) -> (i32, i32) {
    %c0_i32 = arith.constant 0 : i32
    %c0_i32_0 = arith.constant 0 : i32
    %c0_i32_1 = arith.constant 0 : i32
    return %c0_i32, %c0_i32_0 : i32, i32
  }
  func.func @transform_11(%arg0: i32) -> (i32, i32) {
    %c0_i32 = arith.constant 0 : i32
    %c0_i32_0 = arith.constant 0 : i32
    %c0_i32_1 = arith.constant 0 : i32
    return %c0_i32, %c0_i32_0 : i32, i32
  }
  func.func @transform_12(%arg0: i32) -> (i32, i32) {
    %c0_i32 = arith.constant 0 : i32
    %c0_i32_0 = arith.constant 0 : i32
    %c0_i32_1 = arith.constant 0 : i32
    return %c0_i32, %c0_i32_0 : i32, i32
  }
  func.func @transform_13(%arg0: i32) -> (i32, i32) {
    %c0_i32 = arith.constant 0 : i32
    %c0_i32_0 = arith.constant 0 : i32
    %c0_i32_1 = arith.constant 0 : i32
    return %c0_i32, %c0_i32_0 : i32, i32
  }
  func.func @transform_14(%arg0: i32) -> (i32, i32) {
    %c0_i32 = arith.constant 0 : i32
    %c0_i32_0 = arith.constant 0 : i32
    %c0_i32_1 = arith.constant 0 : i32
    return %c0_i32, %c0_i32_0 : i32, i32
  }
  func.func @transform_15(%arg0: i32) -> (i32, i32) {
    %c0_i32 = arith.constant 0 : i32
    %c0_i32_0 = arith.constant 0 : i32
    %c0_i32_1 = arith.constant 0 : i32
    return %c0_i32, %c0_i32_0 : i32, i32
  }
  func.func @transform_16(%arg0: i32) -> (i32, i32) {
    %c0_i32 = arith.constant 0 : i32
    %c0_i32_0 = arith.constant 0 : i32
    %c0_i32_1 = arith.constant 0 : i32
    return %c0_i32, %c0_i32_0 : i32, i32
  }
  func.func @transform_17(%arg0: i32) -> (i32, i32) {
    %c0_i32 = arith.constant 0 : i32
    %c0_i32_0 = arith.constant 0 : i32
    %c0_i32_1 = arith.constant 0 : i32
    return %c0_i32, %c0_i32_0 : i32, i32
  }
  func.func @transform_18(%arg0: i32) -> (i32, i32) {
    %c0_i32 = arith.constant 0 : i32
    %c0_i32_0 = arith.constant 0 : i32
    %c0_i32_1 = arith.constant 0 : i32
    return %c0_i32, %c0_i32_0 : i32, i32
  }
  func.func @transform_19(%arg0: i32) -> (i32, i32) {
    %c0_i32 = arith.constant 0 : i32
    %c0_i32_0 = arith.constant 0 : i32
    %c0_i32_1 = arith.constant 0 : i32
    return %c0_i32, %c0_i32_0 : i32, i32
  }
  func.func @transform_20(%arg0: i32) -> (i32, i32) {
    %c0_i32 = arith.constant 0 : i32
    %c0_i32_0 = arith.constant 0 : i32
    %c0_i32_1 = arith.constant 0 : i32
    return %c0_i32, %c0_i32_0 : i32, i32
  }
  func.func @transform_21(%arg0: i32) -> (i32, i32) {
    %c0_i32 = arith.constant 0 : i32
    %c0_i32_0 = arith.constant 0 : i32
    %c0_i32_1 = arith.constant 0 : i32
    return %c0_i32, %c0_i32_0 : i32, i32
  }
  func.func @transform_22(%arg0: i32) -> (i32, i32) {
    %c0_i32 = arith.constant 0 : i32
    %c0_i32_0 = arith.constant 0 : i32
    %c0_i32_1 = arith.constant 0 : i32
    return %c0_i32, %c0_i32_0 : i32, i32
  }
  func.func @transform_23(%arg0: i32) -> (i32, i32, i32) {
    %c0_i32 = arith.constant 0 : i32
    %c0_i32_0 = arith.constant 0 : i32
    %c0_i32_1 = arith.constant 0 : i32
    return %arg0, %c0_i32, %c0_i32_0 : i32, i32, i32
  }
}

</mosaic_0001>

<llo_original>
// kernel: ocr_block_forward.1
$region0: #{ocr_block_forward.1}
  #allocation0 [shape = 'u32[]', space=smem, size = 0x4, offset = 0x4, fixed_abs, tag = 'smem constant byte address 0x4 - core index']
  #allocation1 [shape = 'u32[72,128]{1,0:T(1,128)}', space=vmem, size = 0x9000, scoped, tag = 'internal scratch']
  #allocation2 [shape = 'f32[18,18,16]{2,1,0:T(8,128)}', space=vmem, size = 0x36000, scoped, tag = 'scratch operand']
  %s0 = inlined_call_operand.hbm [shape: f32[2,16,16,16], index: 0, kind: input, shape index: {}]
  %s1 = inlined_call_operand.vmem [shape: f32[144,32], index: 1, kind: input, shape index: {}]
  %s2 = inlined_call_operand.vmem [shape: f32[1,32], index: 2, kind: input, shape index: {}]
  %s3 = inlined_call_operand.vmem [shape: f32[16,16], index: 3, kind: input, shape index: {}]
  %s4 = inlined_call_operand.vmem [shape: f32[1,16], index: 4, kind: input, shape index: {}]
  %s5 = inlined_call_operand.vmem [shape: f32[16,8], index: 5, kind: input, shape index: {}]
  %s6 = inlined_call_operand.vmem [shape: f32[8,1], index: 6, kind: input, shape index: {}]
  %s7 = inlined_call_operand.hbm [shape: f32[16,128], index: 7, kind: input, shape index: {}]
  %s8 = inlined_call_operand.vmem [shape: f32[1,128], index: 8, kind: input, shape index: {}]
  %s9 = inlined_call_operand.vmem [shape: f32[32,16], index: 9, kind: input, shape index: {}]
  %s10 = inlined_call_operand.vmem [shape: f32[1,16], index: 10, kind: input, shape index: {}]
  %s11 = inlined_call_operand.hbm [shape: f32[16,16], index: 11, kind: input, shape index: {}]
  %s12 = inlined_call_operand.vmem [shape: f32[1,16], index: 12, kind: input, shape index: {}]
  %s13 = inlined_call_operand.hbm [shape: f32[32,32], index: 13, kind: input, shape index: {}]
  %s14 = inlined_call_operand.vmem [shape: f32[1,32], index: 14, kind: input, shape index: {}]
  %s15 = inlined_call_operand.hbm [shape: f32[16,16], index: 15, kind: input, shape index: {}]
  %s16 = inlined_call_operand.hbm [shape: f32[1,16], index: 16, kind: input, shape index: {}]
  %s17 = inlined_call_operand.hbm [shape: f32[16,32], index: 17, kind: input, shape index: {}]
  %s18 = inlined_call_operand.hbm [shape: f32[1,32], index: 18, kind: input, shape index: {}]
  %s19 = inlined_call_operand.vmem [shape: f32[64,128], index: 19, kind: input, shape index: {}]
  %s20 = inlined_call_operand.hbm [shape: f32[1,128], index: 20, kind: input, shape index: {}]
  %s21 = inlined_call_operand.vmem [shape: f32[128,128], index: 21, kind: input, shape index: {}]
  %s22 = inlined_call_operand.hbm [shape: f32[1,128], index: 22, kind: input, shape index: {}]
  %s23 = inlined_call_operand.vmem [shape: f32[2,256,128], index: 23, kind: output, shape index: {}]
  %s24 = sld [smem:[#allocation0]]
  $region165: #{ocr_block_forward.1} parent=0
    _
  %s26 = ssub.s32 1, %s24
  %s27 = scalar_select 0, %s26, %s24
  $region1: #{ocr_block_forward.1} parent=0
    #allocation3 [shape = 'u8[262144]{0}', space=vmem, size = 0x40000, scoped, tag = 'input window, operand 0']
    #allocation4 [shape = 's32[2]{0}', space=sflag, size = 0x8, scoped, tag = 'scoped memory for ocr_block_forward.1']
    #allocation5 [shape = 'u8[8192]{0}', space=vmem, size = 0x2000, scoped, tag = 'input window, operand 7, single buffered']
    #allocation6 [shape = 's32[1]{0}', space=sflag, size = 0x4, scoped, tag = 'scoped memory for ocr_block_forward.1']
    #allocation7 [shape = 'u8[8192]{0}', space=vmem, size = 0x2000, scoped, tag = 'input window, operand 11, single buffered']
    #allocation8 [shape = 'u8[16384]{0}', space=vmem, size = 0x4000, scoped, tag = 'input window, operand 13, single buffered']
    #allocation9 [shape = 's32[1]{0}', space=sflag, size = 0x4, scoped, tag = 'scoped memory for ocr_block_forward.1']
    #allocation10 [shape = 'u8[8192]{0}', space=vmem, size = 0x2000, scoped, tag = 'input window, operand 15, single buffered']
    #allocation11 [shape = 'u8[512]{0}', space=vmem, size = 0x400, scoped, tag = 'input window, operand 16, single buffered']
    #allocation12 [shape = 's32[1]{0}', space=sflag, size = 0x4, scoped, tag = 'scoped memory for ocr_block_forward.1']
    #allocation13 [shape = 'u8[8192]{0}', space=vmem, size = 0x2000, scoped, tag = 'input window, operand 17, single buffered']
    #allocation14 [shape = 'u8[512]{0}', space=vmem, size = 0x400, scoped, tag = 'input window, operand 18, single buffered']
    #allocation15 [shape = 's32[1]{0}', space=sflag, size = 0x4, scoped, tag = 'scoped memory for ocr_block_forward.1']
    #allocation16 [shape = 'u8[512]{0}', space=vmem, size = 0x400, scoped, tag = 'input window, operand 20, single buffered']
    #allocation17 [shape = 'u8[512]{0}', space=vmem, size = 0x400, scoped, tag = 'input window, operand 22, single buffered']
    #allocation18 [shape = 's32[1]{0}', space=sflag, size = 0x4, scoped, tag = 'scoped memory for ocr_block_forward.1']
    %28 = vsyncpa [#allocation4], 0
    %s29 = scalar_lea.sflag [#allocation4], 1
    %30 = vsyncpa %s29, 0
    %31 = vsyncpa [#allocation6], 0
    %32 = vsyncpa [#allocation9], 0
    %33 = vsyncpa [#allocation12], 0
    %34 = vsyncpa [#allocation15], 0
    %35 = vsyncpa [#allocation18], 0
    loop: start=0, step=1, limit=4
    $region2: #{ocr_block_forward.1} parent=1 // loop_pre_header
      _
    $region3: #{ocr_block_forward.1} parent=1 // loop_header
      %s37 = sphi 0, %s41
      %p38 = scmp.ge.s32.totalorder %s37, 4
      %s47 = sphi 0, %s49
      %s50 = sphi 0, %s47
      %s51 = sphi 0, %s50
      %s67 = sphi 0, %s51
      %s71 = sphi 0, %s71
      %s73 = sphi 0, %s71
      %s74 = sphi 0, %s73
      %s88 = sphi 0, %s74
      %s92 = sphi 0, %s92
      %s94 = sphi 0, %s92
      %s95 = sphi 0, %s94
      %s109 = sphi 0, %s95
      %s113 = sphi 0, %s113
      %s115 = sphi 0, %s113
      %s116 = sphi 0, %s115
      %s130 = sphi 0, %s116
      %s134 = sphi 0, %s134
      %s136 = sphi 0, %s134
      %s137 = sphi 0, %s136
      %s151 = sphi 0, %s137
      %s155 = sphi 0, %s155
      %s157 = sphi 0, %s155
      %s158 = sphi 0, %s157
      %s172 = sphi 0, %s158
      %s176 = sphi 0, %s176
      %s178 = sphi 0, %s176
      %s179 = sphi 0, %s178
      %s193 = sphi 0, %s179
      %s197 = sphi 0, %s197
      %s199 = sphi 0, %s197
      %s200 = sphi 0, %s199
      %s214 = sphi 0, %s200
      %s218 = sphi 0, %s218
      %s220 = sphi 0, %s218
      %s221 = sphi 0, %s220
      %s235 = sphi 0, %s221
      %s239 = sphi 0, %s239
      %s241 = sphi 0, %s239
      %s242 = sphi 0, %s241
      %s256 = sphi 0, %s242
      %s260 = sphi 0, %s260
      %s262 = sphi 0, %s260
      %s263 = sphi 0, %s262
      %s277 = sphi 0, %s263
      %s281 = sphi 0, %s281
      %s283 = sphi 0, %s281
      %s284 = sphi 0, %s283
      %s298 = sphi 0, %s284
      %s302 = sphi 0, %s302
      %s304 = sphi 0, %s302
      %s305 = sphi 0, %s304
      %s319 = sphi 0, %s305
      %s323 = sphi 0, %s323
      %s325 = sphi 0, %s323
      %s326 = sphi 0, %s325
      %s340 = sphi 0, %s326
      %s344 = sphi 0, %s344
      %s346 = sphi 0, %s344
      %s347 = sphi 0, %s346
      %s361 = sphi 0, %s347
      %s365 = sphi 0, %s365
      %s367 = sphi 0, %s365
      %s368 = sphi 0, %s367
      %s382 = sphi 0, %s368
      %s386 = sphi 0, %s386
      %s388 = sphi 0, %s386
      %s389 = sphi 0, %s388
      %s403 = sphi 0, %s389
      %s407 = sphi 0, %s407
      %s409 = sphi 0, %s407
      %s410 = sphi 0, %s409
      %s424 = sphi 0, %s410
      %s428 = sphi 0, %s428
      %s430 = sphi 0, %s428
      %s431 = sphi 0, %s430
      %s445 = sphi 0, %s431
      %s449 = sphi 0, %s449
      %s451 = sphi 0, %s449
      %s452 = sphi 0, %s451
      %s466 = sphi 0, %s452
      %s470 = sphi 0, %s470
      %s472 = sphi 0, %s470
      %s473 = sphi 0, %s472
      %s487 = sphi 0, %s473
      %s491 = sphi 0, %s491
      %s493 = sphi 0, %s491
      %s494 = sphi 0, %s493
      %s508 = sphi 0, %s494
      %s512 = sphi 0, %s512
      %s514 = sphi 0, %s512
      %s515 = sphi 0, %s514
      %s529 = sphi 0, %s515
      %s535 = sphi 0, %s537
      %s538 = sphi 0, %s535
      %s539 = sphi 0, %s538
      %s555 = sphi 0, %s539
    $region4: #{ocr_block_forward.1} parent=1 // loop_header_branch
      %40 = sbr.rel (%p38) target = $region8
    $region5: #{ocr_block_forward.1} parent=1 // loop_body
      %s42 = ssub.s32 %s37, 1
      %s43 = ssub.s32 %s37, 2
      %s44 = sadd.s32 %s37, 1
      %s45 = ssub.s32 %s37, %s44
      %p46 = scmp.eq.s32.totalorder %s45, 0
      %s48 = sadd.s32 %s47, 1
      %s49 = scalar_select %p46, %s47, %s48
      %p52 = pneg %p46
      %p53 = scmp.eq.s32.totalorder %s37, 1
      %p54 = por %p52, %p53
      %p55 = scmp.ne.s32.totalorder %s47, %s50
      %p56 = scmp.eq.s32.totalorder %s37, 0
      %p57 = por %p55, %p56
      %p58 = scmp.ne.s32.totalorder %s47, %s50
      %p59 = scmp.eq.s32.totalorder %s42, 1
      %p60 = por %p58, %p59
      %p61 = scmp.ne.s32.totalorder %s50, %s51
      %p62 = scmp.eq.s32.totalorder %s42, 0
      %p63 = por %p61, %p62
      %p64 = scmp.ne.s32.totalorder %s50, %s51
      %p65 = scmp.eq.s32.totalorder %s43, 1
      %p66 = por %p64, %p65
      %p68 = scmp.ne.s32.totalorder %s51, %s67
      %p69 = scmp.eq.s32.totalorder %s43, 0
      %p70 = por %p68, %p69
      %s72 = sadd.s32 %s71, 1
      %p75 = scmp.eq.s32.totalorder %s37, 1
      %p76 = scmp.ne.s32.totalorder %s71, %s73
      %p77 = scmp.eq.s32.totalorder %s37, 0
      %p78 = por %p76, %p77
      %p79 = scmp.ne.s32.totalorder %s71, %s73
      %p80 = scmp.eq.s32.totalorder %s42, 1
      %p81 = por %p79, %p80
      %p82 = scmp.ne.s32.totalorder %s73, %s74
      %p83 = scmp.eq.s32.totalorder %s42, 0
      %p84 = por %p82, %p83
      %p85 = scmp.ne.s32.totalorder %s73, %s74
      %p86 = scmp.eq.s32.totalorder %s43, 1
      %p87 = por %p85, %p86
      %p89 = scmp.ne.s32.totalorder %s74, %s88
      %p90 = scmp.eq.s32.totalorder %s43, 0
      %p91 = por %p89, %p90
      %s93 = sadd.s32 %s92, 1
      %p96 = scmp.eq.s32.totalorder %s37, 1
      %p97 = scmp.ne.s32.totalorder %s92, %s94
      %p98 = scmp.eq.s32.totalorder %s37, 0
      %p99 = por %p97, %p98
      %p100 = scmp.ne.s32.totalorder %s92, %s94
      %p101 = scmp.eq.s32.totalorder %s42, 1
      %p102 = por %p100, %p101
      %p103 = scmp.ne.s32.totalorder %s94, %s95
      %p104 = scmp.eq.s32.totalorder %s42, 0
      %p105 = por %p103, %p104
      %p106 = scmp.ne.s32.totalorder %s94, %s95
      %p107 = scmp.eq.s32.totalorder %s43, 1
      %p108 = por %p106, %p107
      %p110 = scmp.ne.s32.totalorder %s95, %s109
      %p111 = scmp.eq.s32.totalorder %s43, 0
      %p112 = por %p110, %p111
      %s114 = sadd.s32 %s113, 1
      %p117 = scmp.eq.s32.totalorder %s37, 1
      %p118 = scmp.ne.s32.totalorder %s113, %s115
      %p119 = scmp.eq.s32.totalorder %s37, 0
      %p120 = por %p118, %p119
      %p121 = scmp.ne.s32.totalorder %s113, %s115
      %p122 = scmp.eq.s32.totalorder %s42, 1
      %p123 = por %p121, %p122
      %p124 = scmp.ne.s32.totalorder %s115, %s116
      %p125 = scmp.eq.s32.totalorder %s42, 0
      %p126 = por %p124, %p125
      %p127 = scmp.ne.s32.totalorder %s115, %s116
      %p128 = scmp.eq.s32.totalorder %s43, 1
      %p129 = por %p127, %p128
      %p131 = scmp.ne.s32.totalorder %s116, %s130
      %p132 = scmp.eq.s32.totalorder %s43, 0
      %p133 = por %p131, %p132
      %s135 = sadd.s32 %s134, 1
      %p138 = scmp.eq.s32.totalorder %s37, 1
      %p139 = scmp.ne.s32.totalorder %s134, %s136
      %p140 = scmp.eq.s32.totalorder %s37, 0
      %p141 = por %p139, %p140
      %p142 = scmp.ne.s32.totalorder %s134, %s136
      %p143 = scmp.eq.s32.totalorder %s42, 1
      %p144 = por %p142, %p143
      %p145 = scmp.ne.s32.totalorder %s136, %s137
      %p146 = scmp.eq.s32.totalorder %s42, 0
      %p147 = por %p145, %p146
      %p148 = scmp.ne.s32.totalorder %s136, %s137
      %p149 = scmp.eq.s32.totalorder %s43, 1
      %p150 = por %p148, %p149
      %p152 = scmp.ne.s32.totalorder %s137, %s151
      %p153 = scmp.eq.s32.totalorder %s43, 0
      %p154 = por %p152, %p153
      %s156 = sadd.s32 %s155, 1
      %p159 = scmp.eq.s32.totalorder %s37, 1
      %p160 = scmp.ne.s32.totalorder %s155, %s157
      %p161 = scmp.eq.s32.totalorder %s37, 0
      %p162 = por %p160, %p161
      %p163 = scmp.ne.s32.totalorder %s155, %s157
      %p164 = scmp.eq.s32.totalorder %s42, 1
      %p165 = por %p163, %p164
      %p166 = scmp.ne.s32.totalorder %s157, %s158
      %p167 = scmp.eq.s32.totalorder %s42, 0
      %p168 = por %p166, %p167
      %p169 = scmp.ne.s32.totalorder %s157, %s158
      %p170 = scmp.eq.s32.totalorder %s43, 1
      %p171 = por %p169, %p170
      %p173 = scmp.ne.s32.totalorder %s158, %s172
      %p174 = scmp.eq.s32.totalorder %s43, 0
      %p175 = por %p173, %p174
      %s177 = sadd.s32 %s176, 1
      %p180 = scmp.eq.s32.totalorder %s37, 1
      %p181 = scmp.ne.s32.totalorder %s176, %s178
      %p182 = scmp.eq.s32.totalorder %s37, 0
      %p183 = por %p181, %p182
      %p184 = scmp.ne.s32.totalorder %s176, %s178
      %p185 = scmp.eq.s32.totalorder %s42, 1
      %p186 = por %p184, %p185
      %p187 = scmp.ne.s32.totalorder %s178, %s179
      %p188 = scmp.eq.s32.totalorder %s42, 0
      %p189 = por %p187, %p188
      %p190 = scmp.ne.s32.totalorder %s178, %s179
      %p191 = scmp.eq.s32.totalorder %s43, 1
      %p192 = por %p190, %p191
      %p194 = scmp.ne.s32.totalorder %s179, %s193
      %p195 = scmp.eq.s32.totalorder %s43, 0
      %p196 = por %p194, %p195
      %s198 = sadd.s32 %s197, 1
      %p201 = scmp.eq.s32.totalorder %s37, 1
      %p202 = scmp.ne.s32.totalorder %s197, %s199
      %p203 = scmp.eq.s32.totalorder %s37, 0
      %p204 = por %p202, %p203
      %p205 = scmp.ne.s32.totalorder %s197, %s199
      %p206 = scmp.eq.s32.totalorder %s42, 1
      %p207 = por %p205, %p206
      %p208 = scmp.ne.s32.totalorder %s199, %s200
      %p209 = scmp.eq.s32.totalorder %s42, 0
      %p210 = por %p208, %p209
      %p211 = scmp.ne.s32.totalorder %s199, %s200
      %p212 = scmp.eq.s32.totalorder %s43, 1
      %p213 = por %p211, %p212
      %p215 = scmp.ne.s32.totalorder %s200, %s214
      %p216 = scmp.eq.s32.totalorder %s43, 0
      %p217 = por %p215, %p216
      %s219 = sadd.s32 %s218, 1
      %p222 = scmp.eq.s32.totalorder %s37, 1
      %p223 = scmp.ne.s32.totalorder %s218, %s220
      %p224 = scmp.eq.s32.totalorder %s37, 0
      %p225 = por %p223, %p224
      %p226 = scmp.ne.s32.totalorder %s218, %s220
      %p227 = scmp.eq.s32.totalorder %s42, 1
      %p228 = por %p226, %p227
      %p229 = scmp.ne.s32.totalorder %s220, %s221
      %p230 = scmp.eq.s32.totalorder %s42, 0
      %p231 = por %p229, %p230
      %p232 = scmp.ne.s32.totalorder %s220, %s221
      %p233 = scmp.eq.s32.totalorder %s43, 1
      %p234 = por %p232, %p233
      %p236 = scmp.ne.s32.totalorder %s221, %s235
      %p237 = scmp.eq.s32.totalorder %s43, 0
      %p238 = por %p236, %p237
      %s240 = sadd.s32 %s239, 1
      %p243 = scmp.eq.s32.totalorder %s37, 1
      %p244 = scmp.ne.s32.totalorder %s239, %s241
      %p245 = scmp.eq.s32.totalorder %s37, 0
      %p246 = por %p244, %p245
      %p247 = scmp.ne.s32.totalorder %s239, %s241
      %p248 = scmp.eq.s32.totalorder %s42, 1
      %p249 = por %p247, %p248
      %p250 = scmp.ne.s32.totalorder %s241, %s242
      %p251 = scmp.eq.s32.totalorder %s42, 0
      %p252 = por %p250, %p251
      %p253 = scmp.ne.s32.totalorder %s241, %s242
      %p254 = scmp.eq.s32.totalorder %s43, 1
      %p255 = por %p253, %p254
      %p257 = scmp.ne.s32.totalorder %s242, %s256
      %p258 = scmp.eq.s32.totalorder %s43, 0
      %p259 = por %p257, %p258
      %s261 = sadd.s32 %s260, 1
      %p264 = scmp.eq.s32.totalorder %s37, 1
      %p265 = scmp.ne.s32.totalorder %s260, %s262
      %p266 = scmp.eq.s32.totalorder %s37, 0
      %p267 = por %p265, %p266
      %p268 = scmp.ne.s32.totalorder %s260, %s262
      %p269 = scmp.eq.s32.totalorder %s42, 1
      %p270 = por %p268, %p269
      %p271 = scmp.ne.s32.totalorder %s262, %s263
      %p272 = scmp.eq.s32.totalorder %s42, 0
      %p273 = por %p271, %p272
      %p274 = scmp.ne.s32.totalorder %s262, %s263
      %p275 = scmp.eq.s32.totalorder %s43, 1
      %p276 = por %p274, %p275
      %p278 = scmp.ne.s32.totalorder %s263, %s277
      %p279 = scmp.eq.s32.totalorder %s43, 0
      %p280 = por %p278, %p279
      %s282 = sadd.s32 %s281, 1
      %p285 = scmp.eq.s32.totalorder %s37, 1
      %p286 = scmp.ne.s32.totalorder %s281, %s283
      %p287 = scmp.eq.s32.totalorder %s37, 0
      %p288 = por %p286, %p287
      %p289 = scmp.ne.s32.totalorder %s281, %s283
      %p290 = scmp.eq.s32.totalorder %s42, 1
      %p291 = por %p289, %p290
      %p292 = scmp.ne.s32.totalorder %s283, %s284
      %p293 = scmp.eq.s32.totalorder %s42, 0
      %p294 = por %p292, %p293
      %p295 = scmp.ne.s32.totalorder %s283, %s284
      %p296 = scmp.eq.s32.totalorder %s43, 1
      %p297 = por %p295, %p296
      %p299 = scmp.ne.s32.totalorder %s284, %s298
      %p300 = scmp.eq.s32.totalorder %s43, 0
      %p301 = por %p299, %p300
      %s303 = sadd.s32 %s302, 1
      %p306 = scmp.eq.s32.totalorder %s37, 1
      %p307 = scmp.ne.s32.totalorder %s302, %s304
      %p308 = scmp.eq.s32.totalorder %s37, 0
      %p309 = por %p307, %p308
      %p310 = scmp.ne.s32.totalorder %s302, %s304
      %p311 = scmp.eq.s32.totalorder %s42, 1
      %p312 = por %p310, %p311
      %p313 = scmp.ne.s32.totalorder %s304, %s305
      %p314 = scmp.eq.s32.totalorder %s42, 0
      %p315 = por %p313, %p314
      %p316 = scmp.ne.s32.totalorder %s304, %s305
      %p317 = scmp.eq.s32.totalorder %s43, 1
      %p318 = por %p316, %p317
      %p320 = scmp.ne.s32.totalorder %s305, %s319
      %p321 = scmp.eq.s32.totalorder %s43, 0
      %p322 = por %p320, %p321
      %s324 = sadd.s32 %s323, 1
      %p327 = scmp.eq.s32.totalorder %s37, 1
      %p328 = scmp.ne.s32.totalorder %s323, %s325
      %p329 = scmp.eq.s32.totalorder %s37, 0
      %p330 = por %p328, %p329
      %p331 = scmp.ne.s32.totalorder %s323, %s325
      %p332 = scmp.eq.s32.totalorder %s42, 1
      %p333 = por %p331, %p332
      %p334 = scmp.ne.s32.totalorder %s325, %s326
      %p335 = scmp.eq.s32.totalorder %s42, 0
      %p336 = por %p334, %p335
      %p337 = scmp.ne.s32.totalorder %s325, %s326
      %p338 = scmp.eq.s32.totalorder %s43, 1
      %p339 = por %p337, %p338
      %p341 = scmp.ne.s32.totalorder %s326, %s340
      %p342 = scmp.eq.s32.totalorder %s43, 0
      %p343 = por %p341, %p342
      %s345 = sadd.s32 %s344, 1
      %p348 = scmp.eq.s32.totalorder %s37, 1
      %p349 = scmp.ne.s32.totalorder %s344, %s346
      %p350 = scmp.eq.s32.totalorder %s37, 0
      %p351 = por %p349, %p350
      %p352 = scmp.ne.s32.totalorder %s344, %s346
      %p353 = scmp.eq.s32.totalorder %s42, 1
      %p354 = por %p352, %p353
      %p355 = scmp.ne.s32.totalorder %s346, %s347
      %p356 = scmp.eq.s32.totalorder %s42, 0
      %p357 = por %p355, %p356
      %p358 = scmp.ne.s32.totalorder %s346, %s347
      %p359 = scmp.eq.s32.totalorder %s43, 1
      %p360 = por %p358, %p359
      %p362 = scmp.ne.s32.totalorder %s347, %s361
      %p363 = scmp.eq.s32.totalorder %s43, 0
      %p364 = por %p362, %p363
      %s366 = sadd.s32 %s365, 1
      %p369 = scmp.eq.s32.totalorder %s37, 1
      %p370 = scmp.ne.s32.totalorder %s365, %s367
      %p371 = scmp.eq.s32.totalorder %s37, 0
      %p372 = por %p370, %p371
      %p373 = scmp.ne.s32.totalorder %s365, %s367
      %p374 = scmp.eq.s32.totalorder %s42, 1
      %p375 = por %p373, %p374
      %p376 = scmp.ne.s32.totalorder %s367, %s368
      %p377 = scmp.eq.s32.totalorder %s42, 0
      %p378 = por %p376, %p377
      %p379 = scmp.ne.s32.totalorder %s367, %s368
      %p380 = scmp.eq.s32.totalorder %s43, 1
      %p381 = por %p379, %p380
      %p383 = scmp.ne.s32.totalorder %s368, %s382
      %p384 = scmp.eq.s32.totalorder %s43, 0
      %p385 = por %p383, %p384
      %s387 = sadd.s32 %s386, 1
      %p390 = scmp.eq.s32.totalorder %s37, 1
      %p391 = scmp.ne.s32.totalorder %s386, %s388
      %p392 = scmp.eq.s32.totalorder %s37, 0
      %p393 = por %p391, %p392
      %p394 = scmp.ne.s32.totalorder %s386, %s388
      %p395 = scmp.eq.s32.totalorder %s42, 1
      %p396 = por %p394, %p395
      %p397 = scmp.ne.s32.totalorder %s388, %s389
      %p398 = scmp.eq.s32.totalorder %s42, 0
      %p399 = por %p397, %p398
      %p400 = scmp.ne.s32.totalorder %s388, %s389
      %p401 = scmp.eq.s32.totalorder %s43, 1
      %p402 = por %p400, %p401
      %p404 = scmp.ne.s32.totalorder %s389, %s403
      %p405 = scmp.eq.s32.totalorder %s43, 0
      %p406 = por %p404, %p405
      %s408 = sadd.s32 %s407, 1
      %p411 = scmp.eq.s32.totalorder %s37, 1
      %p412 = scmp.ne.s32.totalorder %s407, %s409
      %p413 = scmp.eq.s32.totalorder %s37, 0
      %p414 = por %p412, %p413
      %p415 = scmp.ne.s32.totalorder %s407, %s409
      %p416 = scmp.eq.s32.totalorder %s42, 1
      %p417 = por %p415, %p416
      %p418 = scmp.ne.s32.totalorder %s409, %s410
      %p419 = scmp.eq.s32.totalorder %s42, 0
      %p420 = por %p418, %p419
      %p421 = scmp.ne.s32.totalorder %s409, %s410
      %p422 = scmp.eq.s32.totalorder %s43, 1
      %p423 = por %p421, %p422
      %p425 = scmp.ne.s32.totalorder %s410, %s424
      %p426 = scmp.eq.s32.totalorder %s43, 0
      %p427 = por %p425, %p426
      %s429 = sadd.s32 %s428, 1
      %p432 = scmp.eq.s32.totalorder %s37, 1
      %p433 = scmp.ne.s32.totalorder %s428, %s430
      %p434 = scmp.eq.s32.totalorder %s37, 0
      %p435 = por %p433, %p434
      %p436 = scmp.ne.s32.totalorder %s428, %s430
      %p437 = scmp.eq.s32.totalorder %s42, 1
      %p438 = por %p436, %p437
      %p439 = scmp.ne.s32.totalorder %s430, %s431
      %p440 = scmp.eq.s32.totalorder %s42, 0
      %p441 = por %p439, %p440
      %p442 = scmp.ne.s32.totalorder %s430, %s431
      %p443 = scmp.eq.s32.totalorder %s43, 1
      %p444 = por %p442, %p443
      %p446 = scmp.ne.s32.totalorder %s431, %s445
      %p447 = scmp.eq.s32.totalorder %s43, 0
      %p448 = por %p446, %p447
      %s450 = sadd.s32 %s449, 1
      %p453 = scmp.eq.s32.totalorder %s37, 1
      %p454 = scmp.ne.s32.totalorder %s449, %s451
      %p455 = scmp.eq.s32.totalorder %s37, 0
      %p456 = por %p454, %p455
      %p457 = scmp.ne.s32.totalorder %s449, %s451
      %p458 = scmp.eq.s32.totalorder %s42, 1
      %p459 = por %p457, %p458
      %p460 = scmp.ne.s32.totalorder %s451, %s452
      %p461 = scmp.eq.s32.totalorder %s42, 0
      %p462 = por %p460, %p461
      %p463 = scmp.ne.s32.totalorder %s451, %s452
      %p464 = scmp.eq.s32.totalorder %s43, 1
      %p465 = por %p463, %p464
      %p467 = scmp.ne.s32.totalorder %s452, %s466
      %p468 = scmp.eq.s32.totalorder %s43, 0
      %p469 = por %p467, %p468
      %s471 = sadd.s32 %s470, 1
      %p474 = scmp.eq.s32.totalorder %s37, 1
      %p475 = scmp.ne.s32.totalorder %s470, %s472
      %p476 = scmp.eq.s32.totalorder %s37, 0
      %p477 = por %p475, %p476
      %p478 = scmp.ne.s32.totalorder %s470, %s472
      %p479 = scmp.eq.s32.totalorder %s42, 1
      %p480 = por %p478, %p479
      %p481 = scmp.ne.s32.totalorder %s472, %s473
      %p482 = scmp.eq.s32.totalorder %s42, 0
      %p483 = por %p481, %p482
      %p484 = scmp.ne.s32.totalorder %s472, %s473
      %p485 = scmp.eq.s32.totalorder %s43, 1
      %p486 = por %p484, %p485
      %p488 = scmp.ne.s32.totalorder %s473, %s487
      %p489 = scmp.eq.s32.totalorder %s43, 0
      %p490 = por %p488, %p489
      %s492 = sadd.s32 %s491, 1
      %p495 = scmp.eq.s32.totalorder %s37, 1
      %p496 = scmp.ne.s32.totalorder %s491, %s493
      %p497 = scmp.eq.s32.totalorder %s37, 0
      %p498 = por %p496, %p497
      %p499 = scmp.ne.s32.totalorder %s491, %s493
      %p500 = scmp.eq.s32.totalorder %s42, 1
      %p501 = por %p499, %p500
      %p502 = scmp.ne.s32.totalorder %s493, %s494
      %p503 = scmp.eq.s32.totalorder %s42, 0
      %p504 = por %p502, %p503
      %p505 = scmp.ne.s32.totalorder %s493, %s494
      %p506 = scmp.eq.s32.totalorder %s43, 1
      %p507 = por %p505, %p506
      %p509 = scmp.ne.s32.totalorder %s494, %s508
      %p510 = scmp.eq.s32.totalorder %s43, 0
      %p511 = por %p509, %p510
      %s513 = sadd.s32 %s512, 1
      %p516 = scmp.eq.s32.totalorder %s37, 1
      %p517 = scmp.ne.s32.totalorder %s512, %s514
      %p518 = scmp.eq.s32.totalorder %s37, 0
      %p519 = por %p517, %p518
      %p520 = scmp.ne.s32.totalorder %s512, %s514
      %p521 = scmp.eq.s32.totalorder %s42, 1
      %p522 = por %p520, %p521
      %p523 = scmp.ne.s32.totalorder %s514, %s515
      %p524 = scmp.eq.s32.totalorder %s42, 0
      %p525 = por %p523, %p524
      %p526 = scmp.ne.s32.totalorder %s514, %s515
      %p527 = scmp.eq.s32.totalorder %s43, 1
      %p528 = por %p526, %p527
      %p530 = scmp.ne.s32.totalorder %s515, %s529
      %p531 = scmp.eq.s32.totalorder %s43, 0
      %p532 = por %p530, %p531
      %s533 = ssub.s32 %s37, %s44
      %p534 = scmp.eq.s32.totalorder %s533, 0
      %s536 = sadd.s32 %s535, 1
      %s537 = scalar_select %p534, %s535, %s536
      %p540 = pneg %p534
      %p541 = scmp.eq.s32.totalorder %s37, 1
      %p542 = por %p540, %p541
      %p543 = scmp.ne.s32.totalorder %s535, %s538
      %p544 = scmp.eq.s32.totalorder %s37, 0
      %p545 = por %p543, %p544
      %p546 = scmp.ne.s32.totalorder %s535, %s538
      %p547 = scmp.eq.s32.totalorder %s42, 1
      %p548 = por %p546, %p547
      %p549 = scmp.ne.s32.totalorder %s538, %s539
      %p550 = scmp.eq.s32.totalorder %s42, 0
      %p551 = por %p549, %p550
      %p552 = scmp.ne.s32.totalorder %s538, %s539
      %p553 = scmp.eq.s32.totalorder %s43, 1
      %p554 = por %p552, %p553
      %p556 = scmp.ne.s32.totalorder %s539, %s555
      %p557 = scmp.eq.s32.totalorder %s43, 0
      %p558 = por %p556, %p557
      %p559 = scmp.le.s32.totalorder 1, %s37
      %p560 = scmp.lt.s32.totalorder %s37, 3
      %p561 = pnand %p559, %p560
      %p562 = pneg %p561
      // Predicated region
      $region9: #{ocr_block_forward.1} parent=5 // pred_check
        _
      $region10: #{ocr_block_forward.1} parent=5 // pred_check_branch
        %564 = sbr.rel (%p561) target = $region12
      $region11: #{ocr_block_forward.1} parent=5 // pred_region
        %s565 = ssub.s32 %s37, 1
        // Predicated region
        $region13: #{ocr_block_forward.1} parent=11 // pred_check
          %p566 = pneg %p84
        $region14: #{ocr_block_forward.1} parent=11 // pred_check_branch
          %568 = sbr.rel (%p566) target = $region16
        $region15: #{ocr_block_forward.1} parent=11 // pred_region
          _
        $region16: #{ocr_block_forward.1} parent=11 // pred_fallthru
          _
        // Predicated region
        $region17: #{ocr_block_forward.1} parent=11 // pred_check
          %p569 = pneg %p105
        $region18: #{ocr_block_forward.1} parent=11 // pred_check_branch
          %571 = sbr.rel (%p569) target = $region20
        $region19: #{ocr_block_forward.1} parent=11 // pred_region
          _
        $region20: #{ocr_block_forward.1} parent=11 // pred_fallthru
          _
        // Predicated region
        $region21: #{ocr_block_forward.1} parent=11 // pred_check
          %p572 = pneg %p126
        $region22: #{ocr_block_forward.1} parent=11 // pred_check_branch
          %574 = sbr.rel (%p572) target = $region24
        $region23: #{ocr_block_forward.1} parent=11 // pred_region
          _
        $region24: #{ocr_block_forward.1} parent=11 // pred_fallthru
          _
        // Predicated region
        $region25: #{ocr_block_forward.1} parent=11 // pred_check
          %p575 = pneg %p147
        $region26: #{ocr_block_forward.1} parent=11 // pred_check_branch
          %577 = sbr.rel (%p575) target = $region28
        $region27: #{ocr_block_forward.1} parent=11 // pred_region
          _
        $region28: #{ocr_block_forward.1} parent=11 // pred_fallthru
          _
        // Predicated region
        $region29: #{ocr_block_forward.1} parent=11 // pred_check
          %p578 = pneg %p168
        $region30: #{ocr_block_forward.1} parent=11 // pred_check_branch
          %580 = sbr.rel (%p578) target = $region32
        $region31: #{ocr_block_forward.1} parent=11 // pred_region
          _
        $region32: #{ocr_block_forward.1} parent=11 // pred_fallthru
          _
        // Predicated region
        $region33: #{ocr_block_forward.1} parent=11 // pred_check
          %p581 = pneg %p189
        $region34: #{ocr_block_forward.1} parent=11 // pred_check_branch
          %583 = sbr.rel (%p581) target = $region36
        $region35: #{ocr_block_forward.1} parent=11 // pred_region
          _
        $region36: #{ocr_block_forward.1} parent=11 // pred_fallthru
          _
        // Predicated region
        $region37: #{ocr_block_forward.1} parent=11 // pred_check
          %p584 = pneg %p210
        $region38: #{ocr_block_forward.1} parent=11 // pred_check_branch
          %586 = sbr.rel (%p584) target = $region40
        $region39: #{ocr_block_forward.1} parent=11 // pred_region
          %588 = vsyncadd [#allocation6], 0
          %s589 = sshll.u32 %s7, 4
          %s590 = int_to_ptr.hbm [resolvable:$true] %s589
          %s591 = sshll.u32 [#allocation5], 4
          %s592 = int_to_ptr.vmem [resolvable:$true] %s591
          %597 = dma.hbm_to_vmem [thread:$0]  %s590, 256, %s592, [#allocation6], 128, 128, 8
        $region40: #{ocr_block_forward.1} parent=11 // pred_fallthru
          _
        // Predicated region
        $region41: #{ocr_block_forward.1} parent=11 // pred_check
          %p598 = pneg %p231
        $region42: #{ocr_block_forward.1} parent=11 // pred_check_branch
          %600 = sbr.rel (%p598) target = $region44
        $region43: #{ocr_block_forward.1} parent=11 // pred_region
          _
        $region44: #{ocr_block_forward.1} parent=11 // pred_fallthru
          _
        // Predicated region
        $region45: #{ocr_block_forward.1} parent=11 // pred_check
          %p601 = pneg %p252
        $region46: #{ocr_block_forward.1} parent=11 // pred_check_branch
          %603 = sbr.rel (%p601) target = $region48
        $region47: #{ocr_block_forward.1} parent=11 // pred_region
          _
        $region48: #{ocr_block_forward.1} parent=11 // pred_fallthru
          _
        // Predicated region
        $region49: #{ocr_block_forward.1} parent=11 // pred_check
          %p604 = pneg %p273
        $region50: #{ocr_block_forward.1} parent=11 // pred_check_branch
          %606 = sbr.rel (%p604) target = $region52
        $region51: #{ocr_block_forward.1} parent=11 // pred_region
          _
        $region52: #{ocr_block_forward.1} parent=11 // pred_fallthru
          _
        // Predicated region
        $region53: #{ocr_block_forward.1} parent=11 // pred_check
          %p607 = pneg %p294
        $region54: #{ocr_block_forward.1} parent=11 // pred_check_branch
          %609 = sbr.rel (%p607) target = $region56
        $region55: #{ocr_block_forward.1} parent=11 // pred_region
          %611 = vsyncadd [#allocation6], 0
          %s612 = sshll.u32 %s11, 4
          %s613 = int_to_ptr.hbm [resolvable:$true] %s612
          %s614 = sshll.u32 [#allocation7], 4
          %s615 = int_to_ptr.vmem [resolvable:$true] %s614
          %620 = dma.hbm_to_vmem [thread:$0]  %s613, 256, %s615, [#allocation6], 128, 128, 8
        $region56: #{ocr_block_forward.1} parent=11 // pred_fallthru
          _
        // Predicated region
        $region57: #{ocr_block_forward.1} parent=11 // pred_check
          %p621 = pneg %p315
        $region58: #{ocr_block_forward.1} parent=11 // pred_check_branch
          %623 = sbr.rel (%p621) target = $region60
        $region59: #{ocr_block_forward.1} parent=11 // pred_region
          _
        $region60: #{ocr_block_forward.1} parent=11 // pred_fallthru
          _
        // Predicated region
        $region61: #{ocr_block_forward.1} parent=11 // pred_check
          %p624 = pneg %p336
        $region62: #{ocr_block_forward.1} parent=11 // pred_check_branch
          %626 = sbr.rel (%p624) target = $region64
        $region63: #{ocr_block_forward.1} parent=11 // pred_region
          %628 = vsyncadd [#allocation9], 0
          %s629 = sshll.u32 %s13, 4
          %s630 = int_to_ptr.hbm [resolvable:$true] %s629
          %s631 = sshll.u32 [#allocation8], 4
          %s632 = int_to_ptr.vmem [resolvable:$true] %s631
          %637 = dma.hbm_to_vmem [thread:$0]  %s630, 512, %s632, [#allocation9], 128, 128, 8
        $region64: #{ocr_block_forward.1} parent=11 // pred_fallthru
          _
        // Predicated region
        $region65: #{ocr_block_forward.1} parent=11 // pred_check
          %p638 = pneg %p357
        $region66: #{ocr_block_forward.1} parent=11 // pred_check_branch
          %640 = sbr.rel (%p638) target = $region68
        $region67: #{ocr_block_forward.1} parent=11 // pred_region
          _
        $region68: #{ocr_block_forward.1} parent=11 // pred_fallthru
          _
        // Predicated region
        $region69: #{ocr_block_forward.1} parent=11 // pred_check
          %p641 = pneg %p378
        $region70: #{ocr_block_forward.1} parent=11 // pred_check_branch
          %643 = sbr.rel (%p641) target = $region72
        $region71: #{ocr_block_forward.1} parent=11 // pred_region
          %645 = vsyncadd [#allocation9], 0
          %s646 = sshll.u32 %s15, 4
          %s647 = int_to_ptr.hbm [resolvable:$true] %s646
          %s648 = sshll.u32 [#allocation10], 4
          %s649 = int_to_ptr.vmem [resolvable:$true] %s648
          %654 = dma.hbm_to_vmem [thread:$0]  %s647, 256, %s649, [#allocation9], 128, 128, 8
        $region72: #{ocr_block_forward.1} parent=11 // pred_fallthru
          _
        // Predicated region
        $region73: #{ocr_block_forward.1} parent=11 // pred_check
          %p655 = pneg %p399
        $region74: #{ocr_block_forward.1} parent=11 // pred_check_branch
          %657 = sbr.rel (%p655) target = $region76
        $region75: #{ocr_block_forward.1} parent=11 // pred_region
          %659 = vsyncadd [#allocation12], 0
          %s661 = sshll.u32 %s16, 4
          %s662 = int_to_ptr.hbm [resolvable:$true] %s661
          %s663 = sshll.u32 [#allocation11], 4
          %s664 = int_to_ptr.vmem [resolvable:$true] %s663
          %666 = dma.hbm_to_vmem [thread:$0]  %s662, 16, %s664, [#allocation12]
        $region76: #{ocr_block_forward.1} parent=11 // pred_fallthru
          _
        // Predicated region
        $region77: #{ocr_block_forward.1} parent=11 // pred_check
          %p667 = pneg %p420
        $region78: #{ocr_block_forward.1} parent=11 // pred_check_branch
          %669 = sbr.rel (%p667) target = $region80
        $region79: #{ocr_block_forward.1} parent=11 // pred_region
          %671 = vsyncadd [#allocation12], 0
          %s672 = sshll.u32 %s17, 4
          %s673 = int_to_ptr.hbm [resolvable:$true] %s672
          %s674 = sshll.u32 [#allocation13], 4
          %s675 = int_to_ptr.vmem [resolvable:$true] %s674
          %680 = dma.hbm_to_vmem [thread:$0]  %s673, 256, %s675, [#allocation12], 128, 128, 8
        $region80: #{ocr_block_forward.1} parent=11 // pred_fallthru
          _
        // Predicated region
        $region81: #{ocr_block_forward.1} parent=11 // pred_check
          %p681 = pneg %p441
        $region82: #{ocr_block_forward.1} parent=11 // pred_check_branch
          %683 = sbr.rel (%p681) target = $region84
        $region83: #{ocr_block_forward.1} parent=11 // pred_region
          %685 = vsyncadd [#allocation15], 0
          %s687 = sshll.u32 %s18, 4
          %s688 = int_to_ptr.hbm [resolvable:$true] %s687
          %s689 = sshll.u32 [#allocation14], 4
          %s690 = int_to_ptr.vmem [resolvable:$true] %s689
          %692 = dma.hbm_to_vmem [thread:$0]  %s688, 16, %s690, [#allocation15]
        $region84: #{ocr_block_forward.1} parent=11 // pred_fallthru
          _
        // Predicated region
        $region85: #{ocr_block_forward.1} parent=11 // pred_check
          %p693 = pneg %p462
        $region86: #{ocr_block_forward.1} parent=11 // pred_check_branch
          %695 = sbr.rel (%p693) target = $region88
        $region87: #{ocr_block_forward.1} parent=11 // pred_region
          _
        $region88: #{ocr_block_forward.1} parent=11 // pred_fallthru
          _
        // Predicated region
        $region89: #{ocr_block_forward.1} parent=11 // pred_check
          %p696 = pneg %p483
        $region90: #{ocr_block_forward.1} parent=11 // pred_check_branch
          %698 = sbr.rel (%p696) target = $region92
        $region91: #{ocr_block_forward.1} parent=11 // pred_region
          %700 = vsyncadd [#allocation15], 0
          %s702 = sshll.u32 %s20, 4
          %s703 = int_to_ptr.hbm [resolvable:$true] %s702
          %s704 = sshll.u32 [#allocation16], 4
          %s705 = int_to_ptr.vmem [resolvable:$true] %s704
          %707 = dma.hbm_to_vmem [thread:$0]  %s703, 16, %s705, [#allocation15]
        $region92: #{ocr_block_forward.1} parent=11 // pred_fallthru
          _
        // Predicated region
        $region93: #{ocr_block_forward.1} parent=11 // pred_check
          %p708 = pneg %p504
        $region94: #{ocr_block_forward.1} parent=11 // pred_check_branch
          %710 = sbr.rel (%p708) target = $region96
        $region95: #{ocr_block_forward.1} parent=11 // pred_region
          _
        $region96: #{ocr_block_forward.1} parent=11 // pred_fallthru
          _
        // Predicated region
        $region97: #{ocr_block_forward.1} parent=11 // pred_check
          %p711 = pneg %p525
        $region98: #{ocr_block_forward.1} parent=11 // pred_check_branch
          %713 = sbr.rel (%p711) target = $region100
        $region99: #{ocr_block_forward.1} parent=11 // pred_region
          %715 = vsyncadd [#allocation18], 0
          %s717 = sshll.u32 %s22, 4
          %s718 = int_to_ptr.hbm [resolvable:$true] %s717
          %s719 = sshll.u32 [#allocation17], 4
          %s720 = int_to_ptr.vmem [resolvable:$true] %s719
          %722 = dma.hbm_to_vmem [thread:$0]  %s718, 16, %s720, [#allocation18]
        $region100: #{ocr_block_forward.1} parent=11 // pred_fallthru
          _
      $region12: #{ocr_block_forward.1} parent=5 // pred_fallthru
        _
      %p723 = scmp.lt.s32.totalorder %s37, 2
      // Predicated region
      $region101: #{ocr_block_forward.1} parent=5 // pred_check
        %p724 = pneg %p723
      $region102: #{ocr_block_forward.1} parent=5 // pred_check_branch
        %726 = sbr.rel (%p724) target = $region104
      $region103: #{ocr_block_forward.1} parent=5 // pred_region
        // Predicated region
        $region105: #{ocr_block_forward.1} parent=103 // pred_check
          %p727 = pneg %p57
        $region106: #{ocr_block_forward.1} parent=103 // pred_check_branch
          %729 = sbr.rel (%p727) target = $region108
        $region107: #{ocr_block_forward.1} parent=103 // pred_region
          %s730 = sand.u32 %s47, 1
          %s731 = scalar_lea.sflag [#allocation4], %s730
          %s732 = sand.u32 %s47, 1
          %s733 = smul.addr %s732, 256
          %s734 = scalar_lea.vmem [#allocation3], %s733
          %736 = vsyncadd %s731, 0
          %s737 = smul.addr %s37, 32
          %s738 = smul.addr %s737, 8
          %s739 = scalar_lea.hbm %s0, %s738
          %s740 = sshll.u32 %s739, 4
          %s741 = int_to_ptr.hbm [resolvable:$true] %s740
          %s742 = sshll.u32 %s734, 4
          %s743 = int_to_ptr.vmem [resolvable:$true] %s742
          %748 = dma.hbm_to_vmem [thread:$0]  %s741, 4096, %s743, %s731, 128, 128, 8
        $region108: #{ocr_block_forward.1} parent=103 // pred_fallthru
          _
      $region104: #{ocr_block_forward.1} parent=5 // pred_fallthru
        _
      %p749 = scmp.le.s32.totalorder 1, %s37
      %p750 = scmp.lt.s32.totalorder %s37, 3
      %p751 = pnand %p749, %p750
      %p752 = pneg %p751
      // Predicated region
      $region109: #{ocr_block_forward.1} parent=5 // pred_check
        _
      $region110: #{ocr_block_forward.1} parent=5 // pred_check_branch
        %754 = sbr.rel (%p751) target = $region112
      $region111: #{ocr_block_forward.1} parent=5 // pred_region
        %s755 = ssub.s32 %s37, 1
        %s756 = sand.u32 %s50, 1
        %s757 = scalar_lea.sflag [#allocation4], %s756
        %s758 = sand.u32 %s50, 1
        %s759 = smul.addr %s758, 256
        %s760 = scalar_lea.vmem [#allocation3], %s759
        // Predicated region
        $region113: #{ocr_block_forward.1} parent=111 // pred_check
          %p761 = pneg %p63
        $region114: #{ocr_block_forward.1} parent=111 // pred_check_branch
          %763 = sbr.rel (%p761) target = $region116
        $region115: #{ocr_block_forward.1} parent=111 // pred_region
          %765 = dma.done %s757, 4096
        $region116: #{ocr_block_forward.1} parent=111 // pred_fallthru
          _
        // Predicated region
        $region117: #{ocr_block_forward.1} parent=111 // pred_check
          %p766 = pneg %p210
        $region118: #{ocr_block_forward.1} parent=111 // pred_check_branch
          %768 = sbr.rel (%p766) target = $region120
        $region119: #{ocr_block_forward.1} parent=111 // pred_region
          %770 = dma.done [#allocation6], 256
        $region120: #{ocr_block_forward.1} parent=111 // pred_fallthru
          _
        // Predicated region
        $region121: #{ocr_block_forward.1} parent=111 // pred_check
          %p771 = pneg %p294
        $region122: #{ocr_block_forward.1} parent=111 // pred_check_branch
          %773 = sbr.rel (%p771) target = $region124
        $region123: #{ocr_block_forward.1} parent=111 // pred_region
          %775 = dma.done [#allocation6], 256
        $region124: #{ocr_block_forward.1} parent=111 // pred_fallthru
          _
        // Predicated region
        $region125: #{ocr_block_forward.1} parent=111 // pred_check
          %p776 = pneg %p336
        $region126: #{ocr_block_forward.1} parent=111 // pred_check_branch
          %778 = sbr.rel (%p776) target = $region128
        $region127: #{ocr_block_forward.1} parent=111 // pred_region
          %780 = dma.done [#allocation9], 512
        $region128: #{ocr_block_forward.1} parent=111 // pred_fallthru
          _
        // Predicated region
        $region129: #{ocr_block_forward.1} parent=111 // pred_check
          %p781 = pneg %p378
        $region130: #{ocr_block_forward.1} parent=111 // pred_check_branch
          %783 = sbr.rel (%p781) target = $region132
        $region131: #{ocr_block_forward.1} parent=111 // pred_region
          %785 = dma.done [#allocation9], 256
        $region132: #{ocr_block_forward.1} parent=111 // pred_fallthru
          _
        // Predicated region
        $region133: #{ocr_block_forward.1} parent=111 // pred_check
          %p786 = pneg %p399
        $region134: #{ocr_block_forward.1} parent=111 // pred_check_branch
          %788 = sbr.rel (%p786) target = $region136
        $region135: #{ocr_block_forward.1} parent=111 // pred_region
          %790 = dma.done [#allocation12], 16
        $region136: #{ocr_block_forward.1} parent=111 // pred_fallthru
          _
        // Predicated region
        $region137: #{ocr_block_forward.1} parent=111 // pred_check
          %p791 = pneg %p420
        $region138: #{ocr_block_forward.1} parent=111 // pred_check_branch
          %793 = sbr.rel (%p791) target = $region140
        $region139: #{ocr_block_forward.1} parent=111 // pred_region
          %795 = dma.done [#allocation12], 256
        $region140: #{ocr_block_forward.1} parent=111 // pred_fallthru
          _
        // Predicated region
        $region141: #{ocr_block_forward.1} parent=111 // pred_check
          %p796 = pneg %p441
        $region142: #{ocr_block_forward.1} parent=111 // pred_check_branch
          %798 = sbr.rel (%p796) target = $region144
        $region143: #{ocr_block_forward.1} parent=111 // pred_region
          %800 = dma.done [#allocation15], 16
        $region144: #{ocr_block_forward.1} parent=111 // pred_fallthru
          _
        // Predicated region
        $region145: #{ocr_block_forward.1} parent=111 // pred_check
          %p801 = pneg %p483
        $region146: #{ocr_block_forward.1} parent=111 // pred_check_branch
          %803 = sbr.rel (%p801) target = $region148
        $region147: #{ocr_block_forward.1} parent=111 // pred_region
          %805 = dma.done [#allocation15], 16
        $region148: #{ocr_block_forward.1} parent=111 // pred_fallthru
          _
        // Predicated region
        $region149: #{ocr_block_forward.1} parent=111 // pred_check
          %p806 = pneg %p525
        $region150: #{ocr_block_forward.1} parent=111 // pred_check_branch
          %808 = sbr.rel (%p806) target = $region152
        $region151: #{ocr_block_forward.1} parent=111 // pred_region
          %810 = dma.done [#allocation18], 16
        $region152: #{ocr_block_forward.1} parent=111 // pred_fallthru
          _
        %s811 = sand.u32 %s50, 1
        %s812 = scalar_lea.sflag [#allocation4], %s811
        %s813 = sand.u32 %s50, 1
        %s814 = smul.addr %s813, 256
        %s815 = scalar_lea.vmem [#allocation3], %s814
        %p816 = pneg %p63
        %p817 = pneg %p60
        %p818 = pneg %p84
        %p819 = pneg %p81
        %p820 = pneg %p105
        %p821 = pneg %p102
        %p822 = pneg %p126
        %p823 = pneg %p123
        %p824 = pneg %p147
        %p825 = pneg %p144
        %p826 = pneg %p168
        %p827 = pneg %p165
        %p828 = pneg %p189
        %p829 = pneg %p186
        %p830 = pneg %p210
        %p831 = pneg %p207
        %p832 = pneg %p231
        %p833 = pneg %p228
        %p834 = pneg %p252
        %p835 = pneg %p249
        %p836 = pneg %p273
        %p837 = pneg %p270
        %p838 = pneg %p294
        %p839 = pneg %p291
        %p840 = pneg %p315
        %p841 = pneg %p312
        %p842 = pneg %p336
        %p843 = pneg %p333
        %p844 = pneg %p357
        %p845 = pneg %p354
        %p846 = pneg %p378
        %p847 = pneg %p375
        %p848 = pneg %p399
        %p849 = pneg %p396
        %p850 = pneg %p420
        %p851 = pneg %p417
        %p852 = pneg %p441
        %p853 = pneg %p438
        %p854 = pneg %p462
        %p855 = pneg %p459
        %p856 = pneg %p483
        %p857 = pneg %p480
        %p858 = pneg %p504
        %p859 = pneg %p501
        %p860 = pneg %p525
        %p861 = pneg %p522
        %p862 = pneg %p551
        %p863 = pneg %p548
        %p864 = scmp.lt.s32.totalorder %s42, 1
        %s865 = scalar_select %p864, %s42, 1
        %s866 = smul.addr %s865, 32
        %s867 = smul.addr %s866, 8
        %s868 = scalar_lea.vmem %s23, %s867
        %p869 = scmp.lt.s32.totalorder %s42, 1
        %s870 = scalar_select %p869, %s42, 1
        %s871 = smul.addr %s870, 32
        %s872 = smul.addr %s871, 8
        %s873 = scalar_lea.vmem %s23, %s872
        %vm874 = vcmask 130048
        %875 = vst.msk [vmem:[#allocation2] sm:$0xff] %vm874, 0.0
        %876 = vst.msk [vmem:[#allocation2 + $0x8] sm:$0xff] %vm874, 0.0
        %vm877 = vcmask 123904
        %878 = vst.msk [vmem:[#allocation2 + $0x10] sm:$0x3] %vm877, 0.0
        %879 = vst.msk [vmem:[#allocation2 + $0x18] sm:$0xff] %vm874, 0.0
        %880 = vst.msk [vmem:[#allocation2 + $0x20] sm:$0xff] %vm874, 0.0
        %881 = vst.msk [vmem:[#allocation2 + $0x28] sm:$0x3] %vm877, 0.0
        %882 = vst.msk [vmem:[#allocation2 + $0x30] sm:$0xff] %vm874, 0.0
        %883 = vst.msk [vmem:[#allocation2 + $0x38] sm:$0xff] %vm874, 0.0
        %884 = vst.msk [vmem:[#allocation2 + $0x40] sm:$0x3] %vm877, 0.0
        %885 = vst.msk [vmem:[#allocation2 + $0x48] sm:$0xff] %vm874, 0.0
        %886 = vst.msk [vmem:[#allocation2 + $0x50] sm:$0xff] %vm874, 0.0
        %887 = vst.msk [vmem:[#allocation2 + $0x58] sm:$0x3] %vm877, 0.0
        %888 = vst.msk [vmem:[#allocation2 + $0x60] sm:$0xff] %vm874, 0.0
        %889 = vst.msk [vmem:[#allocation2 + $0x68] sm:$0xff] %vm874, 0.0
        %890 = vst.msk [vmem:[#allocation2 + $0x70] sm:$0x3] %vm877, 0.0
        %891 = vst.msk [vmem:[#allocation2 + $0x78] sm:$0xff] %vm874, 0.0
        %892 = vst.msk [vmem:[#allocation2 + $0x80] sm:$0xff] %vm874, 0.0
        %893 = vst.msk [vmem:[#allocation2 + $0x88] sm:$0x3] %vm877, 0.0
        %894 = vst.msk [vmem:[#allocation2 + $0x90] sm:$0xff] %vm874, 0.0
        %895 = vst.msk [vmem:[#allocation2 + $0x98] sm:$0xff] %vm874, 0.0
        %896 = vst.msk [vmem:[#allocation2 + $0xa0] sm:$0x3] %vm877, 0.0
        %897 = vst.msk [vmem:[#allocation2 + $0xa8] sm:$0xff] %vm874, 0.0
        %898 = vst.msk [vmem:[#allocation2 + $0xb0] sm:$0xff] %vm874, 0.0
        %899 = vst.msk [vmem:[#allocation2 + $0xb8] sm:$0x3] %vm877, 0.0
        %900 = vst.msk [vmem:[#allocation2 + $0xc0] sm:$0xff] %vm874, 0.0
        %901 = vst.msk [vmem:[#allocation2 + $0xc8] sm:$0xff] %vm874, 0.0
        %902 = vst.msk [vmem:[#allocation2 + $0xd0] sm:$0x3] %vm877, 0.0
        %903 = vst.msk [vmem:[#allocation2 + $0xd8] sm:$0xff] %vm874, 0.0
        %904 = vst.msk [vmem:[#allocation2 + $0xe0] sm:$0xff] %vm874, 0.0
        %905 = vst.msk [vmem:[#allocation2 + $0xe8] sm:$0x3] %vm877, 0.0
        %906 = vst.msk [vmem:[#allocation2 + $0xf0] sm:$0xff] %vm874, 0.0
        %907 = vst.msk [vmem:[#allocation2 + $0xf8] sm:$0xff] %vm874, 0.0
        %908 = vst.msk [vmem:[#allocation2 + $0x100] sm:$0x3] %vm877, 0.0
        %909 = vst.msk [vmem:[#allocation2 + $0x108] sm:$0xff] %vm874, 0.0
        %910 = vst.msk [vmem:[#allocation2 + $0x110] sm:$0xff] %vm874, 0.0
        %911 = vst.msk [vmem:[#allocation2 + $0x118] sm:$0x3] %vm877, 0.0
        %912 = vst.msk [vmem:[#allocation2 + $0x120] sm:$0xff] %vm874, 0.0
        %913 = vst.msk [vmem:[#allocation2 + $0x128] sm:$0xff] %vm874, 0.0
        %914 = vst.msk [vmem:[#allocation2 + $0x130] sm:$0x3] %vm877, 0.0
        %915 = vst.msk [vmem:[#allocation2 + $0x138] sm:$0xff] %vm874, 0.0
        %916 = vst.msk [vmem:[#allocation2 + $0x140] sm:$0xff] %vm874, 0.0
        %917 = vst.msk [vmem:[#allocation2 + $0x148] sm:$0x3] %vm877, 0.0
        %918 = vst.msk [vmem:[#allocation2 + $0x150] sm:$0xff] %vm874, 0.0
        %919 = vst.msk [vmem:[#allocation2 + $0x158] sm:$0xff] %vm874, 0.0
        %920 = vst.msk [vmem:[#allocation2 + $0x160] sm:$0x3] %vm877, 0.0
        %921 = vst.msk [vmem:[#allocation2 + $0x168] sm:$0xff] %vm874, 0.0
        %922 = vst.msk [vmem:[#allocation2 + $0x170] sm:$0xff] %vm874, 0.0
        %923 = vst.msk [vmem:[#allocation2 + $0x178] sm:$0x3] %vm877, 0.0
        %924 = vst.msk [vmem:[#allocation2 + $0x180] sm:$0xff] %vm874, 0.0
        %925 = vst.msk [vmem:[#allocation2 + $0x188] sm:$0xff] %vm874, 0.0
        %926 = vst.msk [vmem:[#allocation2 + $0x190] sm:$0x3] %vm877, 0.0
        %927 = vst.msk [vmem:[#allocation2 + $0x198] sm:$0xff] %vm874, 0.0
        %928 = vst.msk [vmem:[#allocation2 + $0x1a0] sm:$0xff] %vm874, 0.0
        %929 = vst.msk [vmem:[#allocation2 + $0x1a8] sm:$0x3] %vm877, 0.0
        %v930 = vld [vmem:[%s760] sm:$0xff]
        %v931 = vld [vmem:[%s760 + $0x8] sm:$0xff]
        %v932 = vld [vmem:[%s760 + $0x10] sm:$0xff]
        %v933 = vld [vmem:[%s760 + $0x18] sm:$0xff]
        %v934 = vld [vmem:[%s760 + $0x20] sm:$0xff]
        %v935 = vld [vmem:[%s760 + $0x28] sm:$0xff]
        %v936 = vld [vmem:[%s760 + $0x30] sm:$0xff]
        %v937 = vld [vmem:[%s760 + $0x38] sm:$0xff]
        %v938 = vld [vmem:[%s760 + $0x40] sm:$0xff]
        %v939 = vld [vmem:[%s760 + $0x48] sm:$0xff]
        %v940 = vld [vmem:[%s760 + $0x50] sm:$0xff]
        %v941 = vld [vmem:[%s760 + $0x58] sm:$0xff]
        %v942 = vld [vmem:[%s760 + $0x60] sm:$0xff]
        %v943 = vld [vmem:[%s760 + $0x68] sm:$0xff]
        %v944 = vld [vmem:[%s760 + $0x70] sm:$0xff]
        %v945 = vld [vmem:[%s760 + $0x78] sm:$0xff]
        %v946 = vld [vmem:[%s760 + $0x80] sm:$0xff]
        %v947 = vld [vmem:[%s760 + $0x88] sm:$0xff]
        %v948 = vld [vmem:[%s760 + $0x90] sm:$0xff]
        %v949 = vld [vmem:[%s760 + $0x98] sm:$0xff]
        %v950 = vld [vmem:[%s760 + $0xa0] sm:$0xff]
        %v951 = vld [vmem:[%s760 + $0xa8] sm:$0xff]
        %v952 = vld [vmem:[%s760 + $0xb0] sm:$0xff]
        %v953 = vld [vmem:[%s760 + $0xb8] sm:$0xff]
        %v954 = vld [vmem:[%s760 + $0xc0] sm:$0xff]
        %v955 = vld [vmem:[%s760 + $0xc8] sm:$0xff]
        %v956 = vld [vmem:[%s760 + $0xd0] sm:$0xff]
        %v957 = vld [vmem:[%s760 + $0xd8] sm:$0xff]
        %v958 = vld [vmem:[%s760 + $0xe0] sm:$0xff]
        %v959 = vld [vmem:[%s760 + $0xe8] sm:$0xff]
        %v960 = vld [vmem:[%s760 + $0xf0] sm:$0xff]
        %v961 = vld [vmem:[%s760 + $0xf8] sm:$0xff]
        %s962 = scalar_lea.vmem [#allocation2], 24
        %963 = vst.msk [vmem:[%s962 + $0x1] sm:$0xff] %vm874, %v930
        %964 = vst.msk [vmem:[%s962 + $0x9] sm:$0xff] %vm874, %v931
        %965 = vst.msk [vmem:[%s962 + $0x19] sm:$0xff] %vm874, %v932
        %966 = vst.msk [vmem:[%s962 + $0x21] sm:$0xff] %vm874, %v933
        %967 = vst.msk [vmem:[%s962 + $0x31] sm:$0xff] %vm874, %v934
        %968 = vst.msk [vmem:[%s962 + $0x39] sm:$0xff] %vm874, %v935
        %969 = vst.msk [vmem:[%s962 + $0x49] sm:$0xff] %vm874, %v936
        %970 = vst.msk [vmem:[%s962 + $0x51] sm:$0xff] %vm874, %v937
        %971 = vst.msk [vmem:[%s962 + $0x61] sm:$0xff] %vm874, %v938
        %972 = vst.msk [vmem:[%s962 + $0x69] sm:$0xff] %vm874, %v939
        %973 = vst.msk [vmem:[%s962 + $0x79] sm:$0xff] %vm874, %v940
        %974 = vst.msk [vmem:[%s962 + $0x81] sm:$0xff] %vm874, %v941
        %975 = vst.msk [vmem:[%s962 + $0x91] sm:$0xff] %vm874, %v942
        %976 = vst.msk [vmem:[%s962 + $0x99] sm:$0xff] %vm874, %v943
        %977 = vst.msk [vmem:[%s962 + $0xa9] sm:$0xff] %vm874, %v944
        %978 = vst.msk [vmem:[%s962 + $0xb1] sm:$0xff] %vm874, %v945
        %979 = vst.msk [vmem:[%s962 + $0xc1] sm:$0xff] %vm874, %v946
        %980 = vst.msk [vmem:[%s962 + $0xc9] sm:$0xff] %vm874, %v947
        %981 = vst.msk [vmem:[%s962 + $0xd9] sm:$0xff] %vm874, %v948
        %982 = vst.msk [vmem:[%s962 + $0xe1] sm:$0xff] %vm874, %v949
        %983 = vst.msk [vmem:[%s962 + $0xf1] sm:$0xff] %vm874, %v950
        %984 = vst.msk [vmem:[%s962 + $0xf9] sm:$0xff] %vm874, %v951
        %985 = vst.msk [vmem:[%s962 + $0x109] sm:$0xff] %vm874, %v952
        %986 = vst.msk [vmem:[%s962 + $0x111] sm:$0xff] %vm874, %v953
        %987 = vst.msk [vmem:[%s962 + $0x121] sm:$0xff] %vm874, %v954
        %988 = vst.msk [vmem:[%s962 + $0x129] sm:$0xff] %vm874, %v955
        %989 = vst.msk [vmem:[%s962 + $0x139] sm:$0xff] %vm874, %v956
        %990 = vst.msk [vmem:[%s962 + $0x141] sm:$0xff] %vm874, %v957
        %991 = vst.msk [vmem:[%s962 + $0x151] sm:$0xff] %vm874, %v958
        %992 = vst.msk [vmem:[%s962 + $0x159] sm:$0xff] %vm874, %v959
        %993 = vst.msk [vmem:[%s962 + $0x169] sm:$0xff] %vm874, %v960
        %994 = vst.msk [vmem:[%s962 + $0x171] sm:$0xff] %vm874, %v961
        %v995 = vld [vmem:[#allocation2] sm:$0xff]
        %v996 = vld [vmem:[#allocation2 + $0x8] sm:$0xff]
        %v997 = vld [vmem:[#allocation2 + $0x18] sm:$0xff]
        %v998 = vld [vmem:[#allocation2 + $0x20] sm:$0xff]
        %v999 = vld [vmem:[#allocation2 + $0x30] sm:$0xff]
        %v1000 = vld [vmem:[#allocation2 + $0x38] sm:$0xff]
        %v1001 = vld [vmem:[#allocation2 + $0x48] sm:$0xff]
        %v1002 = vld [vmem:[#allocation2 + $0x50] sm:$0xff]
        %v1003 = vld [vmem:[#allocation2 + $0x60] sm:$0xff]
        %v1004 = vld [vmem:[#allocation2 + $0x68] sm:$0xff]
        %v1005 = vld [vmem:[#allocation2 + $0x78] sm:$0xff]
        %v1006 = vld [vmem:[#allocation2 + $0x80] sm:$0xff]
        %v1007 = vld [vmem:[#allocation2 + $0x90] sm:$0xff]
        %v1008 = vld [vmem:[#allocation2 + $0x98] sm:$0xff]
        %v1009 = vld [vmem:[#allocation2 + $0xa8] sm:$0xff]
        %v1010 = vld [vmem:[#allocation2 + $0xb0] sm:$0xff]
        %v1011 = vld [vmem:[#allocation2 + $0xc0] sm:$0xff]
        %v1012 = vld [vmem:[#allocation2 + $0xc8] sm:$0xff]
        %v1013 = vld [vmem:[#allocation2 + $0xd8] sm:$0xff]
        %v1014 = vld [vmem:[#allocation2 + $0xe0] sm:$0xff]
        %v1015 = vld [vmem:[#allocation2 + $0xf0] sm:$0xff]
        %v1016 = vld [vmem:[#allocation2 + $0xf8] sm:$0xff]
        %v1017 = vld [vmem:[#allocation2 + $0x108] sm:$0xff]
        %v1018 = vld [vmem:[#allocation2 + $0x110] sm:$0xff]
        %v1019 = vld [vmem:[#allocation2 + $0x120] sm:$0xff]
        %v1020 = vld [vmem:[#allocation2 + $0x128] sm:$0xff]
        %v1021 = vld [vmem:[#allocation2 + $0x138] sm:$0xff]
        %v1022 = vld [vmem:[#allocation2 + $0x140] sm:$0xff]
        %v1023 = vld [vmem:[#allocation2 + $0x150] sm:$0xff]
        %v1024 = vld [vmem:[#allocation2 + $0x158] sm:$0xff]
        %v1025 = vld [vmem:[#allocation2 + $0x168] sm:$0xff]
        %v1026 = vld [vmem:[#allocation2 + $0x170] sm:$0xff]
        %v1027 = vld [vmem:[#allocation2 + $0x1] sm:$0xff]
        %v1028 = vld [vmem:[#allocation2 + $0x9] sm:$0xff]
        %v1029 = vld [vmem:[#allocation2 + $0x19] sm:$0xff]
        %v1030 = vld [vmem:[#allocation2 + $0x21] sm:$0xff]
        %v1031 = vld [vmem:[#allocation2 + $0x31] sm:$0xff]
        %v1032 = vld [vmem:[#allocation2 + $0x39] sm:$0xff]
        %v1033 = vld [vmem:[#allocation2 + $0x49] sm:$0xff]
        %v1034 = vld [vmem:[#allocation2 + $0x51] sm:$0xff]
        %v1035 = vld [vmem:[#allocation2 + $0x61] sm:$0xff]
        %v1036 = vld [vmem:[#allocation2 + $0x69] sm:$0xff]
        %v1037 = vld [vmem:[#allocation2 + $0x79] sm:$0xff]
        %v1038 = vld [vmem:[#allocation2 + $0x81] sm:$0xff]
        %v1039 = vld [vmem:[#allocation2 + $0x91] sm:$0xff]
        %v1040 = vld [vmem:[#allocation2 + $0x99] sm:$0xff]
        %v1041 = vld [vmem:[#allocation2 + $0xa9] sm:$0xff]
        %v1042 = vld [vmem:[#allocation2 + $0xb1] sm:$0xff]
        %v1043 = vld [vmem:[#allocation2 + $0xc1] sm:$0xff]
        %v1044 = vld [vmem:[#allocation2 + $0xc9] sm:$0xff]
        %v1045 = vld [vmem:[#allocation2 + $0xd9] sm:$0xff]
        %v1046 = vld [vmem:[#allocation2 + $0xe1] sm:$0xff]
        %v1047 = vld [vmem:[#allocation2 + $0xf1] sm:$0xff]
        %v1048 = vld [vmem:[#allocation2 + $0xf9] sm:$0xff]
        %v1049 = vld [vmem:[#allocation2 + $0x109] sm:$0xff]
        %v1050 = vld [vmem:[#allocation2 + $0x111] sm:$0xff]
        %v1051 = vld [vmem:[#allocation2 + $0x121] sm:$0xff]
        %v1052 = vld [vmem:[#allocation2 + $0x129] sm:$0xff]
        %v1053 = vld [vmem:[#allocation2 + $0x139] sm:$0xff]
        %v1054 = vld [vmem:[#allocation2 + $0x141] sm:$0xff]
        %v1055 = vld [vmem:[#allocation2 + $0x151] sm:$0xff]
        %v1056 = vld [vmem:[#allocation2 + $0x159] sm:$0xff]
        %v1057 = vld [vmem:[#allocation2 + $0x169] sm:$0xff]
        %v1058 = vld [vmem:[#allocation2 + $0x171] sm:$0xff]
        %v1059 = vld [vmem:[#allocation2 + $0x2] sm:$0xff]
        %v1060 = vld [vmem:[#allocation2 + $0xa] sm:$0xff]
        %v1061 = vld [vmem:[#allocation2 + $0x1a] sm:$0xff]
        %v1062 = vld [vmem:[#allocation2 + $0x22] sm:$0xff]
        %v1063 = vld [vmem:[#allocation2 + $0x32] sm:$0xff]
        %v1064 = vld [vmem:[#allocation2 + $0x3a] sm:$0xff]
        %v1065 = vld [vmem:[#allocation2 + $0x4a] sm:$0xff]
        %v1066 = vld [vmem:[#allocation2 + $0x52] sm:$0xff]
        %v1067 = vld [vmem:[#allocation2 + $0x62] sm:$0xff]
        %v1068 = vld [vmem:[#allocation2 + $0x6a] sm:$0xff]
        %v1069 = vld [vmem:[#allocation2 + $0x7a] sm:$0xff]
        %v1070 = vld [vmem:[#allocation2 + $0x82] sm:$0xff]
        %v1071 = vld [vmem:[#allocation2 + $0x92] sm:$0xff]
        %v1072 = vld [vmem:[#allocation2 + $0x9a] sm:$0xff]
        %v1073 = vld [vmem:[#allocation2 + $0xaa] sm:$0xff]
        %v1074 = vld [vmem:[#allocation2 + $0xb2] sm:$0xff]
        %v1075 = vld [vmem:[#allocation2 + $0xc2] sm:$0xff]
        %v1076 = vld [vmem:[#allocation2 + $0xca] sm:$0xff]
        %v1077 = vld [vmem:[#allocation2 + $0xda] sm:$0xff]
        %v1078 = vld [vmem:[#allocation2 + $0xe2] sm:$0xff]
        %v1079 = vld [vmem:[#allocation2 + $0xf2] sm:$0xff]
        %v1080 = vld [vmem:[#allocation2 + $0xfa] sm:$0xff]
        %v1081 = vld [vmem:[#allocation2 + $0x10a] sm:$0xff]
        %v1082 = vld [vmem:[#allocation2 + $0x112] sm:$0xff]
        %v1083 = vld [vmem:[#allocation2 + $0x122] sm:$0xff]
        %v1084 = vld [vmem:[#allocation2 + $0x12a] sm:$0xff]
        %v1085 = vld [vmem:[#allocation2 + $0x13a] sm:$0xff]
        %v1086 = vld [vmem:[#allocation2 + $0x142] sm:$0xff]
        %v1087 = vld [vmem:[#allocation2 + $0x152] sm:$0xff]
        %v1088 = vld [vmem:[#allocation2 + $0x15a] sm:$0xff]
        %v1089 = vld [vmem:[#allocation2 + $0x16a] sm:$0xff]
        %v1090 = vld [vmem:[#allocation2 + $0x172] sm:$0xff]
        %v1091 = vld [vmem:[%s962] sm:$0xff]
        %v1092 = vld [vmem:[%s962 + $0x8] sm:$0xff]
        %v1093 = vld [vmem:[%s962 + $0x18] sm:$0xff]
        %v1094 = vld [vmem:[%s962 + $0x20] sm:$0xff]
        %v1095 = vld [vmem:[%s962 + $0x30] sm:$0xff]
        %v1096 = vld [vmem:[%s962 + $0x38] sm:$0xff]
        %v1097 = vld [vmem:[%s962 + $0x48] sm:$0xff]
        %v1098 = vld [vmem:[%s962 + $0x50] sm:$0xff]
        %v1099 = vld [vmem:[%s962 + $0x60] sm:$0xff]
        %v1100 = vld [vmem:[%s962 + $0x68] sm:$0xff]
        %v1101 = vld [vmem:[%s962 + $0x78] sm:$0xff]
        %v1102 = vld [vmem:[%s962 + $0x80] sm:$0xff]
        %v1103 = vld [vmem:[%s962 + $0x90] sm:$0xff]
        %v1104 = vld [vmem:[%s962 + $0x98] sm:$0xff]
        %v1105 = vld [vmem:[%s962 + $0xa8] sm:$0xff]
        %v1106 = vld [vmem:[%s962 + $0xb0] sm:$0xff]
        %v1107 = vld [vmem:[%s962 + $0xc0] sm:$0xff]
        %v1108 = vld [vmem:[%s962 + $0xc8] sm:$0xff]
        %v1109 = vld [vmem:[%s962 + $0xd8] sm:$0xff]
        %v1110 = vld [vmem:[%s962 + $0xe0] sm:$0xff]
        %v1111 = vld [vmem:[%s962 + $0xf0] sm:$0xff]
        %v1112 = vld [vmem:[%s962 + $0xf8] sm:$0xff]
        %v1113 = vld [vmem:[%s962 + $0x108] sm:$0xff]
        %v1114 = vld [vmem:[%s962 + $0x110] sm:$0xff]
        %v1115 = vld [vmem:[%s962 + $0x120] sm:$0xff]
        %v1116 = vld [vmem:[%s962 + $0x128] sm:$0xff]
        %v1117 = vld [vmem:[%s962 + $0x138] sm:$0xff]
        %v1118 = vld [vmem:[%s962 + $0x140] sm:$0xff]
        %v1119 = vld [vmem:[%s962 + $0x150] sm:$0xff]
        %v1120 = vld [vmem:[%s962 + $0x158] sm:$0xff]
        %v1121 = vld [vmem:[%s962 + $0x168] sm:$0xff]
        %v1122 = vld [vmem:[%s962 + $0x170] sm:$0xff]
        %v1123 = vld [vmem:[%s962 + $0x1] sm:$0xff]
        %v1124 = vld [vmem:[%s962 + $0x9] sm:$0xff]
        %v1125 = vld [vmem:[%s962 + $0x19] sm:$0xff]
        %v1126 = vld [vmem:[%s962 + $0x21] sm:$0xff]
        %v1127 = vld [vmem:[%s962 + $0x31] sm:$0xff]
        %v1128 = vld [vmem:[%s962 + $0x39] sm:$0xff]
        %v1129 = vld [vmem:[%s962 + $0x49] sm:$0xff]
        %v1130 = vld [vmem:[%s962 + $0x51] sm:$0xff]
        %v1131 = vld [vmem:[%s962 + $0x61] sm:$0xff]
        %v1132 = vld [vmem:[%s962 + $0x69] sm:$0xff]
        %v1133 = vld [vmem:[%s962 + $0x79] sm:$0xff]
        %v1134 = vld [vmem:[%s962 + $0x81] sm:$0xff]
        %v1135 = vld [vmem:[%s962 + $0x91] sm:$0xff]
        %v1136 = vld [vmem:[%s962 + $0x99] sm:$0xff]
        %v1137 = vld [vmem:[%s962 + $0xa9] sm:$0xff]
        %v1138 = vld [vmem:[%s962 + $0xb1] sm:$0xff]
        %v1139 = vld [vmem:[%s962 + $0xc1] sm:$0xff]
        %v1140 = vld [vmem:[%s962 + $0xc9] sm:$0xff]
        %v1141 = vld [vmem:[%s962 + $0xd9] sm:$0xff]
        %v1142 = vld [vmem:[%s962 + $0xe1] sm:$0xff]
        %v1143 = vld [vmem:[%s962 + $0xf1] sm:$0xff]
        %v1144 = vld [vmem:[%s962 + $0xf9] sm:$0xff]
        %v1145 = vld [vmem:[%s962 + $0x109] sm:$0xff]
        %v1146 = vld [vmem:[%s962 + $0x111] sm:$0xff]
        %v1147 = vld [vmem:[%s962 + $0x121] sm:$0xff]
        %v1148 = vld [vmem:[%s962 + $0x129] sm:$0xff]
        %v1149 = vld [vmem:[%s962 + $0x139] sm:$0xff]
        %v1150 = vld [vmem:[%s962 + $0x141] sm:$0xff]
        %v1151 = vld [vmem:[%s962 + $0x151] sm:$0xff]
        %v1152 = vld [vmem:[%s962 + $0x159] sm:$0xff]
        %v1153 = vld [vmem:[%s962 + $0x169] sm:$0xff]
        %v1154 = vld [vmem:[%s962 + $0x171] sm:$0xff]
        %v1155 = vld [vmem:[%s962 + $0x2] sm:$0xff]
        %v1156 = vld [vmem:[%s962 + $0xa] sm:$0xff]
        %v1157 = vld [vmem:[%s962 + $0x1a] sm:$0xff]
        %v1158 = vld [vmem:[%s962 + $0x22] sm:$0xff]
        %v1159 = vld [vmem:[%s962 + $0x32] sm:$0xff]
        %v1160 = vld [vmem:[%s962 + $0x3a] sm:$0xff]
        %v1161 = vld [vmem:[%s962 + $0x4a] sm:$0xff]
        %v1162 = vld [vmem:[%s962 + $0x52] sm:$0xff]
        %v1163 = vld [vmem:[%s962 + $0x62] sm:$0xff]
        %v1164 = vld [vmem:[%s962 + $0x6a] sm:$0xff]
        %v1165 = vld [vmem:[%s962 + $0x7a] sm:$0xff]
        %v1166 = vld [vmem:[%s962 + $0x82] sm:$0xff]
        %v1167 = vld [vmem:[%s962 + $0x92] sm:$0xff]
        %v1168 = vld [vmem:[%s962 + $0x9a] sm:$0xff]
        %v1169 = vld [vmem:[%s962 + $0xaa] sm:$0xff]
        %v1170 = vld [vmem:[%s962 + $0xb2] sm:$0xff]
        %v1171 = vld [vmem:[%s962 + $0xc2] sm:$0xff]
        %v1172 = vld [vmem:[%s962 + $0xca] sm:$0xff]
        %v1173 = vld [vmem:[%s962 + $0xda] sm:$0xff]
        %v1174 = vld [vmem:[%s962 + $0xe2] sm:$0xff]
        %v1175 = vld [vmem:[%s962 + $0xf2] sm:$0xff]
        %v1176 = vld [vmem:[%s962 + $0xfa] sm:$0xff]
        %v1177 = vld [vmem:[%s962 + $0x10a] sm:$0xff]
        %v1178 = vld [vmem:[%s962 + $0x112] sm:$0xff]
        %v1179 = vld [vmem:[%s962 + $0x122] sm:$0xff]
        %v1180 = vld [vmem:[%s962 + $0x12a] sm:$0xff]
        %v1181 = vld [vmem:[%s962 + $0x13a] sm:$0xff]
        %v1182 = vld [vmem:[%s962 + $0x142] sm:$0xff]
        %v1183 = vld [vmem:[%s962 + $0x152] sm:$0xff]
        %v1184 = vld [vmem:[%s962 + $0x15a] sm:$0xff]
        %v1185 = vld [vmem:[%s962 + $0x16a] sm:$0xff]
        %v1186 = vld [vmem:[%s962 + $0x172] sm:$0xff]
        %s1187 = scalar_lea.vmem [#allocation2], 48
        %v1188 = vld [vmem:[%s1187] sm:$0xff]
        %v1189 = vld [vmem:[%s1187 + $0x8] sm:$0xff]
        %v1190 = vld [vmem:[%s1187 + $0x18] sm:$0xff]
        %v1191 = vld [vmem:[%s1187 + $0x20] sm:$0xff]
        %v1192 = vld [vmem:[%s1187 + $0x30] sm:$0xff]
        %v1193 = vld [vmem:[%s1187 + $0x38] sm:$0xff]
        %v1194 = vld [vmem:[%s1187 + $0x48] sm:$0xff]
        %v1195 = vld [vmem:[%s1187 + $0x50] sm:$0xff]
        %v1196 = vld [vmem:[%s1187 + $0x60] sm:$0xff]
        %v1197 = vld [vmem:[%s1187 + $0x68] sm:$0xff]
        %v1198 = vld [vmem:[%s1187 + $0x78] sm:$0xff]
        %v1199 = vld [vmem:[%s1187 + $0x80] sm:$0xff]
        %v1200 = vld [vmem:[%s1187 + $0x90] sm:$0xff]
        %v1201 = vld [vmem:[%s1187 + $0x98] sm:$0xff]
        %v1202 = vld [vmem:[%s1187 + $0xa8] sm:$0xff]
        %v1203 = vld [vmem:[%s1187 + $0xb0] sm:$0xff]
        %v1204 = vld [vmem:[%s1187 + $0xc0] sm:$0xff]
        %v1205 = vld [vmem:[%s1187 + $0xc8] sm:$0xff]
        %v1206 = vld [vmem:[%s1187 + $0xd8] sm:$0xff]
        %v1207 = vld [vmem:[%s1187 + $0xe0] sm:$0xff]
        %v1208 = vld [vmem:[%s1187 + $0xf0] sm:$0xff]
        %v1209 = vld [vmem:[%s1187 + $0xf8] sm:$0xff]
        %v1210 = vld [vmem:[%s1187 + $0x108] sm:$0xff]
        %v1211 = vld [vmem:[%s1187 + $0x110] sm:$0xff]
        %v1212 = vld [vmem:[%s1187 + $0x120] sm:$0xff]
        %v1213 = vld [vmem:[%s1187 + $0x128] sm:$0xff]
        %v1214 = vld [vmem:[%s1187 + $0x138] sm:$0xff]
        %v1215 = vld [vmem:[%s1187 + $0x140] sm:$0xff]
        %v1216 = vld [vmem:[%s1187 + $0x150] sm:$0xff]
        %v1217 = vld [vmem:[%s1187 + $0x158] sm:$0xff]
        %v1218 = vld [vmem:[%s1187 + $0x168] sm:$0xff]
        %v1219 = vld [vmem:[%s1187 + $0x170] sm:$0xff]
        %v1220 = vld [vmem:[%s1187 + $0x1] sm:$0xff]
        %v1221 = vld [vmem:[%s1187 + $0x9] sm:$0xff]
        %v1222 = vld [vmem:[%s1187 + $0x19] sm:$0xff]
        %v1223 = vld [vmem:[%s1187 + $0x21] sm:$0xff]
        %v1224 = vld [vmem:[%s1187 + $0x31] sm:$0xff]
        %v1225 = vld [vmem:[%s1187 + $0x39] sm:$0xff]
        %v1226 = vld [vmem:[%s1187 + $0x49] sm:$0xff]
        %v1227 = vld [vmem:[%s1187 + $0x51] sm:$0xff]
        %v1228 = vld [vmem:[%s1187 + $0x61] sm:$0xff]
        %v1229 = vld [vmem:[%s1187 + $0x69] sm:$0xff]
        %v1230 = vld [vmem:[%s1187 + $0x79] sm:$0xff]
        %v1231 = vld [vmem:[%s1187 + $0x81] sm:$0xff]
        %v1232 = vld [vmem:[%s1187 + $0x91] sm:$0xff]
        %v1233 = vld [vmem:[%s1187 + $0x99] sm:$0xff]
        %v1234 = vld [vmem:[%s1187 + $0xa9] sm:$0xff]
        %v1235 = vld [vmem:[%s1187 + $0xb1] sm:$0xff]
        %v1236 = vld [vmem:[%s1187 + $0xc1] sm:$0xff]
        %v1237 = vld [vmem:[%s1187 + $0xc9] sm:$0xff]
        %v1238 = vld [vmem:[%s1187 + $0xd9] sm:$0xff]
        %v1239 = vld [vmem:[%s1187 + $0xe1] sm:$0xff]
        %v1240 = vld [vmem:[%s1187 + $0xf1] sm:$0xff]
        %v1241 = vld [vmem:[%s1187 + $0xf9] sm:$0xff]
        %v1242 = vld [vmem:[%s1187 + $0x109] sm:$0xff]
        %v1243 = vld [vmem:[%s1187 + $0x111] sm:$0xff]
        %v1244 = vld [vmem:[%s1187 + $0x121] sm:$0xff]
        %v1245 = vld [vmem:[%s1187 + $0x129] sm:$0xff]
        %v1246 = vld [vmem:[%s1187 + $0x139] sm:$0xff]
        %v1247 = vld [vmem:[%s1187 + $0x141] sm:$0xff]
        %v1248 = vld [vmem:[%s1187 + $0x151] sm:$0xff]
        %v1249 = vld [vmem:[%s1187 + $0x159] sm:$0xff]
        %v1250 = vld [vmem:[%s1187 + $0x169] sm:$0xff]
        %v1251 = vld [vmem:[%s1187 + $0x171] sm:$0xff]
        %v1252 = vld [vmem:[%s1187 + $0x2] sm:$0xff]
        %v1253 = vld [vmem:[%s1187 + $0xa] sm:$0xff]
        %v1254 = vld [vmem:[%s1187 + $0x1a] sm:$0xff]
        %v1255 = vld [vmem:[%s1187 + $0x22] sm:$0xff]
        %v1256 = vld [vmem:[%s1187 + $0x32] sm:$0xff]
        %v1257 = vld [vmem:[%s1187 + $0x3a] sm:$0xff]
        %v1258 = vld [vmem:[%s1187 + $0x4a] sm:$0xff]
        %v1259 = vld [vmem:[%s1187 + $0x52] sm:$0xff]
        %v1260 = vld [vmem:[%s1187 + $0x62] sm:$0xff]
        %v1261 = vld [vmem:[%s1187 + $0x6a] sm:$0xff]
        %v1262 = vld [vmem:[%s1187 + $0x7a] sm:$0xff]
        %v1263 = vld [vmem:[%s1187 + $0x82] sm:$0xff]
        %v1264 = vld [vmem:[%s1187 + $0x92] sm:$0xff]
        %v1265 = vld [vmem:[%s1187 + $0x9a] sm:$0xff]
        %v1266 = vld [vmem:[%s1187 + $0xaa] sm:$0xff]
        %v1267 = vld [vmem:[%s1187 + $0xb2] sm:$0xff]
        %v1268 = vld [vmem:[%s1187 + $0xc2] sm:$0xff]
        %v1269 = vld [vmem:[%s1187 + $0xca] sm:$0xff]
        %v1270 = vld [vmem:[%s1187 + $0xda] sm:$0xff]
        %v1271 = vld [vmem:[%s1187 + $0xe2] sm:$0xff]
        %v1272 = vld [vmem:[%s1187 + $0xf2] sm:$0xff]
        %v1273 = vld [vmem:[%s1187 + $0xfa] sm:$0xff]
        %v1274 = vld [vmem:[%s1187 + $0x10a] sm:$0xff]
        %v1275 = vld [vmem:[%s1187 + $0x112] sm:$0xff]
        %v1276 = vld [vmem:[%s1187 + $0x122] sm:$0xff]
        %v1277 = vld [vmem:[%s1187 + $0x12a] sm:$0xff]
        %v1278 = vld [vmem:[%s1187 + $0x13a] sm:$0xff]
        %v1279 = vld [vmem:[%s1187 + $0x142] sm:$0xff]
        %v1280 = vld [vmem:[%s1187 + $0x152] sm:$0xff]
        %v1281 = vld [vmem:[%s1187 + $0x15a] sm:$0xff]
        %v1282 = vld [vmem:[%s1187 + $0x16a] sm:$0xff]
        %v1283 = vld [vmem:[%s1187 + $0x172] sm:$0xff]
        %1316 = vrot.lane.b32.xlu0 %v1027, 16
        %v1317 = vpop.permute.xlu0 %1316
        %1318 = vrot.lane.b32.xlu0 %v1028, 16
        %v1319 = vpop.permute.xlu0 %1318
        %1320 = vrot.lane.b32.xlu0 %v1029, 16
        %v1321 = vpop.permute.xlu0 %1320
        %1322 = vrot.lane.b32.xlu0 %v1030, 16
        %v1323 = vpop.permute.xlu0 %1322
        %1324 = vrot.lane.b32.xlu0 %v1031, 16
        %v1325 = vpop.permute.xlu0 %1324
        %1326 = vrot.lane.b32.xlu0 %v1032, 16
        %v1327 = vpop.permute.xlu0 %1326
        %1328 = vrot.lane.b32.xlu0 %v1033, 16
        %v1329 = vpop.permute.xlu0 %1328
        %1330 = vrot.lane.b32.xlu0 %v1034, 16
        %v1331 = vpop.permute.xlu0 %1330
        %1332 = vrot.lane.b32.xlu0 %v1035, 16
        %v1333 = vpop.permute.xlu0 %1332
        %1334 = vrot.lane.b32.xlu0 %v1036, 16
        %v1335 = vpop.permute.xlu0 %1334
        %1336 = vrot.lane.b32.xlu0 %v1037, 16
        %v1337 = vpop.permute.xlu0 %1336
        %1338 = vrot.lane.b32.xlu0 %v1038, 16
        %v1339 = vpop.permute.xlu0 %1338
        %1340 = vrot.lane.b32.xlu0 %v1039, 16
        %v1341 = vpop.permute.xlu0 %1340
        %1342 = vrot.lane.b32.xlu0 %v1040, 16
        %v1343 = vpop.permute.xlu0 %1342
        %1344 = vrot.lane.b32.xlu0 %v1041, 16
        %v1345 = vpop.permute.xlu0 %1344
        %1346 = vrot.lane.b32.xlu0 %v1042, 16
        %v1347 = vpop.permute.xlu0 %1346
        %1348 = vrot.lane.b32.xlu0 %v1043, 16
        %v1349 = vpop.permute.xlu0 %1348
        %1350 = vrot.lane.b32.xlu0 %v1044, 16
        %v1351 = vpop.permute.xlu0 %1350
        %1352 = vrot.lane.b32.xlu0 %v1045, 16
        %v1353 = vpop.permute.xlu0 %1352
        %1354 = vrot.lane.b32.xlu0 %v1046, 16
        %v1355 = vpop.permute.xlu0 %1354
        %1356 = vrot.lane.b32.xlu0 %v1047, 16
        %v1357 = vpop.permute.xlu0 %1356
        %1358 = vrot.lane.b32.xlu0 %v1048, 16
        %v1359 = vpop.permute.xlu0 %1358
        %1360 = vrot.lane.b32.xlu0 %v1049, 16
        %v1361 = vpop.permute.xlu0 %1360
        %1362 = vrot.lane.b32.xlu0 %v1050, 16
        %v1363 = vpop.permute.xlu0 %1362
        %1364 = vrot.lane.b32.xlu0 %v1051, 16
        %v1365 = vpop.permute.xlu0 %1364
        %1366 = vrot.lane.b32.xlu0 %v1052, 16
        %v1367 = vpop.permute.xlu0 %1366
        %1368 = vrot.lane.b32.xlu0 %v1053, 16
        %v1369 = vpop.permute.xlu0 %1368
        %1370 = vrot.lane.b32.xlu0 %v1054, 16
        %v1371 = vpop.permute.xlu0 %1370
        %1372 = vrot.lane.b32.xlu0 %v1055, 16
        %v1373 = vpop.permute.xlu0 %1372
        %1374 = vrot.lane.b32.xlu0 %v1056, 16
        %v1375 = vpop.permute.xlu0 %1374
        %1376 = vrot.lane.b32.xlu0 %v1057, 16
        %v1377 = vpop.permute.xlu0 %1376
        %1378 = vrot.lane.b32.xlu0 %v1058, 16
        %v1379 = vpop.permute.xlu0 %1378
        %1444 = vrot.lane.b32.xlu0 %v1059, 32
        %v1445 = vpop.permute.xlu0 %1444
        %1446 = vrot.lane.b32.xlu0 %v1060, 32
        %v1447 = vpop.permute.xlu0 %1446
        %1448 = vrot.lane.b32.xlu0 %v1061, 32
        %v1449 = vpop.permute.xlu0 %1448
        %1450 = vrot.lane.b32.xlu0 %v1062, 32
        %v1451 = vpop.permute.xlu0 %1450
        %1452 = vrot.lane.b32.xlu0 %v1063, 32
        %v1453 = vpop.permute.xlu0 %1452
        %1454 = vrot.lane.b32.xlu0 %v1064, 32
        %v1455 = vpop.permute.xlu0 %1454
        %1456 = vrot.lane.b32.xlu0 %v1065, 32
        %v1457 = vpop.permute.xlu0 %1456
        %1458 = vrot.lane.b32.xlu0 %v1066, 32
        %v1459 = vpop.permute.xlu0 %1458
        %1460 = vrot.lane.b32.xlu0 %v1067, 32
        %v1461 = vpop.permute.xlu0 %1460
        %1462 = vrot.lane.b32.xlu0 %v1068, 32
        %v1463 = vpop.permute.xlu0 %1462
        %1464 = vrot.lane.b32.xlu0 %v1069, 32
        %v1465 = vpop.permute.xlu0 %1464
        %1466 = vrot.lane.b32.xlu0 %v1070, 32
        %v1467 = vpop.permute.xlu0 %1466
        %1468 = vrot.lane.b32.xlu0 %v1071, 32
        %v1469 = vpop.permute.xlu0 %1468
        %1470 = vrot.lane.b32.xlu0 %v1072, 32
        %v1471 = vpop.permute.xlu0 %1470
        %1472 = vrot.lane.b32.xlu0 %v1073, 32
        %v1473 = vpop.permute.xlu0 %1472
        %1474 = vrot.lane.b32.xlu0 %v1074, 32
        %v1475 = vpop.permute.xlu0 %1474
        %1476 = vrot.lane.b32.xlu0 %v1075, 32
        %v1477 = vpop.permute.xlu0 %1476
        %1478 = vrot.lane.b32.xlu0 %v1076, 32
        %v1479 = vpop.permute.xlu0 %1478
        %1480 = vrot.lane.b32.xlu0 %v1077, 32
        %v1481 = vpop.permute.xlu0 %1480
        %1482 = vrot.lane.b32.xlu0 %v1078, 32
        %v1483 = vpop.permute.xlu0 %1482
        %1484 = vrot.lane.b32.xlu0 %v1079, 32
        %v1485 = vpop.permute.xlu0 %1484
        %1486 = vrot.lane.b32.xlu0 %v1080, 32
        %v1487 = vpop.permute.xlu0 %1486
        %1488 = vrot.lane.b32.xlu0 %v1081, 32
        %v1489 = vpop.permute.xlu0 %1488
        %1490 = vrot.lane.b32.xlu0 %v1082, 32
        %v1491 = vpop.permute.xlu0 %1490
        %1492 = vrot.lane.b32.xlu0 %v1083, 32
        %v1493 = vpop.permute.xlu0 %1492
        %1494 = vrot.lane.b32.xlu0 %v1084, 32
        %v1495 = vpop.permute.xlu0 %1494
        %1496 = vrot.lane.b32.xlu0 %v1085, 32
        %v1497 = vpop.permute.xlu0 %1496
        %1498 = vrot.lane.b32.xlu0 %v1086, 32
        %v1499 = vpop.permute.xlu0 %1498
        %1500 = vrot.lane.b32.xlu0 %v1087, 32
        %v1501 = vpop.permute.xlu0 %1500
        %1502 = vrot.lane.b32.xlu0 %v1088, 32
        %v1503 = vpop.permute.xlu0 %1502
        %1504 = vrot.lane.b32.xlu0 %v1089, 32
        %v1505 = vpop.permute.xlu0 %1504
        %1506 = vrot.lane.b32.xlu0 %v1090, 32
        %v1507 = vpop.permute.xlu0 %1506
        %1572 = vrot.lane.b32.xlu0 %v1091, 48
        %v1573 = vpop.permute.xlu0 %1572
        %1574 = vrot.lane.b32.xlu0 %v1092, 48
        %v1575 = vpop.permute.xlu0 %1574
        %1576 = vrot.lane.b32.xlu0 %v1093, 48
        %v1577 = vpop.permute.xlu0 %1576
        %1578 = vrot.lane.b32.xlu0 %v1094, 48
        %v1579 = vpop.permute.xlu0 %1578
        %1580 = vrot.lane.b32.xlu0 %v1095, 48
        %v1581 = vpop.permute.xlu0 %1580
        %1582 = vrot.lane.b32.xlu0 %v1096, 48
        %v1583 = vpop.permute.xlu0 %1582
        %1584 = vrot.lane.b32.xlu0 %v1097, 48
        %v1585 = vpop.permute.xlu0 %1584
        %1586 = vrot.lane.b32.xlu0 %v1098, 48
        %v1587 = vpop.permute.xlu0 %1586
        %1588 = vrot.lane.b32.xlu0 %v1099, 48
        %v1589 = vpop.permute.xlu0 %1588
        %1590 = vrot.lane.b32.xlu0 %v1100, 48
        %v1591 = vpop.permute.xlu0 %1590
        %1592 = vrot.lane.b32.xlu0 %v1101, 48
        %v1593 = vpop.permute.xlu0 %1592
        %1594 = vrot.lane.b32.xlu0 %v1102, 48
        %v1595 = vpop.permute.xlu0 %1594
        %1596 = vrot.lane.b32.xlu0 %v1103, 48
        %v1597 = vpop.permute.xlu0 %1596
        %1598 = vrot.lane.b32.xlu0 %v1104, 48
        %v1599 = vpop.permute.xlu0 %1598
        %1600 = vrot.lane.b32.xlu0 %v1105, 48
        %v1601 = vpop.permute.xlu0 %1600
        %1602 = vrot.lane.b32.xlu0 %v1106, 48
        %v1603 = vpop.permute.xlu0 %1602
        %1604 = vrot.lane.b32.xlu0 %v1107, 48
        %v1605 = vpop.permute.xlu0 %1604
        %1606 = vrot.lane.b32.xlu0 %v1108, 48
        %v1607 = vpop.permute.xlu0 %1606
        %1608 = vrot.lane.b32.xlu0 %v1109, 48
        %v1609 = vpop.permute.xlu0 %1608
        %1610 = vrot.lane.b32.xlu0 %v1110, 48
        %v1611 = vpop.permute.xlu0 %1610
        %1612 = vrot.lane.b32.xlu0 %v1111, 48
        %v1613 = vpop.permute.xlu0 %1612
        %1614 = vrot.lane.b32.xlu0 %v1112, 48
        %v1615 = vpop.permute.xlu0 %1614
        %1616 = vrot.lane.b32.xlu0 %v1113, 48
        %v1617 = vpop.permute.xlu0 %1616
        %1618 = vrot.lane.b32.xlu0 %v1114, 48
        %v1619 = vpop.permute.xlu0 %1618
        %1620 = vrot.lane.b32.xlu0 %v1115, 48
        %v1621 = vpop.permute.xlu0 %1620
        %1622 = vrot.lane.b32.xlu0 %v1116, 48
        %v1623 = vpop.permute.xlu0 %1622
        %1624 = vrot.lane.b32.xlu0 %v1117, 48
        %v1625 = vpop.permute.xlu0 %1624
        %1626 = vrot.lane.b32.xlu0 %v1118, 48
        %v1627 = vpop.permute.xlu0 %1626
        %1628 = vrot.lane.b32.xlu0 %v1119, 48
        %v1629 = vpop.permute.xlu0 %1628
        %1630 = vrot.lane.b32.xlu0 %v1120, 48
        %v1631 = vpop.permute.xlu0 %1630
        %1632 = vrot.lane.b32.xlu0 %v1121, 48
        %v1633 = vpop.permute.xlu0 %1632
        %1634 = vrot.lane.b32.xlu0 %v1122, 48
        %v1635 = vpop.permute.xlu0 %1634
        %1700 = vrot.lane.b32.xlu0 %v1123, 64
        %v1701 = vpop.permute.xlu0 %1700
        %1702 = vrot.lane.b32.xlu0 %v1124, 64
        %v1703 = vpop.permute.xlu0 %1702
        %1704 = vrot.lane.b32.xlu0 %v1125, 64
        %v1705 = vpop.permute.xlu0 %1704
        %1706 = vrot.lane.b32.xlu0 %v1126, 64
        %v1707 = vpop.permute.xlu0 %1706
        %1708 = vrot.lane.b32.xlu0 %v1127, 64
        %v1709 = vpop.permute.xlu0 %1708
        %1710 = vrot.lane.b32.xlu0 %v1128, 64
        %v1711 = vpop.permute.xlu0 %1710
        %1712 = vrot.lane.b32.xlu0 %v1129, 64
        %v1713 = vpop.permute.xlu0 %1712
        %1714 = vrot.lane.b32.xlu0 %v1130, 64
        %v1715 = vpop.permute.xlu0 %1714
        %1716 = vrot.lane.b32.xlu0 %v1131, 64
        %v1717 = vpop.permute.xlu0 %1716
        %1718 = vrot.lane.b32.xlu0 %v1132, 64
        %v1719 = vpop.permute.xlu0 %1718
        %1720 = vrot.lane.b32.xlu0 %v1133, 64
        %v1721 = vpop.permute.xlu0 %1720
        %1722 = vrot.lane.b32.xlu0 %v1134, 64
        %v1723 = vpop.permute.xlu0 %1722
        %1724 = vrot.lane.b32.xlu0 %v1135, 64
        %v1725 = vpop.permute.xlu0 %1724
        %1726 = vrot.lane.b32.xlu0 %v1136, 64
        %v1727 = vpop.permute.xlu0 %1726
        %1728 = vrot.lane.b32.xlu0 %v1137, 64
        %v1729 = vpop.permute.xlu0 %1728
        %1730 = vrot.lane.b32.xlu0 %v1138, 64
        %v1731 = vpop.permute.xlu0 %1730
        %1732 = vrot.lane.b32.xlu0 %v1139, 64
        %v1733 = vpop.permute.xlu0 %1732
        %1734 = vrot.lane.b32.xlu0 %v1140, 64
        %v1735 = vpop.permute.xlu0 %1734
        %1736 = vrot.lane.b32.xlu0 %v1141, 64
        %v1737 = vpop.permute.xlu0 %1736
        %1738 = vrot.lane.b32.xlu0 %v1142, 64
        %v1739 = vpop.permute.xlu0 %1738
        %1740 = vrot.lane.b32.xlu0 %v1143, 64
        %v1741 = vpop.permute.xlu0 %1740
        %1742 = vrot.lane.b32.xlu0 %v1144, 64
        %v1743 = vpop.permute.xlu0 %1742
        %1744 = vrot.lane.b32.xlu0 %v1145, 64
        %v1745 = vpop.permute.xlu0 %1744
        %1746 = vrot.lane.b32.xlu0 %v1146, 64
        %v1747 = vpop.permute.xlu0 %1746
        %1748 = vrot.lane.b32.xlu0 %v1147, 64
        %v1749 = vpop.permute.xlu0 %1748
        %1750 = vrot.lane.b32.xlu0 %v1148, 64
        %v1751 = vpop.permute.xlu0 %1750
        %1752 = vrot.lane.b32.xlu0 %v1149, 64
        %v1753 = vpop.permute.xlu0 %1752
        %1754 = vrot.lane.b32.xlu0 %v1150, 64
        %v1755 = vpop.permute.xlu0 %1754
        %1756 = vrot.lane.b32.xlu0 %v1151, 64
        %v1757 = vpop.permute.xlu0 %1756
        %1758 = vrot.lane.b32.xlu0 %v1152, 64
        %v1759 = vpop.permute.xlu0 %1758
        %1760 = vrot.lane.b32.xlu0 %v1153, 64
        %v1761 = vpop.permute.xlu0 %1760
        %1762 = vrot.lane.b32.xlu0 %v1154, 64
        %v1763 = vpop.permute.xlu0 %1762
        %1828 = vrot.lane.b32.xlu0 %v1155, 80
        %v1829 = vpop.permute.xlu0 %1828
        %1830 = vrot.lane.b32.xlu0 %v1156, 80
        %v1831 = vpop.permute.xlu0 %1830
        %1832 = vrot.lane.b32.xlu0 %v1157, 80
        %v1833 = vpop.permute.xlu0 %1832
        %1834 = vrot.lane.b32.xlu0 %v1158, 80
        %v1835 = vpop.permute.xlu0 %1834
        %1836 = vrot.lane.b32.xlu0 %v1159, 80
        %v1837 = vpop.permute.xlu0 %1836
        %1838 = vrot.lane.b32.xlu0 %v1160, 80
        %v1839 = vpop.permute.xlu0 %1838
        %1840 = vrot.lane.b32.xlu0 %v1161, 80
        %v1841 = vpop.permute.xlu0 %1840
        %1842 = vrot.lane.b32.xlu0 %v1162, 80
        %v1843 = vpop.permute.xlu0 %1842
        %1844 = vrot.lane.b32.xlu0 %v1163, 80
        %v1845 = vpop.permute.xlu0 %1844
        %1846 = vrot.lane.b32.xlu0 %v1164, 80
        %v1847 = vpop.permute.xlu0 %1846
        %1848 = vrot.lane.b32.xlu0 %v1165, 80
        %v1849 = vpop.permute.xlu0 %1848
        %1850 = vrot.lane.b32.xlu0 %v1166, 80
        %v1851 = vpop.permute.xlu0 %1850
        %1852 = vrot.lane.b32.xlu0 %v1167, 80
        %v1853 = vpop.permute.xlu0 %1852
        %1854 = vrot.lane.b32.xlu0 %v1168, 80
        %v1855 = vpop.permute.xlu0 %1854
        %1856 = vrot.lane.b32.xlu0 %v1169, 80
        %v1857 = vpop.permute.xlu0 %1856
        %1858 = vrot.lane.b32.xlu0 %v1170, 80
        %v1859 = vpop.permute.xlu0 %1858
        %1860 = vrot.lane.b32.xlu0 %v1171, 80
        %v1861 = vpop.permute.xlu0 %1860
        %1862 = vrot.lane.b32.xlu0 %v1172, 80
        %v1863 = vpop.permute.xlu0 %1862
        %1864 = vrot.lane.b32.xlu0 %v1173, 80
        %v1865 = vpop.permute.xlu0 %1864
        %1866 = vrot.lane.b32.xlu0 %v1174, 80
        %v1867 = vpop.permute.xlu0 %1866
        %1868 = vrot.lane.b32.xlu0 %v1175, 80
        %v1869 = vpop.permute.xlu0 %1868
        %1870 = vrot.lane.b32.xlu0 %v1176, 80
        %v1871 = vpop.permute.xlu0 %1870
        %1872 = vrot.lane.b32.xlu0 %v1177, 80
        %v1873 = vpop.permute.xlu0 %1872
        %1874 = vrot.lane.b32.xlu0 %v1178, 80
        %v1875 = vpop.permute.xlu0 %1874
        %1876 = vrot.lane.b32.xlu0 %v1179, 80
        %v1877 = vpop.permute.xlu0 %1876
        %1878 = vrot.lane.b32.xlu0 %v1180, 80
        %v1879 = vpop.permute.xlu0 %1878
        %1880 = vrot.lane.b32.xlu0 %v1181, 80
        %v1881 = vpop.permute.xlu0 %1880
        %1882 = vrot.lane.b32.xlu0 %v1182, 80
        %v1883 = vpop.permute.xlu0 %1882
        %1884 = vrot.lane.b32.xlu0 %v1183, 80
        %v1885 = vpop.permute.xlu0 %1884
        %1886 = vrot.lane.b32.xlu0 %v1184, 80
        %v1887 = vpop.permute.xlu0 %1886
        %1888 = vrot.lane.b32.xlu0 %v1185, 80
        %v1889 = vpop.permute.xlu0 %1888
        %1890 = vrot.lane.b32.xlu0 %v1186, 80
        %v1891 = vpop.permute.xlu0 %1890
        %1956 = vrot.lane.b32.xlu0 %v1188, 96
        %v1957 = vpop.permute.xlu0 %1956
        %1958 = vrot.lane.b32.xlu0 %v1189, 96
        %v1959 = vpop.permute.xlu0 %1958
        %1960 = vrot.lane.b32.xlu0 %v1190, 96
        %v1961 = vpop.permute.xlu0 %1960
        %1962 = vrot.lane.b32.xlu0 %v1191, 96
        %v1963 = vpop.permute.xlu0 %1962
        %1964 = vrot.lane.b32.xlu0 %v1192, 96
        %v1965 = vpop.permute.xlu0 %1964
        %1966 = vrot.lane.b32.xlu0 %v1193, 96
        %v1967 = vpop.permute.xlu0 %1966
        %1968 = vrot.lane.b32.xlu0 %v1194, 96
        %v1969 = vpop.permute.xlu0 %1968
        %1970 = vrot.lane.b32.xlu0 %v1195, 96
        %v1971 = vpop.permute.xlu0 %1970
        %1972 = vrot.lane.b32.xlu0 %v1196, 96
        %v1973 = vpop.permute.xlu0 %1972
        %1974 = vrot.lane.b32.xlu0 %v1197, 96
        %v1975 = vpop.permute.xlu0 %1974
        %1976 = vrot.lane.b32.xlu0 %v1198, 96
        %v1977 = vpop.permute.xlu0 %1976
        %1978 = vrot.lane.b32.xlu0 %v1199, 96
        %v1979 = vpop.permute.xlu0 %1978
        %1980 = vrot.lane.b32.xlu0 %v1200, 96
        %v1981 = vpop.permute.xlu0 %1980
        %1982 = vrot.lane.b32.xlu0 %v1201, 96
        %v1983 = vpop.permute.xlu0 %1982
        %1984 = vrot.lane.b32.xlu0 %v1202, 96
        %v1985 = vpop.permute.xlu0 %1984
        %1986 = vrot.lane.b32.xlu0 %v1203, 96
        %v1987 = vpop.permute.xlu0 %1986
        %1988 = vrot.lane.b32.xlu0 %v1204, 96
        %v1989 = vpop.permute.xlu0 %1988
        %1990 = vrot.lane.b32.xlu0 %v1205, 96
        %v1991 = vpop.permute.xlu0 %1990
        %1992 = vrot.lane.b32.xlu0 %v1206, 96
        %v1993 = vpop.permute.xlu0 %1992
        %1994 = vrot.lane.b32.xlu0 %v1207, 96
        %v1995 = vpop.permute.xlu0 %1994
        %1996 = vrot.lane.b32.xlu0 %v1208, 96
        %v1997 = vpop.permute.xlu0 %1996
        %1998 = vrot.lane.b32.xlu0 %v1209, 96
        %v1999 = vpop.permute.xlu0 %1998
        %2000 = vrot.lane.b32.xlu0 %v1210, 96
        %v2001 = vpop.permute.xlu0 %2000
        %2002 = vrot.lane.b32.xlu0 %v1211, 96
        %v2003 = vpop.permute.xlu0 %2002
        %2004 = vrot.lane.b32.xlu0 %v1212, 96
        %v2005 = vpop.permute.xlu0 %2004
        %2006 = vrot.lane.b32.xlu0 %v1213, 96
        %v2007 = vpop.permute.xlu0 %2006
        %2008 = vrot.lane.b32.xlu0 %v1214, 96
        %v2009 = vpop.permute.xlu0 %2008
        %2010 = vrot.lane.b32.xlu0 %v1215, 96
        %v2011 = vpop.permute.xlu0 %2010
        %2012 = vrot.lane.b32.xlu0 %v1216, 96
        %v2013 = vpop.permute.xlu0 %2012
        %2014 = vrot.lane.b32.xlu0 %v1217, 96
        %v2015 = vpop.permute.xlu0 %2014
        %2016 = vrot.lane.b32.xlu0 %v1218, 96
        %v2017 = vpop.permute.xlu0 %2016
        %2018 = vrot.lane.b32.xlu0 %v1219, 96
        %v2019 = vpop.permute.xlu0 %2018
        %2084 = vrot.lane.b32.xlu0 %v1220, 112
        %v2085 = vpop.permute.xlu0 %2084
        %2086 = vrot.lane.b32.xlu0 %v1221, 112
        %v2087 = vpop.permute.xlu0 %2086
        %2088 = vrot.lane.b32.xlu0 %v1222, 112
        %v2089 = vpop.permute.xlu0 %2088
        %2090 = vrot.lane.b32.xlu0 %v1223, 112
        %v2091 = vpop.permute.xlu0 %2090
        %2092 = vrot.lane.b32.xlu0 %v1224, 112
        %v2093 = vpop.permute.xlu0 %2092
        %2094 = vrot.lane.b32.xlu0 %v1225, 112
        %v2095 = vpop.permute.xlu0 %2094
        %2096 = vrot.lane.b32.xlu0 %v1226, 112
        %v2097 = vpop.permute.xlu0 %2096
        %2098 = vrot.lane.b32.xlu0 %v1227, 112
        %v2099 = vpop.permute.xlu0 %2098
        %2100 = vrot.lane.b32.xlu0 %v1228, 112
        %v2101 = vpop.permute.xlu0 %2100
        %2102 = vrot.lane.b32.xlu0 %v1229, 112
        %v2103 = vpop.permute.xlu0 %2102
        %2104 = vrot.lane.b32.xlu0 %v1230, 112
        %v2105 = vpop.permute.xlu0 %2104
        %2106 = vrot.lane.b32.xlu0 %v1231, 112
        %v2107 = vpop.permute.xlu0 %2106
        %2108 = vrot.lane.b32.xlu0 %v1232, 112
        %v2109 = vpop.permute.xlu0 %2108
        %2110 = vrot.lane.b32.xlu0 %v1233, 112
        %v2111 = vpop.permute.xlu0 %2110
        %2112 = vrot.lane.b32.xlu0 %v1234, 112
        %v2113 = vpop.permute.xlu0 %2112
        %2114 = vrot.lane.b32.xlu0 %v1235, 112
        %v2115 = vpop.permute.xlu0 %2114
        %2116 = vrot.lane.b32.xlu0 %v1236, 112
        %v2117 = vpop.permute.xlu0 %2116
        %2118 = vrot.lane.b32.xlu0 %v1237, 112
        %v2119 = vpop.permute.xlu0 %2118
        %2120 = vrot.lane.b32.xlu0 %v1238, 112
        %v2121 = vpop.permute.xlu0 %2120
        %2122 = vrot.lane.b32.xlu0 %v1239, 112
        %v2123 = vpop.permute.xlu0 %2122
        %2124 = vrot.lane.b32.xlu0 %v1240, 112
        %v2125 = vpop.permute.xlu0 %2124
        %2126 = vrot.lane.b32.xlu0 %v1241, 112
        %v2127 = vpop.permute.xlu0 %2126
        %2128 = vrot.lane.b32.xlu0 %v1242, 112
        %v2129 = vpop.permute.xlu0 %2128
        %2130 = vrot.lane.b32.xlu0 %v1243, 112
        %v2131 = vpop.permute.xlu0 %2130
        %2132 = vrot.lane.b32.xlu0 %v1244, 112
        %v2133 = vpop.permute.xlu0 %2132
        %2134 = vrot.lane.b32.xlu0 %v1245, 112
        %v2135 = vpop.permute.xlu0 %2134
        %2136 = vrot.lane.b32.xlu0 %v1246, 112
        %v2137 = vpop.permute.xlu0 %2136
        %2138 = vrot.lane.b32.xlu0 %v1247, 112
        %v2139 = vpop.permute.xlu0 %2138
        %2140 = vrot.lane.b32.xlu0 %v1248, 112
        %v2141 = vpop.permute.xlu0 %2140
        %2142 = vrot.lane.b32.xlu0 %v1249, 112
        %v2143 = vpop.permute.xlu0 %2142
        %2144 = vrot.lane.b32.xlu0 %v1250, 112
        %v2145 = vpop.permute.xlu0 %2144
        %2146 = vrot.lane.b32.xlu0 %v1251, 112
        %v2147 = vpop.permute.xlu0 %2146
        %v2180 = vsel %vm874, %v995, %v1317
        %v2181 = vsel %vm874, %v996, %v1319
        %v2182 = vsel %vm874, %v997, %v1321
        %v2183 = vsel %vm874, %v998, %v1323
        %v2184 = vsel %vm874, %v999, %v1325
        %v2185 = vsel %vm874, %v1000, %v1327
        %v2186 = vsel %vm874, %v1001, %v1329
        %v2187 = vsel %vm874, %v1002, %v1331
        %v2188 = vsel %vm874, %v1003, %v1333
        %v2189 = vsel %vm874, %v1004, %v1335
        %v2190 = vsel %vm874, %v1005, %v1337
        %v2191 = vsel %vm874, %v1006, %v1339
        %v2192 = vsel %vm874, %v1007, %v1341
        %v2193 = vsel %vm874, %v1008, %v1343
        %v2194 = vsel %vm874, %v1009, %v1345
        %v2195 = vsel %vm874, %v1010, %v1347
        %v2196 = vsel %vm874, %v1011, %v1349
        %v2197 = vsel %vm874, %v1012, %v1351
        %v2198 = vsel %vm874, %v1013, %v1353
        %v2199 = vsel %vm874, %v1014, %v1355
        %v2200 = vsel %vm874, %v1015, %v1357
        %v2201 = vsel %vm874, %v1016, %v1359
        %v2202 = vsel %vm874, %v1017, %v1361
        %v2203 = vsel %vm874, %v1018, %v1363
        %v2204 = vsel %vm874, %v1019, %v1365
        %v2205 = vsel %vm874, %v1020, %v1367
        %v2206 = vsel %vm874, %v1021, %v1369
        %v2207 = vsel %vm874, %v1022, %v1371
        %v2208 = vsel %vm874, %v1023, %v1373
        %v2209 = vsel %vm874, %v1024, %v1375
        %v2210 = vsel %vm874, %v1025, %v1377
        %v2211 = vsel %vm874, %v1026, %v1379
        %vm2212 = vcmask 261120
        %v2213 = vsel %vm2212, %v2180, %v1445
        %v2214 = vsel %vm2212, %v2181, %v1447
        %v2215 = vsel %vm2212, %v2182, %v1449
        %v2216 = vsel %vm2212, %v2183, %v1451
        %v2217 = vsel %vm2212, %v2184, %v1453
        %v2218 = vsel %vm2212, %v2185, %v1455
        %v2219 = vsel %vm2212, %v2186, %v1457
        %v2220 = vsel %vm2212, %v2187, %v1459
        %v2221 = vsel %vm2212, %v2188, %v1461
        %v2222 = vsel %vm2212, %v2189, %v1463
        %v2223 = vsel %vm2212, %v2190, %v1465
        %v2224 = vsel %vm2212, %v2191, %v1467
        %v2225 = vsel %vm2212, %v2192, %v1469
        %v2226 = vsel %vm2212, %v2193, %v1471
        %v2227 = vsel %vm2212, %v2194, %v1473
        %v2228 = vsel %vm2212, %v2195, %v1475
        %v2229 = vsel %vm2212, %v2196, %v1477
        %v2230 = vsel %vm2212, %v2197, %v1479
        %v2231 = vsel %vm2212, %v2198, %v1481
        %v2232 = vsel %vm2212, %v2199, %v1483
        %v2233 = vsel %vm2212, %v2200, %v1485
        %v2234 = vsel %vm2212, %v2201, %v1487
        %v2235 = vsel %vm2212, %v2202, %v1489
        %v2236 = vsel %vm2212, %v2203, %v1491
        %v2237 = vsel %vm2212, %v2204, %v1493
        %v2238 = vsel %vm2212, %v2205, %v1495
        %v2239 = vsel %vm2212, %v2206, %v1497
        %v2240 = vsel %vm2212, %v2207, %v1499
        %v2241 = vsel %vm2212, %v2208, %v1501
        %v2242 = vsel %vm2212, %v2209, %v1503
        %v2243 = vsel %vm2212, %v2210, %v1505
        %v2244 = vsel %vm2212, %v2211, %v1507
        %vm2245 = vcmask 392192
        %v2246 = vsel %vm2245, %v2213, %v1573
        %v2247 = vsel %vm2245, %v2214, %v1575
        %v2248 = vsel %vm2245, %v2215, %v1577
        %v2249 = vsel %vm2245, %v2216, %v1579
        %v2250 = vsel %vm2245, %v2217, %v1581
        %v2251 = vsel %vm2245, %v2218, %v1583
        %v2252 = vsel %vm2245, %v2219, %v1585
        %v2253 = vsel %vm2245, %v2220, %v1587
        %v2254 = vsel %vm2245, %v2221, %v1589
        %v2255 = vsel %vm2245, %v2222, %v1591
        %v2256 = vsel %vm2245, %v2223, %v1593
        %v2257 = vsel %vm2245, %v2224, %v1595
        %v2258 = vsel %vm2245, %v2225, %v1597
        %v2259 = vsel %vm2245, %v2226, %v1599
        %v2260 = vsel %vm2245, %v2227, %v1601
        %v2261 = vsel %vm2245, %v2228, %v1603
        %v2262 = vsel %vm2245, %v2229, %v1605
        %v2263 = vsel %vm2245, %v2230, %v1607
        %v2264 = vsel %vm2245, %v2231, %v1609
        %v2265 = vsel %vm2245, %v2232, %v1611
        %v2266 = vsel %vm2245, %v2233, %v1613
        %v2267 = vsel %vm2245, %v2234, %v1615
        %v2268 = vsel %vm2245, %v2235, %v1617
        %v2269 = vsel %vm2245, %v2236, %v1619
        %v2270 = vsel %vm2245, %v2237, %v1621
        %v2271 = vsel %vm2245, %v2238, %v1623
        %v2272 = vsel %vm2245, %v2239, %v1625
        %v2273 = vsel %vm2245, %v2240, %v1627
        %v2274 = vsel %vm2245, %v2241, %v1629
        %v2275 = vsel %vm2245, %v2242, %v1631
        %v2276 = vsel %vm2245, %v2243, %v1633
        %v2277 = vsel %vm2245, %v2244, %v1635
        %vm2278 = vcmask 523264
        %v2279 = vsel %vm2278, %v2246, %v1701
        %v2280 = vsel %vm2278, %v2247, %v1703
        %v2281 = vsel %vm2278, %v2248, %v1705
        %v2282 = vsel %vm2278, %v2249, %v1707
        %v2283 = vsel %vm2278, %v2250, %v1709
        %v2284 = vsel %vm2278, %v2251, %v1711
        %v2285 = vsel %vm2278, %v2252, %v1713
        %v2286 = vsel %vm2278, %v2253, %v1715
        %v2287 = vsel %vm2278, %v2254, %v1717
        %v2288 = vsel %vm2278, %v2255, %v1719
        %v2289 = vsel %vm2278, %v2256, %v1721
        %v2290 = vsel %vm2278, %v2257, %v1723
        %v2291 = vsel %vm2278, %v2258, %v1725
        %v2292 = vsel %vm2278, %v2259, %v1727
        %v2293 = vsel %vm2278, %v2260, %v1729
        %v2294 = vsel %vm2278, %v2261, %v1731
        %v2295 = vsel %vm2278, %v2262, %v1733
        %v2296 = vsel %vm2278, %v2263, %v1735
        %v2297 = vsel %vm2278, %v2264, %v1737
        %v2298 = vsel %vm2278, %v2265, %v1739
        %v2299 = vsel %vm2278, %v2266, %v1741
        %v2300 = vsel %vm2278, %v2267, %v1743
        %v2301 = vsel %vm2278, %v2268, %v1745
        %v2302 = vsel %vm2278, %v2269, %v1747
        %v2303 = vsel %vm2278, %v2270, %v1749
        %v2304 = vsel %vm2278, %v2271, %v1751
        %v2305 = vsel %vm2278, %v2272, %v1753
        %v2306 = vsel %vm2278, %v2273, %v1755
        %v2307 = vsel %vm2278, %v2274, %v1757
        %v2308 = vsel %vm2278, %v2275, %v1759
        %v2309 = vsel %vm2278, %v2276, %v1761
        %v2310 = vsel %vm2278, %v2277, %v1763
        %vm2311 = vcmask 654336
        %v2312 = vsel %vm2311, %v2279, %v1829
        %v2313 = vsel %vm2311, %v2280, %v1831
        %v2314 = vsel %vm2311, %v2281, %v1833
        %v2315 = vsel %vm2311, %v2282, %v1835
        %v2316 = vsel %vm2311, %v2283, %v1837
        %v2317 = vsel %vm2311, %v2284, %v1839
        %v2318 = vsel %vm2311, %v2285, %v1841
        %v2319 = vsel %vm2311, %v2286, %v1843
        %v2320 = vsel %vm2311, %v2287, %v1845
        %v2321 = vsel %vm2311, %v2288, %v1847
        %v2322 = vsel %vm2311, %v2289, %v1849
        %v2323 = vsel %vm2311, %v2290, %v1851
        %v2324 = vsel %vm2311, %v2291, %v1853
        %v2325 = vsel %vm2311, %v2292, %v1855
        %v2326 = vsel %vm2311, %v2293, %v1857
        %v2327 = vsel %vm2311, %v2294, %v1859
        %v2328 = vsel %vm2311, %v2295, %v1861
        %v2329 = vsel %vm2311, %v2296, %v1863
        %v2330 = vsel %vm2311, %v2297, %v1865
        %v2331 = vsel %vm2311, %v2298, %v1867
        %v2332 = vsel %vm2311, %v2299, %v1869
        %v2333 = vsel %vm2311, %v2300, %v1871
        %v2334 = vsel %vm2311, %v2301, %v1873
        %v2335 = vsel %vm2311, %v2302, %v1875
        %v2336 = vsel %vm2311, %v2303, %v1877
        %v2337 = vsel %vm2311, %v2304, %v1879
        %v2338 = vsel %vm2311, %v2305, %v1881
        %v2339 = vsel %vm2311, %v2306, %v1883
        %v2340 = vsel %vm2311, %v2307, %v1885
        %v2341 = vsel %vm2311, %v2308, %v1887
        %v2342 = vsel %vm2311, %v2309, %v1889
        %v2343 = vsel %vm2311, %v2310, %v1891
        %vm2344 = vcmask 785408
        %v2345 = vsel %vm2344, %v2312, %v1957
        %v2346 = vsel %vm2344, %v2313, %v1959
        %v2347 = vsel %vm2344, %v2314, %v1961
        %v2348 = vsel %vm2344, %v2315, %v1963
        %v2349 = vsel %vm2344, %v2316, %v1965
        %v2350 = vsel %vm2344, %v2317, %v1967
        %v2351 = vsel %vm2344, %v2318, %v1969
        %v2352 = vsel %vm2344, %v2319, %v1971
        %v2353 = vsel %vm2344, %v2320, %v1973
        %v2354 = vsel %vm2344, %v2321, %v1975
        %v2355 = vsel %vm2344, %v2322, %v1977
        %v2356 = vsel %vm2344, %v2323, %v1979
        %v2357 = vsel %vm2344, %v2324, %v1981
        %v2358 = vsel %vm2344, %v2325, %v1983
        %v2359 = vsel %vm2344, %v2326, %v1985
        %v2360 = vsel %vm2344, %v2327, %v1987
        %v2361 = vsel %vm2344, %v2328, %v1989
        %v2362 = vsel %vm2344, %v2329, %v1991
        %v2363 = vsel %vm2344, %v2330, %v1993
        %v2364 = vsel %vm2344, %v2331, %v1995
        %v2365 = vsel %vm2344, %v2332, %v1997
        %v2366 = vsel %vm2344, %v2333, %v1999
        %v2367 = vsel %vm2344, %v2334, %v2001
        %v2368 = vsel %vm2344, %v2335, %v2003
        %v2369 = vsel %vm2344, %v2336, %v2005
        %v2370 = vsel %vm2344, %v2337, %v2007
        %v2371 = vsel %vm2344, %v2338, %v2009
        %v2372 = vsel %vm2344, %v2339, %v2011
        %v2373 = vsel %vm2344, %v2340, %v2013
        %v2374 = vsel %vm2344, %v2341, %v2015
        %v2375 = vsel %vm2344, %v2342, %v2017
        %v2376 = vsel %vm2344, %v2343, %v2019
        %vm2377 = vcmask 916480
        %v2378 = vsel %vm2377, %v2345, %v2085
        %v2379 = vsel %vm2377, %v2346, %v2087
        %v2380 = vsel %vm2377, %v2347, %v2089
        %v2381 = vsel %vm2377, %v2348, %v2091
        %v2382 = vsel %vm2377, %v2349, %v2093
        %v2383 = vsel %vm2377, %v2350, %v2095
        %v2384 = vsel %vm2377, %v2351, %v2097
        %v2385 = vsel %vm2377, %v2352, %v2099
        %v2386 = vsel %vm2377, %v2353, %v2101
        %v2387 = vsel %vm2377, %v2354, %v2103
        %v2388 = vsel %vm2377, %v2355, %v2105
        %v2389 = vsel %vm2377, %v2356, %v2107
        %v2390 = vsel %vm2377, %v2357, %v2109
        %v2391 = vsel %vm2377, %v2358, %v2111
        %v2392 = vsel %vm2377, %v2359, %v2113
        %v2393 = vsel %vm2377, %v2360, %v2115
        %v2394 = vsel %vm2377, %v2361, %v2117
        %v2395 = vsel %vm2377, %v2362, %v2119
        %v2396 = vsel %vm2377, %v2363, %v2121
        %v2397 = vsel %vm2377, %v2364, %v2123
        %v2398 = vsel %vm2377, %v2365, %v2125
        %v2399 = vsel %vm2377, %v2366, %v2127
        %v2400 = vsel %vm2377, %v2367, %v2129
        %v2401 = vsel %vm2377, %v2368, %v2131
        %v2402 = vsel %vm2377, %v2369, %v2133
        %v2403 = vsel %vm2377, %v2370, %v2135
        %v2404 = vsel %vm2377, %v2371, %v2137
        %v2405 = vsel %vm2377, %v2372, %v2139
        %v2406 = vsel %vm2377, %v2373, %v2141
        %v2407 = vsel %vm2377, %v2374, %v2143
        %v2408 = vsel %vm2377, %v2375, %v2145
        %v2409 = vsel %vm2377, %v2376, %v2147
        %v2410 = vld [vmem:[%s1] sm:$0xff]
        %v2411 = vld [vmem:[%s1 + $0x8] sm:$0xff]
        %v2412 = vld [vmem:[%s1 + $0x10] sm:$0xff]
        %v2413 = vld [vmem:[%s1 + $0x18] sm:$0xff]
        %v2414 = vld [vmem:[%s1 + $0x20] sm:$0xff]
        %v2415 = vld [vmem:[%s1 + $0x28] sm:$0xff]
        %v2416 = vld [vmem:[%s1 + $0x30] sm:$0xff]
        %v2417 = vld [vmem:[%s1 + $0x38] sm:$0xff]
        %v2418 = vld [vmem:[%s1 + $0x40] sm:$0xff]
        %v2419 = vld [vmem:[%s1 + $0x48] sm:$0xff]
        %v2420 = vld [vmem:[%s1 + $0x50] sm:$0xff]
        %v2421 = vld [vmem:[%s1 + $0x58] sm:$0xff]
        %v2422 = vld [vmem:[%s1 + $0x60] sm:$0xff]
        %v2423 = vld [vmem:[%s1 + $0x68] sm:$0xff]
        %v2424 = vld [vmem:[%s1 + $0x70] sm:$0xff]
        %v2425 = vld [vmem:[%s1 + $0x78] sm:$0xff]
        %v2426 = vld [vmem:[%s1 + $0x80] sm:$0xff]
        %v2427 = vld [vmem:[%s1 + $0x88] sm:$0xff]
        %v2428 = vld [vmem:[%s2] sm:$0x1]
        %v2430 = vperm.slane %v2428, 0
        %v2433 = vsel %vm874, %v1252, 0
        %v2436 = vsel %vm874, %v1253, 0
        %v2439 = vsel %vm874, %v1254, 0
        %v2442 = vsel %vm874, %v1255, 0
        %v2445 = vsel %vm874, %v1256, 0
        %v2448 = vsel %vm874, %v1257, 0
        %v2451 = vsel %vm874, %v1258, 0
        %v2454 = vsel %vm874, %v1259, 0
        %v2457 = vsel %vm874, %v1260, 0
        %v2460 = vsel %vm874, %v1261, 0
        %v2463 = vsel %vm874, %v1262, 0
        %v2466 = vsel %vm874, %v1263, 0
        %v2469 = vsel %vm874, %v1264, 0
        %v2472 = vsel %vm874, %v1265, 0
        %v2475 = vsel %vm874, %v1266, 0
        %v2478 = vsel %vm874, %v1267, 0
        %v2481 = vsel %vm874, %v1268, 0
        %v2484 = vsel %vm874, %v1269, 0
        %v2487 = vsel %vm874, %v1270, 0
        %v2490 = vsel %vm874, %v1271, 0
        %v2493 = vsel %vm874, %v1272, 0
        %v2496 = vsel %vm874, %v1273, 0
        %v2499 = vsel %vm874, %v1274, 0
        %v2502 = vsel %vm874, %v1275, 0
        %v2505 = vsel %vm874, %v1276, 0
        %v2508 = vsel %vm874, %v1277, 0
        %v2511 = vsel %vm874, %v1278, 0
        %v2514 = vsel %vm874, %v1279, 0
        %v2517 = vsel %vm874, %v1280, 0
        %v2520 = vsel %vm874, %v1281, 0
        %v2523 = vsel %vm874, %v1282, 0
        %v2526 = vsel %vm874, %v1283, 0
        %2528 = vmatpush.msra.mxu0 %v2425
        %2529 = vmatpush.msra.mxu0 %v2424
        %2530 = vmatpush.msra.mxu0 %v2423
        %2531 = vmatpush.msra.mxu0 %v2422
        %2532 = vmatpush.msra.mxu0 %v2421
        %2533 = vmatpush.msra.mxu0 %v2420
        %2534 = vmatpush.msra.mxu0 %v2419
        %2535 = vmatpush.msra.mxu0 %v2418
        %2536 = vmatpush.msra.mxu0 %v2417
        %2537 = vmatpush.msra.mxu0 %v2416
        %2538 = vmatpush.msra.mxu0 %v2415
        %2539 = vmatpush.msra.mxu0 %v2414
        %2540 = vmatpush.msra.mxu0 %v2413
        %2541 = vmatpush.msra.mxu0 %v2412
        %2542 = vmatpush.msra.mxu0 %v2411
        %2543 = vmatpush.msra.mxu0 %v2410
        %2544 = vmatmul.f32.gmra.mxu0 %v2378
        %v2545 = vpop.f32.mrf.mxu0
        %v2546 = vadd.f32 %v2430, %v2545
        %2547 = vmatmul.f32.gmra.mxu0 %v2379
        %v2548 = vpop.f32.mrf.mxu0
        %v2549 = vadd.f32 %v2430, %v2548
        %2550 = vmatmul.f32.gmra.mxu0 %v2380
        %v2551 = vpop.f32.mrf.mxu0
        %v2552 = vadd.f32 %v2430, %v2551
        %2553 = vmatmul.f32.gmra.mxu0 %v2381
        %v2554 = vpop.f32.mrf.mxu0
        %v2555 = vadd.f32 %v2430, %v2554
        %2556 = vmatmul.f32.gmra.mxu0 %v2382
        %v2557 = vpop.f32.mrf.mxu0
        %v2558 = vadd.f32 %v2430, %v2557
        %2559 = vmatmul.f32.gmra.mxu0 %v2383
        %v2560 = vpop.f32.mrf.mxu0
        %v2561 = vadd.f32 %v2430, %v2560
        %2562 = vmatmul.f32.gmra.mxu0 %v2384
        %v2563 = vpop.f32.mrf.mxu0
        %v2564 = vadd.f32 %v2430, %v2563
        %2565 = vmatmul.f32.gmra.mxu0 %v2385
        %v2566 = vpop.f32.mrf.mxu0
        %v2567 = vadd.f32 %v2430, %v2566
        %2568 = vmatmul.f32.gmra.mxu0 %v2386
        %v2569 = vpop.f32.mrf.mxu0
        %v2570 = vadd.f32 %v2430, %v2569
        %2571 = vmatmul.f32.gmra.mxu0 %v2387
        %v2572 = vpop.f32.mrf.mxu0
        %v2573 = vadd.f32 %v2430, %v2572
        %2574 = vmatmul.f32.gmra.mxu0 %v2388
        %v2575 = vpop.f32.mrf.mxu0
        %v2576 = vadd.f32 %v2430, %v2575
        %2577 = vmatmul.f32.gmra.mxu0 %v2389
        %v2578 = vpop.f32.mrf.mxu0
        %v2579 = vadd.f32 %v2430, %v2578
        %2580 = vmatmul.f32.gmra.mxu0 %v2390
        %v2581 = vpop.f32.mrf.mxu0
        %v2582 = vadd.f32 %v2430, %v2581
        %2583 = vmatmul.f32.gmra.mxu0 %v2391
        %v2584 = vpop.f32.mrf.mxu0
        %v2585 = vadd.f32 %v2430, %v2584
        %2586 = vmatmul.f32.gmra.mxu0 %v2392
        %v2587 = vpop.f32.mrf.mxu0
        %v2588 = vadd.f32 %v2430, %v2587
        %2589 = vmatmul.f32.gmra.mxu0 %v2393
        %v2590 = vpop.f32.mrf.mxu0
        %v2591 = vadd.f32 %v2430, %v2590
        %2592 = vmatmul.f32.gmra.mxu0 %v2394
        %v2593 = vpop.f32.mrf.mxu0
        %v2594 = vadd.f32 %v2430, %v2593
        %2595 = vmatmul.f32.gmra.mxu0 %v2395
        %v2596 = vpop.f32.mrf.mxu0
        %v2597 = vadd.f32 %v2430, %v2596
        %2598 = vmatmul.f32.gmra.mxu0 %v2396
        %v2599 = vpop.f32.mrf.mxu0
        %v2600 = vadd.f32 %v2430, %v2599
        %2601 = vmatmul.f32.gmra.mxu0 %v2397
        %v2602 = vpop.f32.mrf.mxu0
        %v2603 = vadd.f32 %v2430, %v2602
        %2604 = vmatmul.f32.gmra.mxu0 %v2398
        %v2605 = vpop.f32.mrf.mxu0
        %v2606 = vadd.f32 %v2430, %v2605
        %2607 = vmatmul.f32.gmra.mxu0 %v2399
        %v2608 = vpop.f32.mrf.mxu0
        %v2609 = vadd.f32 %v2430, %v2608
        %2610 = vmatmul.f32.gmra.mxu0 %v2400
        %v2611 = vpop.f32.mrf.mxu0
        %v2612 = vadd.f32 %v2430, %v2611
        %2613 = vmatmul.f32.gmra.mxu0 %v2401
        %v2614 = vpop.f32.mrf.mxu0
        %v2615 = vadd.f32 %v2430, %v2614
        %2616 = vmatmul.f32.gmra.mxu0 %v2402
        %v2617 = vpop.f32.mrf.mxu0
        %v2618 = vadd.f32 %v2430, %v2617
        %2619 = vmatmul.f32.gmra.mxu0 %v2403
        %v2620 = vpop.f32.mrf.mxu0
        %v2621 = vadd.f32 %v2430, %v2620
        %2622 = vmatmul.f32.gmra.mxu0 %v2404
        %v2623 = vpop.f32.mrf.mxu0
        %v2624 = vadd.f32 %v2430, %v2623
        %2625 = vmatmul.f32.gmra.mxu0 %v2405
        %v2626 = vpop.f32.mrf.mxu0
        %v2627 = vadd.f32 %v2430, %v2626
        %2628 = vmatmul.f32.gmra.mxu0 %v2406
        %v2629 = vpop.f32.mrf.mxu0
        %v2630 = vadd.f32 %v2430, %v2629
        %2631 = vmatmul.f32.gmra.mxu0 %v2407
        %v2632 = vpop.f32.mrf.mxu0
        %v2633 = vadd.f32 %v2430, %v2632
        %2634 = vmatmul.f32.gmra.mxu0 %v2408
        %v2635 = vpop.f32.mrf.mxu0
        %v2636 = vadd.f32 %v2430, %v2635
        %2637 = vmatmul.f32.gmra.mxu0 %v2409
        %v2638 = vpop.f32.mrf.mxu0
        %v2639 = vadd.f32 %v2430, %v2638
        %2640 = vdwg.mxu0
        %2641 = vmatpush.msra.mxu0 0.0
        %2642 = vmatpush.msra.mxu0 0.0
        %2643 = vmatpush.msra.mxu0 0.0
        %2644 = vmatpush.msra.mxu0 0.0
        %2645 = vmatpush.msra.mxu0 0.0
        %2646 = vmatpush.msra.mxu0 0.0
        %2647 = vmatpush.msra.mxu0 0.0
        %2648 = vmatpush.msra.mxu0 0.0
        %2649 = vmatpush.msra.mxu0 0.0
        %2650 = vmatpush.msra.mxu0 0.0
        %2651 = vmatpush.msra.mxu0 0.0
        %2652 = vmatpush.msra.mxu0 0.0
        %2653 = vmatpush.msra.mxu0 0.0
        %2654 = vmatpush.msra.mxu0 0.0
        %2655 = vmatpush.msra.mxu0 %v2427
        %2656 = vmatpush.msra.mxu0 %v2426
        %2657 = vmatmul.f32.gmra.mxu0 %v2433
        %v2658 = vpop.f32.mrf.mxu0
        %v2659 = vadd.f32 %v2546, %v2658
        %2660 = vmatmul.f32.gmra.mxu0 %v2436
        %v2661 = vpop.f32.mrf.mxu0
        %v2662 = vadd.f32 %v2549, %v2661
        %2663 = vmatmul.f32.gmra.mxu0 %v2439
        %v2664 = vpop.f32.mrf.mxu0
        %v2665 = vadd.f32 %v2552, %v2664
        %2666 = vmatmul.f32.gmra.mxu0 %v2442
        %v2667 = vpop.f32.mrf.mxu0
        %v2668 = vadd.f32 %v2555, %v2667
        %2669 = vmatmul.f32.gmra.mxu0 %v2445
        %v2670 = vpop.f32.mrf.mxu0
        %v2671 = vadd.f32 %v2558, %v2670
        %2672 = vmatmul.f32.gmra.mxu0 %v2448
        %v2673 = vpop.f32.mrf.mxu0
        %v2674 = vadd.f32 %v2561, %v2673
        %2675 = vmatmul.f32.gmra.mxu0 %v2451
        %v2676 = vpop.f32.mrf.mxu0
        %v2677 = vadd.f32 %v2564, %v2676
        %2678 = vmatmul.f32.gmra.mxu0 %v2454
        %v2679 = vpop.f32.mrf.mxu0
        %v2680 = vadd.f32 %v2567, %v2679
        %2681 = vmatmul.f32.gmra.mxu0 %v2457
        %v2682 = vpop.f32.mrf.mxu0
        %v2683 = vadd.f32 %v2570, %v2682
        %2684 = vmatmul.f32.gmra.mxu0 %v2460
        %v2685 = vpop.f32.mrf.mxu0
        %v2686 = vadd.f32 %v2573, %v2685
        %2687 = vmatmul.f32.gmra.mxu0 %v2463
        %v2688 = vpop.f32.mrf.mxu0
        %v2689 = vadd.f32 %v2576, %v2688
        %2690 = vmatmul.f32.gmra.mxu0 %v2466
        %v2691 = vpop.f32.mrf.mxu0
        %v2692 = vadd.f32 %v2579, %v2691
        %2693 = vmatmul.f32.gmra.mxu0 %v2469
        %v2694 = vpop.f32.mrf.mxu0
        %v2695 = vadd.f32 %v2582, %v2694
        %2696 = vmatmul.f32.gmra.mxu0 %v2472
        %v2697 = vpop.f32.mrf.mxu0
        %v2698 = vadd.f32 %v2585, %v2697
        %2699 = vmatmul.f32.gmra.mxu0 %v2475
        %v2700 = vpop.f32.mrf.mxu0
        %v2701 = vadd.f32 %v2588, %v2700
        %2702 = vmatmul.f32.gmra.mxu0 %v2478
        %v2703 = vpop.f32.mrf.mxu0
        %v2704 = vadd.f32 %v2591, %v2703
        %2705 = vmatmul.f32.gmra.mxu0 %v2481
        %v2706 = vpop.f32.mrf.mxu0
        %v2707 = vadd.f32 %v2594, %v2706
        %2708 = vmatmul.f32.gmra.mxu0 %v2484
        %v2709 = vpop.f32.mrf.mxu0
        %v2710 = vadd.f32 %v2597, %v2709
        %2711 = vmatmul.f32.gmra.mxu0 %v2487
        %v2712 = vpop.f32.mrf.mxu0
        %v2713 = vadd.f32 %v2600, %v2712
        %2714 = vmatmul.f32.gmra.mxu0 %v2490
        %v2715 = vpop.f32.mrf.mxu0
        %v2716 = vadd.f32 %v2603, %v2715
        %2717 = vmatmul.f32.gmra.mxu0 %v2493
        %v2718 = vpop.f32.mrf.mxu0
        %v2719 = vadd.f32 %v2606, %v2718
        %2720 = vmatmul.f32.gmra.mxu0 %v2496
        %v2721 = vpop.f32.mrf.mxu0
        %v2722 = vadd.f32 %v2609, %v2721
        %2723 = vmatmul.f32.gmra.mxu0 %v2499
        %v2724 = vpop.f32.mrf.mxu0
        %v2725 = vadd.f32 %v2612, %v2724
        %2726 = vmatmul.f32.gmra.mxu0 %v2502
        %v2727 = vpop.f32.mrf.mxu0
        %v2728 = vadd.f32 %v2615, %v2727
        %2729 = vmatmul.f32.gmra.mxu0 %v2505
        %v2730 = vpop.f32.mrf.mxu0
        %v2731 = vadd.f32 %v2618, %v2730
        %2732 = vmatmul.f32.gmra.mxu0 %v2508
        %v2733 = vpop.f32.mrf.mxu0
        %v2734 = vadd.f32 %v2621, %v2733
        %2735 = vmatmul.f32.gmra.mxu0 %v2511
        %v2736 = vpop.f32.mrf.mxu0
        %v2737 = vadd.f32 %v2624, %v2736
        %2738 = vmatmul.f32.gmra.mxu0 %v2514
        %v2739 = vpop.f32.mrf.mxu0
        %v2740 = vadd.f32 %v2627, %v2739
        %2741 = vmatmul.f32.gmra.mxu0 %v2517
        %v2742 = vpop.f32.mrf.mxu0
        %v2743 = vadd.f32 %v2630, %v2742
        %2744 = vmatmul.f32.gmra.mxu0 %v2520
        %v2745 = vpop.f32.mrf.mxu0
        %v2746 = vadd.f32 %v2633, %v2745
        %2747 = vmatmul.f32.gmra.mxu0 %v2523
        %v2748 = vpop.f32.mrf.mxu0
        %v2749 = vadd.f32 %v2636, %v2748
        %2750 = vmatmul.f32.gmra.mxu0 %v2526
        %v2751 = vpop.f32.mrf.mxu0
        %v2752 = vadd.f32 %v2639, %v2751
        %2753 = vdwg.mxu0
        %v2754 = vmax.f32 %v2659, 0.0
        %v2755 = vmax.f32 %v2662, 0.0
        %v2756 = vmax.f32 %v2665, 0.0
        %v2757 = vmax.f32 %v2668, 0.0
        %v2758 = vmax.f32 %v2671, 0.0
        %v2759 = vmax.f32 %v2674, 0.0
        %v2760 = vmax.f32 %v2677, 0.0
        %v2761 = vmax.f32 %v2680, 0.0
        %v2762 = vmax.f32 %v2683, 0.0
        %v2763 = vmax.f32 %v2686, 0.0
        %v2764 = vmax.f32 %v2689, 0.0
        %v2765 = vmax.f32 %v2692, 0.0
        %v2766 = vmax.f32 %v2695, 0.0
        %v2767 = vmax.f32 %v2698, 0.0
        %v2768 = vmax.f32 %v2701, 0.0
        %v2769 = vmax.f32 %v2704, 0.0
        %v2770 = vmax.f32 %v2707, 0.0
        %v2771 = vmax.f32 %v2710, 0.0
        %v2772 = vmax.f32 %v2713, 0.0
        %v2773 = vmax.f32 %v2716, 0.0
        %v2774 = vmax.f32 %v2719, 0.0
        %v2775 = vmax.f32 %v2722, 0.0
        %v2776 = vmax.f32 %v2725, 0.0
        %v2777 = vmax.f32 %v2728, 0.0
        %v2778 = vmax.f32 %v2731, 0.0
        %v2779 = vmax.f32 %v2734, 0.0
        %v2780 = vmax.f32 %v2737, 0.0
        %v2781 = vmax.f32 %v2740, 0.0
        %v2782 = vmax.f32 %v2743, 0.0
        %v2783 = vmax.f32 %v2746, 0.0
        %v2784 = vmax.f32 %v2749, 0.0
        %v2785 = vmax.f32 %v2752, 0.0
        %v2786 = vld [vmem:[%s760] sm:$0xff]
        %v2787 = vld [vmem:[%s760 + $0x8] sm:$0xff]
        %v2788 = vld [vmem:[%s760 + $0x10] sm:$0xff]
        %v2789 = vld [vmem:[%s760 + $0x18] sm:$0xff]
        %v2790 = vld [vmem:[%s760 + $0x20] sm:$0xff]
        %v2791 = vld [vmem:[%s760 + $0x28] sm:$0xff]
        %v2792 = vld [vmem:[%s760 + $0x30] sm:$0xff]
        %v2793 = vld [vmem:[%s760 + $0x38] sm:$0xff]
        %v2794 = vld [vmem:[%s760 + $0x40] sm:$0xff]
        %v2795 = vld [vmem:[%s760 + $0x48] sm:$0xff]
        %v2796 = vld [vmem:[%s760 + $0x50] sm:$0xff]
        %v2797 = vld [vmem:[%s760 + $0x58] sm:$0xff]
        %v2798 = vld [vmem:[%s760 + $0x60] sm:$0xff]
        %v2799 = vld [vmem:[%s760 + $0x68] sm:$0xff]
        %v2800 = vld [vmem:[%s760 + $0x70] sm:$0xff]
        %v2801 = vld [vmem:[%s760 + $0x78] sm:$0xff]
        %v2802 = vld [vmem:[%s760 + $0x80] sm:$0xff]
        %v2803 = vld [vmem:[%s760 + $0x88] sm:$0xff]
        %v2804 = vld [vmem:[%s760 + $0x90] sm:$0xff]
        %v2805 = vld [vmem:[%s760 + $0x98] sm:$0xff]
        %v2806 = vld [vmem:[%s760 + $0xa0] sm:$0xff]
        %v2807 = vld [vmem:[%s760 + $0xa8] sm:$0xff]
        %v2808 = vld [vmem:[%s760 + $0xb0] sm:$0xff]
        %v2809 = vld [vmem:[%s760 + $0xb8] sm:$0xff]
        %v2810 = vld [vmem:[%s760 + $0xc0] sm:$0xff]
        %v2811 = vld [vmem:[%s760 + $0xc8] sm:$0xff]
        %v2812 = vld [vmem:[%s760 + $0xd0] sm:$0xff]
        %v2813 = vld [vmem:[%s760 + $0xd8] sm:$0xff]
        %v2814 = vld [vmem:[%s760 + $0xe0] sm:$0xff]
        %v2815 = vld [vmem:[%s760 + $0xe8] sm:$0xff]
        %v2816 = vld [vmem:[%s760 + $0xf0] sm:$0xff]
        %v2817 = vld [vmem:[%s760 + $0xf8] sm:$0xff]
        %v2818 = vld [vmem:[%s3] sm:$0xff]
        %v2819 = vld [vmem:[%s3 + $0x8] sm:$0xff]
        %v2820 = vld [vmem:[%s4] sm:$0x1]
        %v2822 = vperm.slane %v2820, 0
        %v2825 = vsel %vm874, %v2786, 0
        %v2828 = vsel %vm874, %v2787, 0
        %v2831 = vsel %vm874, %v2788, 0
        %v2834 = vsel %vm874, %v2789, 0
        %v2837 = vsel %vm874, %v2790, 0
        %v2840 = vsel %vm874, %v2791, 0
        %v2843 = vsel %vm874, %v2792, 0
        %v2846 = vsel %vm874, %v2793, 0
        %v2849 = vsel %vm874, %v2794, 0
        %v2852 = vsel %vm874, %v2795, 0
        %v2855 = vsel %vm874, %v2796, 0
        %v2858 = vsel %vm874, %v2797, 0
        %v2861 = vsel %vm874, %v2798, 0
        %v2864 = vsel %vm874, %v2799, 0
        %v2867 = vsel %vm874, %v2800, 0
        %v2870 = vsel %vm874, %v2801, 0
        %v2873 = vsel %vm874, %v2802, 0
        %v2876 = vsel %vm874, %v2803, 0
        %v2879 = vsel %vm874, %v2804, 0
        %v2882 = vsel %vm874, %v2805, 0
        %v2885 = vsel %vm874, %v2806, 0
        %v2888 = vsel %vm874, %v2807, 0
        %v2891 = vsel %vm874, %v2808, 0
        %v2894 = vsel %vm874, %v2809, 0
        %v2897 = vsel %vm874, %v2810, 0
        %v2900 = vsel %vm874, %v2811, 0
        %v2903 = vsel %vm874, %v2812, 0
        %v2906 = vsel %vm874, %v2813, 0
        %v2909 = vsel %vm874, %v2814, 0
        %v2912 = vsel %vm874, %v2815, 0
        %v2915 = vsel %vm874, %v2816, 0
        %v2918 = vsel %vm874, %v2817, 0
        %2920 = vmatpush.msra.mxu0 0.0
        %2921 = vmatpush.msra.mxu0 0.0
        %2922 = vmatpush.msra.mxu0 0.0
        %2923 = vmatpush.msra.mxu0 0.0
        %2924 = vmatpush.msra.mxu0 0.0
        %2925 = vmatpush.msra.mxu0 0.0
        %2926 = vmatpush.msra.mxu0 0.0
        %2927 = vmatpush.msra.mxu0 0.0
        %2928 = vmatpush.msra.mxu0 0.0
        %2929 = vmatpush.msra.mxu0 0.0
        %2930 = vmatpush.msra.mxu0 0.0
        %2931 = vmatpush.msra.mxu0 0.0
        %2932 = vmatpush.msra.mxu0 0.0
        %2933 = vmatpush.msra.mxu0 0.0
        %2934 = vmatpush.msra.mxu0 %v2819
        %2935 = vmatpush.msra.mxu0 %v2818
        %2936 = vmatmul.f32.gmra.mxu0 %v2825
        %v2937 = vpop.f32.mrf.mxu0
        %v2938 = vadd.f32 %v2822, %v2937
        %2939 = vmatmul.f32.gmra.mxu0 %v2828
        %v2940 = vpop.f32.mrf.mxu0
        %v2941 = vadd.f32 %v2822, %v2940
        %2942 = vmatmul.f32.gmra.mxu0 %v2831
        %v2943 = vpop.f32.mrf.mxu0
        %v2944 = vadd.f32 %v2822, %v2943
        %2945 = vmatmul.f32.gmra.mxu0 %v2834
        %v2946 = vpop.f32.mrf.mxu0
        %v2947 = vadd.f32 %v2822, %v2946
        %2948 = vmatmul.f32.gmra.mxu0 %v2837
        %v2949 = vpop.f32.mrf.mxu0
        %v2950 = vadd.f32 %v2822, %v2949
        %2951 = vmatmul.f32.gmra.mxu0 %v2840
        %v2952 = vpop.f32.mrf.mxu0
        %v2953 = vadd.f32 %v2822, %v2952
        %2954 = vmatmul.f32.gmra.mxu0 %v2843
        %v2955 = vpop.f32.mrf.mxu0
        %v2956 = vadd.f32 %v2822, %v2955
        %2957 = vmatmul.f32.gmra.mxu0 %v2846
        %v2958 = vpop.f32.mrf.mxu0
        %v2959 = vadd.f32 %v2822, %v2958
        %2960 = vmatmul.f32.gmra.mxu0 %v2849
        %v2961 = vpop.f32.mrf.mxu0
        %v2962 = vadd.f32 %v2822, %v2961
        %2963 = vmatmul.f32.gmra.mxu0 %v2852
        %v2964 = vpop.f32.mrf.mxu0
        %v2965 = vadd.f32 %v2822, %v2964
        %2966 = vmatmul.f32.gmra.mxu0 %v2855
        %v2967 = vpop.f32.mrf.mxu0
        %v2968 = vadd.f32 %v2822, %v2967
        %2969 = vmatmul.f32.gmra.mxu0 %v2858
        %v2970 = vpop.f32.mrf.mxu0
        %v2971 = vadd.f32 %v2822, %v2970
        %2972 = vmatmul.f32.gmra.mxu0 %v2861
        %v2973 = vpop.f32.mrf.mxu0
        %v2974 = vadd.f32 %v2822, %v2973
        %2975 = vmatmul.f32.gmra.mxu0 %v2864
        %v2976 = vpop.f32.mrf.mxu0
        %v2977 = vadd.f32 %v2822, %v2976
        %2978 = vmatmul.f32.gmra.mxu0 %v2867
        %v2979 = vpop.f32.mrf.mxu0
        %v2980 = vadd.f32 %v2822, %v2979
        %2981 = vmatmul.f32.gmra.mxu0 %v2870
        %v2982 = vpop.f32.mrf.mxu0
        %v2983 = vadd.f32 %v2822, %v2982
        %2984 = vmatmul.f32.gmra.mxu0 %v2873
        %v2985 = vpop.f32.mrf.mxu0
        %v2986 = vadd.f32 %v2822, %v2985
        %2987 = vmatmul.f32.gmra.mxu0 %v2876
        %v2988 = vpop.f32.mrf.mxu0
        %v2989 = vadd.f32 %v2822, %v2988
        %2990 = vmatmul.f32.gmra.mxu0 %v2879
        %v2991 = vpop.f32.mrf.mxu0
        %v2992 = vadd.f32 %v2822, %v2991
        %2993 = vmatmul.f32.gmra.mxu0 %v2882
        %v2994 = vpop.f32.mrf.mxu0
        %v2995 = vadd.f32 %v2822, %v2994
        %2996 = vmatmul.f32.gmra.mxu0 %v2885
        %v2997 = vpop.f32.mrf.mxu0
        %v2998 = vadd.f32 %v2822, %v2997
        %2999 = vmatmul.f32.gmra.mxu0 %v2888
        %v3000 = vpop.f32.mrf.mxu0
        %v3001 = vadd.f32 %v2822, %v3000
        %3002 = vmatmul.f32.gmra.mxu0 %v2891
        %v3003 = vpop.f32.mrf.mxu0
        %v3004 = vadd.f32 %v2822, %v3003
        %3005 = vmatmul.f32.gmra.mxu0 %v2894
        %v3006 = vpop.f32.mrf.mxu0
        %v3007 = vadd.f32 %v2822, %v3006
        %3008 = vmatmul.f32.gmra.mxu0 %v2897
        %v3009 = vpop.f32.mrf.mxu0
        %v3010 = vadd.f32 %v2822, %v3009
        %3011 = vmatmul.f32.gmra.mxu0 %v2900
        %v3012 = vpop.f32.mrf.mxu0
        %v3013 = vadd.f32 %v2822, %v3012
        %3014 = vmatmul.f32.gmra.mxu0 %v2903
        %v3015 = vpop.f32.mrf.mxu0
        %v3016 = vadd.f32 %v2822, %v3015
        %3017 = vmatmul.f32.gmra.mxu0 %v2906
        %v3018 = vpop.f32.mrf.mxu0
        %v3019 = vadd.f32 %v2822, %v3018
        %3020 = vmatmul.f32.gmra.mxu0 %v2909
        %v3021 = vpop.f32.mrf.mxu0
        %v3022 = vadd.f32 %v2822, %v3021
        %3023 = vmatmul.f32.gmra.mxu0 %v2912
        %v3024 = vpop.f32.mrf.mxu0
        %v3025 = vadd.f32 %v2822, %v3024
        %3026 = vmatmul.f32.gmra.mxu0 %v2915
        %v3027 = vpop.f32.mrf.mxu0
        %v3028 = vadd.f32 %v2822, %v3027
        %3029 = vmatmul.f32.gmra.mxu0 %v2918
        %v3030 = vpop.f32.mrf.mxu0
        %v3031 = vadd.f32 %v2822, %v3030
        %3032 = vdwg.mxu0
        %v3033 = vmax.f32 %v2938, 0.0
        %v3034 = vmax.f32 %v2941, 0.0
        %v3035 = vmax.f32 %v2944, 0.0
        %v3036 = vmax.f32 %v2947, 0.0
        %v3037 = vmax.f32 %v2950, 0.0
        %v3038 = vmax.f32 %v2953, 0.0
        %v3039 = vmax.f32 %v2956, 0.0
        %v3040 = vmax.f32 %v2959, 0.0
        %v3041 = vmax.f32 %v2962, 0.0
        %v3042 = vmax.f32 %v2965, 0.0
        %v3043 = vmax.f32 %v2968, 0.0
        %v3044 = vmax.f32 %v2971, 0.0
        %v3045 = vmax.f32 %v2974, 0.0
        %v3046 = vmax.f32 %v2977, 0.0
        %v3047 = vmax.f32 %v2980, 0.0
        %v3048 = vmax.f32 %v2983, 0.0
        %v3049 = vmax.f32 %v2986, 0.0
        %v3050 = vmax.f32 %v2989, 0.0
        %v3051 = vmax.f32 %v2992, 0.0
        %v3052 = vmax.f32 %v2995, 0.0
        %v3053 = vmax.f32 %v2998, 0.0
        %v3054 = vmax.f32 %v3001, 0.0
        %v3055 = vmax.f32 %v3004, 0.0
        %v3056 = vmax.f32 %v3007, 0.0
        %v3057 = vmax.f32 %v3010, 0.0
        %v3058 = vmax.f32 %v3013, 0.0
        %v3059 = vmax.f32 %v3016, 0.0
        %v3060 = vmax.f32 %v3019, 0.0
        %v3061 = vmax.f32 %v3022, 0.0
        %v3062 = vmax.f32 %v3025, 0.0
        %v3063 = vmax.f32 %v3028, 0.0
        %v3064 = vmax.f32 %v3031, 0.0
        %v3065 = vld [vmem:[%s5] sm:$0xff]
        %v3066 = vld [vmem:[%s5 + $0x8] sm:$0xff]
        %v3067 = vld [vmem:[%s6] sm:$0xff]
        %3069 = vset.pattern.permute.xlu0 0
        %3070 = vperm.xlu0 %3069, %v3067
        %v3071 = vpop.permute.xlu0 %3070
        %3073 = vxpose.xlu0.b32.start [1/16] %v3065, 128
        %3074 = vxpose.xlu0.b32.cont [2/16] %v3066, 128
        %3075 = vxpose.xlu0.b32.cont [3/16] 0.0, 128
        %3076 = vxpose.xlu0.b32.cont [4/16] 0.0, 128
        %3077 = vxpose.xlu0.b32.cont [5/16] 0.0, 128
        %3078 = vxpose.xlu0.b32.cont [6/16] 0.0, 128
        %3079 = vxpose.xlu0.b32.cont [7/16] 0.0, 128
        %3080 = vxpose.xlu0.b32.cont [8/16] 0.0, 128
        %3081 = vxpose.xlu0.b32.cont [9/16] 0.0, 128
        %3082 = vxpose.xlu0.b32.cont [10/16] 0.0, 128
        %3083 = vxpose.xlu0.b32.cont [11/16] 0.0, 128
        %3084 = vxpose.xlu0.b32.cont [12/16] 0.0, 128
        %3085 = vxpose.xlu0.b32.cont [13/16] 0.0, 128
        %3086 = vxpose.xlu0.b32.cont [14/16] 0.0, 128
        %3087 = vxpose.xlu0.b32.cont [15/16] 0.0, 128
        %3088 = vxpose.xlu0.b32.end [16/16] 0.0, 128
        %v3089 = vpop.trf.xlu0
        %v3090 = vpop.trf.xlu0
        %v3091 = vpop.trf.xlu0
        %v3092 = vpop.trf.xlu0
        %v3093 = vpop.trf.xlu0
        %v3094 = vpop.trf.xlu0
        %v3095 = vpop.trf.xlu0
        %v3096 = vpop.trf.xlu0
        %v3097 = vpop.trf.xlu0
        %v3098 = vpop.trf.xlu0
        %v3099 = vpop.trf.xlu0
        %v3100 = vpop.trf.xlu0
        %v3101 = vpop.trf.xlu0
        %v3102 = vpop.trf.xlu0
        %v3103 = vpop.trf.xlu0
        %v3104 = vpop.trf.xlu0
        %v3106 = vsel %vm874, %v3089, 0
        %v3109 = vsel %vm874, %v3033, 0
        %v3112 = vsel %vm874, %v3034, 0
        %v3115 = vsel %vm874, %v3035, 0
        %v3118 = vsel %vm874, %v3036, 0
        %v3121 = vsel %vm874, %v3037, 0
        %v3124 = vsel %vm874, %v3038, 0
        %v3127 = vsel %vm874, %v3039, 0
        %v3130 = vsel %vm874, %v3040, 0
        %v3133 = vsel %vm874, %v3041, 0
        %v3136 = vsel %vm874, %v3042, 0
        %v3139 = vsel %vm874, %v3043, 0
        %v3142 = vsel %vm874, %v3044, 0
        %v3145 = vsel %vm874, %v3045, 0
        %v3148 = vsel %vm874, %v3046, 0
        %v3151 = vsel %vm874, %v3047, 0
        %v3154 = vsel %vm874, %v3048, 0
        %v3157 = vsel %vm874, %v3049, 0
        %v3160 = vsel %vm874, %v3050, 0
        %v3163 = vsel %vm874, %v3051, 0
        %v3166 = vsel %vm874, %v3052, 0
        %v3169 = vsel %vm874, %v3053, 0
        %v3172 = vsel %vm874, %v3054, 0
        %v3175 = vsel %vm874, %v3055, 0
        %v3178 = vsel %vm874, %v3056, 0
        %v3181 = vsel %vm874, %v3057, 0
        %v3184 = vsel %vm874, %v3058, 0
        %v3187 = vsel %vm874, %v3059, 0
        %v3190 = vsel %vm874, %v3060, 0
        %v3193 = vsel %vm874, %v3061, 0
        %v3196 = vsel %vm874, %v3062, 0
        %v3199 = vsel %vm874, %v3063, 0
        %v3202 = vsel %vm874, %v3064, 0
        %3204 = vmatpush.xpose.msra.mxu0 %v3154
        %3205 = vmatpush.xpose.msra.mxu0 %v3151
        %3206 = vmatpush.xpose.msra.mxu0 %v3148
        %3207 = vmatpush.xpose.msra.mxu0 %v3145
        %3208 = vmatpush.xpose.msra.mxu0 %v3142
        %3209 = vmatpush.xpose.msra.mxu0 %v3139
        %3210 = vmatpush.xpose.msra.mxu0 %v3136
        %3211 = vmatpush.xpose.msra.mxu0 %v3133
        %3212 = vmatpush.xpose.msra.mxu0 %v3130
        %3213 = vmatpush.xpose.msra.mxu0 %v3127
        %3214 = vmatpush.xpose.msra.mxu0 %v3124
        %3215 = vmatpush.xpose.msra.mxu0 %v3121
        %3216 = vmatpush.xpose.msra.mxu0 %v3118
        %3217 = vmatpush.xpose.msra.mxu0 %v3115
        %3218 = vmatpush.xpose.msra.mxu0 %v3112
        %3219 = vmatpush.xpose.msra.mxu0 %v3109
        %3220 = vmatmul.f32.gmra.mxu0 %v3106
        %v3221 = vpop.f32.mrf.mxu0
        %v3222 = vadd.f32 %v3071, %v3221
        %3223 = vdwg.mxu0
        %3224 = vmatpush.xpose.msra.mxu0 %v3202
        %3225 = vmatpush.xpose.msra.mxu0 %v3199
        %3226 = vmatpush.xpose.msra.mxu0 %v3196
        %3227 = vmatpush.xpose.msra.mxu0 %v3193
        %3228 = vmatpush.xpose.msra.mxu0 %v3190
        %3229 = vmatpush.xpose.msra.mxu0 %v3187
        %3230 = vmatpush.xpose.msra.mxu0 %v3184
        %3231 = vmatpush.xpose.msra.mxu0 %v3181
        %3232 = vmatpush.xpose.msra.mxu0 %v3178
        %3233 = vmatpush.xpose.msra.mxu0 %v3175
        %3234 = vmatpush.xpose.msra.mxu0 %v3172
        %3235 = vmatpush.xpose.msra.mxu0 %v3169
        %3236 = vmatpush.xpose.msra.mxu0 %v3166
        %3237 = vmatpush.xpose.msra.mxu0 %v3163
        %3238 = vmatpush.xpose.msra.mxu0 %v3160
        %3239 = vmatpush.xpose.msra.mxu0 %v3157
        %3240 = vmatmul.f32.gmra.mxu0 %v3106
        %v3241 = vpop.f32.mrf.mxu0
        %v3242 = vadd.f32 %v3071, %v3241
        %3243 = vdwg.mxu0
        %v3244 = vmax.f32 %v3222, %v3242
        %3245 = vmax.xlane.f32.xlu0 %v3244
        %v3246 = vpop.xlane.xlu0 %3245
        %v3247 = vsub.f32 %v3222, %v3246
        %v3248 = vsub.f32 %v3242, %v3246
        %v3249 = vmul.f32 %v3247, 1.442695
        %v3250 = vpow.pop %v3249
        %v3251 = vmul.f32 %v3248, 1.442695
        %v3252 = vpow.pop %v3251
        %v3253 = vadd.f32 %v3250, %v3252
        %3254 = vadd.xlane.f32.xlu0 %v3253
        %v3255 = vpop.xlane.xlu0 %3254
        %v3256 = vrcp.pop %v3255
        %v3257 = vmul.f32 %v3250, %v3256
        %v3258 = vmul.f32 %v3252, %v3256
        %3259 = vmatpush.msra.mxu0 %v2769
        %3260 = vmatpush.msra.mxu0 %v2768
        %3261 = vmatpush.msra.mxu0 %v2767
        %3262 = vmatpush.msra.mxu0 %v2766
        %3263 = vmatpush.msra.mxu0 %v2765
        %3264 = vmatpush.msra.mxu0 %v2764
        %3265 = vmatpush.msra.mxu0 %v2763
        %3266 = vmatpush.msra.mxu0 %v2762
        %3267 = vmatpush.msra.mxu0 %v2761
        %3268 = vmatpush.msra.mxu0 %v2760
        %3269 = vmatpush.msra.mxu0 %v2759
        %3270 = vmatpush.msra.mxu0 %v2758
        %3271 = vmatpush.msra.mxu0 %v2757
        %3272 = vmatpush.msra.mxu0 %v2756
        %3273 = vmatpush.msra.mxu0 %v2755
        %3274 = vmatpush.msra.mxu0 %v2754
        %3275 = vmatmul.f32.gmra.mxu0 %v3257
        %v3276 = vpop.f32.mrf.mxu0
        %v3277 = vadd.f32 0.0, %v3276
        %3278 = vdwg.mxu0
        %3279 = vmatpush.msra.mxu0 %v2785
        %3280 = vmatpush.msra.mxu0 %v2784
        %3281 = vmatpush.msra.mxu0 %v2783
        %3282 = vmatpush.msra.mxu0 %v2782
        %3283 = vmatpush.msra.mxu0 %v2781
        %3284 = vmatpush.msra.mxu0 %v2780
        %3285 = vmatpush.msra.mxu0 %v2779
        %3286 = vmatpush.msra.mxu0 %v2778
        %3287 = vmatpush.msra.mxu0 %v2777
        %3288 = vmatpush.msra.mxu0 %v2776
        %3289 = vmatpush.msra.mxu0 %v2775
        %3290 = vmatpush.msra.mxu0 %v2774
        %3291 = vmatpush.msra.mxu0 %v2773
        %3292 = vmatpush.msra.mxu0 %v2772
        %3293 = vmatpush.msra.mxu0 %v2771
        %3294 = vmatpush.msra.mxu0 %v2770
        %3295 = vmatmul.f32.gmra.mxu0 %v3258
        %v3296 = vpop.f32.mrf.mxu0
        %v3297 = vadd.f32 %v3277, %v3296
        %3298 = vdwg.mxu0
        %v3299 = vld [vmem:[%s9] sm:$0xff]
        %v3300 = vld [vmem:[%s9 + $0x8] sm:$0xff]
        %v3301 = vld [vmem:[%s9 + $0x10] sm:$0xff]
        %v3302 = vld [vmem:[%s9 + $0x18] sm:$0xff]
        %v3303 = vld [vmem:[%s10] sm:$0x1]
        %v3305 = vperm.slane %v3303, 0
        %v3308 = vsel %vm2212, %v2754, 0
        %v3311 = vsel %vm2212, %v2755, 0
        %v3314 = vsel %vm2212, %v2756, 0
        %v3317 = vsel %vm2212, %v2757, 0
        %v3320 = vsel %vm2212, %v2758, 0
        %v3323 = vsel %vm2212, %v2759, 0
        %v3326 = vsel %vm2212, %v2760, 0
        %v3329 = vsel %vm2212, %v2761, 0
        %v3332 = vsel %vm2212, %v2762, 0
        %v3335 = vsel %vm2212, %v2763, 0
        %v3338 = vsel %vm2212, %v2764, 0
        %v3341 = vsel %vm2212, %v2765, 0
        %v3344 = vsel %vm2212, %v2766, 0
        %v3347 = vsel %vm2212, %v2767, 0
        %v3350 = vsel %vm2212, %v2768, 0
        %v3353 = vsel %vm2212, %v2769, 0
        %v3356 = vsel %vm2212, %v2770, 0
        %v3359 = vsel %vm2212, %v2771, 0
        %v3362 = vsel %vm2212, %v2772, 0
        %v3365 = vsel %vm2212, %v2773, 0
        %v3368 = vsel %vm2212, %v2774, 0
        %v3371 = vsel %vm2212, %v2775, 0
        %v3374 = vsel %vm2212, %v2776, 0
        %v3377 = vsel %vm2212, %v2777, 0
        %v3380 = vsel %vm2212, %v2778, 0
        %v3383 = vsel %vm2212, %v2779, 0
        %v3386 = vsel %vm2212, %v2780, 0
        %v3389 = vsel %vm2212, %v2781, 0
        %v3392 = vsel %vm2212, %v2782, 0
        %v3395 = vsel %vm2212, %v2783, 0
        %v3398 = vsel %vm2212, %v2784, 0
        %v3401 = vsel %vm2212, %v2785, 0
        %3403 = vmatpush.msra.mxu0 0.0
        %3404 = vmatpush.msra.mxu0 0.0
        %3405 = vmatpush.msra.mxu0 0.0
        %3406 = vmatpush.msra.mxu0 0.0
        %3407 = vmatpush.msra.mxu0 0.0
        %3408 = vmatpush.msra.mxu0 0.0
        %3409 = vmatpush.msra.mxu0 0.0
        %3410 = vmatpush.msra.mxu0 0.0
        %3411 = vmatpush.msra.mxu0 0.0
        %3412 = vmatpush.msra.mxu0 0.0
        %3413 = vmatpush.msra.mxu0 0.0
        %3414 = vmatpush.msra.mxu0 0.0
        %3415 = vmatpush.msra.mxu0 %v3302
        %3416 = vmatpush.msra.mxu0 %v3301
        %3417 = vmatpush.msra.mxu0 %v3300
        %3418 = vmatpush.msra.mxu0 %v3299
        %3419 = vmatmul.f32.gmra.mxu0 %v3308
        %v3420 = vpop.f32.mrf.mxu0
        %v3421 = vadd.f32 %v3305, %v3420
        %3422 = vmatmul.f32.gmra.mxu0 %v3311
        %v3423 = vpop.f32.mrf.mxu0
        %v3424 = vadd.f32 %v3305, %v3423
        %3425 = vmatmul.f32.gmra.mxu0 %v3314
        %v3426 = vpop.f32.mrf.mxu0
        %v3427 = vadd.f32 %v3305, %v3426
        %3428 = vmatmul.f32.gmra.mxu0 %v3317
        %v3429 = vpop.f32.mrf.mxu0
        %v3430 = vadd.f32 %v3305, %v3429
        %3431 = vmatmul.f32.gmra.mxu0 %v3320
        %v3432 = vpop.f32.mrf.mxu0
        %v3433 = vadd.f32 %v3305, %v3432
        %3434 = vmatmul.f32.gmra.mxu0 %v3323
        %v3435 = vpop.f32.mrf.mxu0
        %v3436 = vadd.f32 %v3305, %v3435
        %3437 = vmatmul.f32.gmra.mxu0 %v3326
        %v3438 = vpop.f32.mrf.mxu0
        %v3439 = vadd.f32 %v3305, %v3438
        %3440 = vmatmul.f32.gmra.mxu0 %v3329
        %v3441 = vpop.f32.mrf.mxu0
        %v3442 = vadd.f32 %v3305, %v3441
        %3443 = vmatmul.f32.gmra.mxu0 %v3332
        %v3444 = vpop.f32.mrf.mxu0
        %v3445 = vadd.f32 %v3305, %v3444
        %3446 = vmatmul.f32.gmra.mxu0 %v3335
        %v3447 = vpop.f32.mrf.mxu0
        %v3448 = vadd.f32 %v3305, %v3447
        %3449 = vmatmul.f32.gmra.mxu0 %v3338
        %v3450 = vpop.f32.mrf.mxu0
        %v3451 = vadd.f32 %v3305, %v3450
        %3452 = vmatmul.f32.gmra.mxu0 %v3341
        %v3453 = vpop.f32.mrf.mxu0
        %v3454 = vadd.f32 %v3305, %v3453
        %3455 = vmatmul.f32.gmra.mxu0 %v3344
        %v3456 = vpop.f32.mrf.mxu0
        %v3457 = vadd.f32 %v3305, %v3456
        %3458 = vmatmul.f32.gmra.mxu0 %v3347
        %v3459 = vpop.f32.mrf.mxu0
        %v3460 = vadd.f32 %v3305, %v3459
        %3461 = vmatmul.f32.gmra.mxu0 %v3350
        %v3462 = vpop.f32.mrf.mxu0
        %v3463 = vadd.f32 %v3305, %v3462
        %3464 = vmatmul.f32.gmra.mxu0 %v3353
        %v3465 = vpop.f32.mrf.mxu0
        %v3466 = vadd.f32 %v3305, %v3465
        %3467 = vmatmul.f32.gmra.mxu0 %v3356
        %v3468 = vpop.f32.mrf.mxu0
        %v3469 = vadd.f32 %v3305, %v3468
        %3470 = vmatmul.f32.gmra.mxu0 %v3359
        %v3471 = vpop.f32.mrf.mxu0
        %v3472 = vadd.f32 %v3305, %v3471
        %3473 = vmatmul.f32.gmra.mxu0 %v3362
        %v3474 = vpop.f32.mrf.mxu0
        %v3475 = vadd.f32 %v3305, %v3474
        %3476 = vmatmul.f32.gmra.mxu0 %v3365
        %v3477 = vpop.f32.mrf.mxu0
        %v3478 = vadd.f32 %v3305, %v3477
        %3479 = vmatmul.f32.gmra.mxu0 %v3368
        %v3480 = vpop.f32.mrf.mxu0
        %v3481 = vadd.f32 %v3305, %v3480
        %3482 = vmatmul.f32.gmra.mxu0 %v3371
        %v3483 = vpop.f32.mrf.mxu0
        %v3484 = vadd.f32 %v3305, %v3483
        %3485 = vmatmul.f32.gmra.mxu0 %v3374
        %v3486 = vpop.f32.mrf.mxu0
        %v3487 = vadd.f32 %v3305, %v3486
        %3488 = vmatmul.f32.gmra.mxu0 %v3377
        %v3489 = vpop.f32.mrf.mxu0
        %v3490 = vadd.f32 %v3305, %v3489
        %3491 = vmatmul.f32.gmra.mxu0 %v3380
        %v3492 = vpop.f32.mrf.mxu0
        %v3493 = vadd.f32 %v3305, %v3492
        %3494 = vmatmul.f32.gmra.mxu0 %v3383
        %v3495 = vpop.f32.mrf.mxu0
        %v3496 = vadd.f32 %v3305, %v3495
        %3497 = vmatmul.f32.gmra.mxu0 %v3386
        %v3498 = vpop.f32.mrf.mxu0
        %v3499 = vadd.f32 %v3305, %v3498
        %3500 = vmatmul.f32.gmra.mxu0 %v3389
        %v3501 = vpop.f32.mrf.mxu0
        %v3502 = vadd.f32 %v3305, %v3501
        %3503 = vmatmul.f32.gmra.mxu0 %v3392
        %v3504 = vpop.f32.mrf.mxu0
        %v3505 = vadd.f32 %v3305, %v3504
        %3506 = vmatmul.f32.gmra.mxu0 %v3395
        %v3507 = vpop.f32.mrf.mxu0
        %v3508 = vadd.f32 %v3305, %v3507
        %3509 = vmatmul.f32.gmra.mxu0 %v3398
        %v3510 = vpop.f32.mrf.mxu0
        %v3511 = vadd.f32 %v3305, %v3510
        %3512 = vmatmul.f32.gmra.mxu0 %v3401
        %v3513 = vpop.f32.mrf.mxu0
        %v3514 = vadd.f32 %v3305, %v3513
        %3515 = vdwg.mxu0
        %v3516 = vmax.f32 %v3421, 0.0
        %v3517 = vmax.f32 %v3424, 0.0
        %v3518 = vmax.f32 %v3427, 0.0
        %v3519 = vmax.f32 %v3430, 0.0
        %v3520 = vmax.f32 %v3433, 0.0
        %v3521 = vmax.f32 %v3436, 0.0
        %v3522 = vmax.f32 %v3439, 0.0
        %v3523 = vmax.f32 %v3442, 0.0
        %v3524 = vmax.f32 %v3445, 0.0
        %v3525 = vmax.f32 %v3448, 0.0
        %v3526 = vmax.f32 %v3451, 0.0
        %v3527 = vmax.f32 %v3454, 0.0
        %v3528 = vmax.f32 %v3457, 0.0
        %v3529 = vmax.f32 %v3460, 0.0
        %v3530 = vmax.f32 %v3463, 0.0
        %v3531 = vmax.f32 %v3466, 0.0
        %v3532 = vmax.f32 %v3469, 0.0
        %v3533 = vmax.f32 %v3472, 0.0
        %v3534 = vmax.f32 %v3475, 0.0
        %v3535 = vmax.f32 %v3478, 0.0
        %v3536 = vmax.f32 %v3481, 0.0
        %v3537 = vmax.f32 %v3484, 0.0
        %v3538 = vmax.f32 %v3487, 0.0
        %v3539 = vmax.f32 %v3490, 0.0
        %v3540 = vmax.f32 %v3493, 0.0
        %v3541 = vmax.f32 %v3496, 0.0
        %v3542 = vmax.f32 %v3499, 0.0
        %v3543 = vmax.f32 %v3502, 0.0
        %v3544 = vmax.f32 %v3505, 0.0
        %v3545 = vmax.f32 %v3508, 0.0
        %v3546 = vmax.f32 %v3511, 0.0
        %v3547 = vmax.f32 %v3514, 0.0
        %v3548 = vld [vmem:[#allocation7] sm:$0xff]
        %v3549 = vld [vmem:[#allocation7 + $0x8] sm:$0xff]
        %v3550 = vld [vmem:[%s12] sm:$0x1]
        %v3552 = vperm.slane %v3550, 0
        %v3555 = vsel %vm874, %v3516, 0
        %v3558 = vsel %vm874, %v3517, 0
        %v3561 = vsel %vm874, %v3518, 0
        %v3564 = vsel %vm874, %v3519, 0
        %v3567 = vsel %vm874, %v3520, 0
        %v3570 = vsel %vm874, %v3521, 0
        %v3573 = vsel %vm874, %v3522, 0
        %v3576 = vsel %vm874, %v3523, 0
        %v3579 = vsel %vm874, %v3524, 0
        %v3582 = vsel %vm874, %v3525, 0
        %v3585 = vsel %vm874, %v3526, 0
        %v3588 = vsel %vm874, %v3527, 0
        %v3591 = vsel %vm874, %v3528, 0
        %v3594 = vsel %vm874, %v3529, 0
        %v3597 = vsel %vm874, %v3530, 0
        %v3600 = vsel %vm874, %v3531, 0
        %v3603 = vsel %vm874, %v3532, 0
        %v3606 = vsel %vm874, %v3533, 0
        %v3609 = vsel %vm874, %v3534, 0
        %v3612 = vsel %vm874, %v3535, 0
        %v3615 = vsel %vm874, %v3536, 0
        %v3618 = vsel %vm874, %v3537, 0
        %v3621 = vsel %vm874, %v3538, 0
        %v3624 = vsel %vm874, %v3539, 0
        %v3627 = vsel %vm874, %v3540, 0
        %v3630 = vsel %vm874, %v3541, 0
        %v3633 = vsel %vm874, %v3542, 0
        %v3636 = vsel %vm874, %v3543, 0
        %v3639 = vsel %vm874, %v3544, 0
        %v3642 = vsel %vm874, %v3545, 0
        %v3645 = vsel %vm874, %v3546, 0
        %v3648 = vsel %vm874, %v3547, 0
        %3650 = vmatpush.msra.mxu0 0.0
        %3651 = vmatpush.msra.mxu0 0.0
        %3652 = vmatpush.msra.mxu0 0.0
        %3653 = vmatpush.msra.mxu0 0.0
        %3654 = vmatpush.msra.mxu0 0.0
        %3655 = vmatpush.msra.mxu0 0.0
        %3656 = vmatpush.msra.mxu0 0.0
        %3657 = vmatpush.msra.mxu0 0.0
        %3658 = vmatpush.msra.mxu0 0.0
        %3659 = vmatpush.msra.mxu0 0.0
        %3660 = vmatpush.msra.mxu0 0.0
        %3661 = vmatpush.msra.mxu0 0.0
        %3662 = vmatpush.msra.mxu0 0.0
        %3663 = vmatpush.msra.mxu0 0.0
        %3664 = vmatpush.msra.mxu0 %v3549
        %3665 = vmatpush.msra.mxu0 %v3548
        %3666 = vmatmul.f32.gmra.mxu0 %v3555
        %v3667 = vpop.f32.mrf.mxu0
        %v3668 = vadd.f32 %v3552, %v3667
        %3669 = vmatmul.f32.gmra.mxu0 %v3558
        %v3670 = vpop.f32.mrf.mxu0
        %v3671 = vadd.f32 %v3552, %v3670
        %3672 = vmatmul.f32.gmra.mxu0 %v3561
        %v3673 = vpop.f32.mrf.mxu0
        %v3674 = vadd.f32 %v3552, %v3673
        %3675 = vmatmul.f32.gmra.mxu0 %v3564
        %v3676 = vpop.f32.mrf.mxu0
        %v3677 = vadd.f32 %v3552, %v3676
        %3678 = vmatmul.f32.gmra.mxu0 %v3567
        %v3679 = vpop.f32.mrf.mxu0
        %v3680 = vadd.f32 %v3552, %v3679
        %3681 = vmatmul.f32.gmra.mxu0 %v3570
        %v3682 = vpop.f32.mrf.mxu0
        %v3683 = vadd.f32 %v3552, %v3682
        %3684 = vmatmul.f32.gmra.mxu0 %v3573
        %v3685 = vpop.f32.mrf.mxu0
        %v3686 = vadd.f32 %v3552, %v3685
        %3687 = vmatmul.f32.gmra.mxu0 %v3576
        %v3688 = vpop.f32.mrf.mxu0
        %v3689 = vadd.f32 %v3552, %v3688
        %3690 = vmatmul.f32.gmra.mxu0 %v3579
        %v3691 = vpop.f32.mrf.mxu0
        %v3692 = vadd.f32 %v3552, %v3691
        %3693 = vmatmul.f32.gmra.mxu0 %v3582
        %v3694 = vpop.f32.mrf.mxu0
        %v3695 = vadd.f32 %v3552, %v3694
        %3696 = vmatmul.f32.gmra.mxu0 %v3585
        %v3697 = vpop.f32.mrf.mxu0
        %v3698 = vadd.f32 %v3552, %v3697
        %3699 = vmatmul.f32.gmra.mxu0 %v3588
        %v3700 = vpop.f32.mrf.mxu0
        %v3701 = vadd.f32 %v3552, %v3700
        %3702 = vmatmul.f32.gmra.mxu0 %v3591
        %v3703 = vpop.f32.mrf.mxu0
        %v3704 = vadd.f32 %v3552, %v3703
        %3705 = vmatmul.f32.gmra.mxu0 %v3594
        %v3706 = vpop.f32.mrf.mxu0
        %v3707 = vadd.f32 %v3552, %v3706
        %3708 = vmatmul.f32.gmra.mxu0 %v3597
        %v3709 = vpop.f32.mrf.mxu0
        %v3710 = vadd.f32 %v3552, %v3709
        %3711 = vmatmul.f32.gmra.mxu0 %v3600
        %v3712 = vpop.f32.mrf.mxu0
        %v3713 = vadd.f32 %v3552, %v3712
        %3714 = vmatmul.f32.gmra.mxu0 %v3603
        %v3715 = vpop.f32.mrf.mxu0
        %v3716 = vadd.f32 %v3552, %v3715
        %3717 = vmatmul.f32.gmra.mxu0 %v3606
        %v3718 = vpop.f32.mrf.mxu0
        %v3719 = vadd.f32 %v3552, %v3718
        %3720 = vmatmul.f32.gmra.mxu0 %v3609
        %v3721 = vpop.f32.mrf.mxu0
        %v3722 = vadd.f32 %v3552, %v3721
        %3723 = vmatmul.f32.gmra.mxu0 %v3612
        %v3724 = vpop.f32.mrf.mxu0
        %v3725 = vadd.f32 %v3552, %v3724
        %3726 = vmatmul.f32.gmra.mxu0 %v3615
        %v3727 = vpop.f32.mrf.mxu0
        %v3728 = vadd.f32 %v3552, %v3727
        %3729 = vmatmul.f32.gmra.mxu0 %v3618
        %v3730 = vpop.f32.mrf.mxu0
        %v3731 = vadd.f32 %v3552, %v3730
        %3732 = vmatmul.f32.gmra.mxu0 %v3621
        %v3733 = vpop.f32.mrf.mxu0
        %v3734 = vadd.f32 %v3552, %v3733
        %3735 = vmatmul.f32.gmra.mxu0 %v3624
        %v3736 = vpop.f32.mrf.mxu0
        %v3737 = vadd.f32 %v3552, %v3736
        %3738 = vmatmul.f32.gmra.mxu0 %v3627
        %v3739 = vpop.f32.mrf.mxu0
        %v3740 = vadd.f32 %v3552, %v3739
        %3741 = vmatmul.f32.gmra.mxu0 %v3630
        %v3742 = vpop.f32.mrf.mxu0
        %v3743 = vadd.f32 %v3552, %v3742
        %3744 = vmatmul.f32.gmra.mxu0 %v3633
        %v3745 = vpop.f32.mrf.mxu0
        %v3746 = vadd.f32 %v3552, %v3745
        %3747 = vmatmul.f32.gmra.mxu0 %v3636
        %v3748 = vpop.f32.mrf.mxu0
        %v3749 = vadd.f32 %v3552, %v3748
        %3750 = vmatmul.f32.gmra.mxu0 %v3639
        %v3751 = vpop.f32.mrf.mxu0
        %v3752 = vadd.f32 %v3552, %v3751
        %3753 = vmatmul.f32.gmra.mxu0 %v3642
        %v3754 = vpop.f32.mrf.mxu0
        %v3755 = vadd.f32 %v3552, %v3754
        %3756 = vmatmul.f32.gmra.mxu0 %v3645
        %v3757 = vpop.f32.mrf.mxu0
        %v3758 = vadd.f32 %v3552, %v3757
        %3759 = vmatmul.f32.gmra.mxu0 %v3648
        %v3760 = vpop.f32.mrf.mxu0
        %v3761 = vadd.f32 %v3552, %v3760
        %3762 = vdwg.mxu0
        %v3763 = vmax.f32 %v3668, 0.0
        %v3764 = vmax.f32 %v3671, 0.0
        %v3765 = vmax.f32 %v3674, 0.0
        %v3766 = vmax.f32 %v3677, 0.0
        %v3767 = vmax.f32 %v3680, 0.0
        %v3768 = vmax.f32 %v3683, 0.0
        %v3769 = vmax.f32 %v3686, 0.0
        %v3770 = vmax.f32 %v3689, 0.0
        %v3771 = vmax.f32 %v3692, 0.0
        %v3772 = vmax.f32 %v3695, 0.0
        %v3773 = vmax.f32 %v3698, 0.0
        %v3774 = vmax.f32 %v3701, 0.0
        %v3775 = vmax.f32 %v3704, 0.0
        %v3776 = vmax.f32 %v3707, 0.0
        %v3777 = vmax.f32 %v3710, 0.0
        %v3778 = vmax.f32 %v3713, 0.0
        %v3779 = vmax.f32 %v3716, 0.0
        %v3780 = vmax.f32 %v3719, 0.0
        %v3781 = vmax.f32 %v3722, 0.0
        %v3782 = vmax.f32 %v3725, 0.0
        %v3783 = vmax.f32 %v3728, 0.0
        %v3784 = vmax.f32 %v3731, 0.0
        %v3785 = vmax.f32 %v3734, 0.0
        %v3786 = vmax.f32 %v3737, 0.0
        %v3787 = vmax.f32 %v3740, 0.0
        %v3788 = vmax.f32 %v3743, 0.0
        %v3789 = vmax.f32 %v3746, 0.0
        %v3790 = vmax.f32 %v3749, 0.0
        %v3791 = vmax.f32 %v3752, 0.0
        %v3792 = vmax.f32 %v3755, 0.0
        %v3793 = vmax.f32 %v3758, 0.0
        %v3794 = vmax.f32 %v3761, 0.0
        %v3795 = vld [vmem:[#allocation8] sm:$0xff]
        %v3796 = vld [vmem:[#allocation8 + $0x8] sm:$0xff]
        %v3797 = vld [vmem:[#allocation8 + $0x10] sm:$0xff]
        %v3798 = vld [vmem:[#allocation8 + $0x18] sm:$0xff]
        %v3799 = vld [vmem:[%s14] sm:$0x1]
        %v3801 = vperm.slane %v3799, 0
        %v3804 = vsel %vm2212, %v3297, 0
        %3806 = vmatpush.msra.mxu0 0.0
        %3807 = vmatpush.msra.mxu0 0.0
        %3808 = vmatpush.msra.mxu0 0.0
        %3809 = vmatpush.msra.mxu0 0.0
        %3810 = vmatpush.msra.mxu0 0.0
        %3811 = vmatpush.msra.mxu0 0.0
        %3812 = vmatpush.msra.mxu0 0.0
        %3813 = vmatpush.msra.mxu0 0.0
        %3814 = vmatpush.msra.mxu0 0.0
        %3815 = vmatpush.msra.mxu0 0.0
        %3816 = vmatpush.msra.mxu0 0.0
        %3817 = vmatpush.msra.mxu0 0.0
        %3818 = vmatpush.msra.mxu0 %v3798
        %3819 = vmatpush.msra.mxu0 %v3797
        %3820 = vmatpush.msra.mxu0 %v3796
        %3821 = vmatpush.msra.mxu0 %v3795
        %3822 = vmatmul.f32.gmra.mxu0 %v3804
        %v3823 = vpop.f32.mrf.mxu0
        %v3824 = vadd.f32 %v3801, %v3823
        %3825 = vdwg.mxu0
        %v3826 = vmax.f32 %v3824, 0.0
        %v3827 = vld [vmem:[#allocation10] sm:$0xff]
        %v3828 = vld [vmem:[#allocation10 + $0x8] sm:$0xff]
        %v3829 = vld [vmem:[#allocation11] sm:$0x1]
        %v3831 = vperm.slane %v3829, 0
        %v3834 = vsel %vm874, %v3826, 0
        %3836 = vmatpush.msra.mxu0 0.0
        %3837 = vmatpush.msra.mxu0 0.0
        %3838 = vmatpush.msra.mxu0 0.0
        %3839 = vmatpush.msra.mxu0 0.0
        %3840 = vmatpush.msra.mxu0 0.0
        %3841 = vmatpush.msra.mxu0 0.0
        %3842 = vmatpush.msra.mxu0 0.0
        %3843 = vmatpush.msra.mxu0 0.0
        %3844 = vmatpush.msra.mxu0 0.0
        %3845 = vmatpush.msra.mxu0 0.0
        %3846 = vmatpush.msra.mxu0 0.0
        %3847 = vmatpush.msra.mxu0 0.0
        %3848 = vmatpush.msra.mxu0 0.0
        %3849 = vmatpush.msra.mxu0 0.0
        %3850 = vmatpush.msra.mxu0 %v3828
        %3851 = vmatpush.msra.mxu0 %v3827
        %3852 = vmatmul.f32.gmra.mxu0 %v3834
        %v3853 = vpop.f32.mrf.mxu0
        %v3854 = vadd.f32 %v3831, %v3853
        %3855 = vdwg.mxu0
        %v3856 = vmax.f32 %v3854, 0.0
        %v3858 = vsel %vm874, %v3856, 0
        %v3861 = vsel %vm874, %v3763, 0
        %v3864 = vsel %vm874, %v3764, 0
        %v3867 = vsel %vm874, %v3765, 0
        %v3870 = vsel %vm874, %v3766, 0
        %v3873 = vsel %vm874, %v3767, 0
        %v3876 = vsel %vm874, %v3768, 0
        %v3879 = vsel %vm874, %v3769, 0
        %v3882 = vsel %vm874, %v3770, 0
        %v3885 = vsel %vm874, %v3771, 0
        %v3888 = vsel %vm874, %v3772, 0
        %v3891 = vsel %vm874, %v3773, 0
        %v3894 = vsel %vm874, %v3774, 0
        %v3897 = vsel %vm874, %v3775, 0
        %v3900 = vsel %vm874, %v3776, 0
        %v3903 = vsel %vm874, %v3777, 0
        %v3906 = vsel %vm874, %v3778, 0
        %v3909 = vsel %vm874, %v3779, 0
        %v3912 = vsel %vm874, %v3780, 0
        %v3915 = vsel %vm874, %v3781, 0
        %v3918 = vsel %vm874, %v3782, 0
        %v3921 = vsel %vm874, %v3783, 0
        %v3924 = vsel %vm874, %v3784, 0
        %v3927 = vsel %vm874, %v3785, 0
        %v3930 = vsel %vm874, %v3786, 0
        %v3933 = vsel %vm874, %v3787, 0
        %v3936 = vsel %vm874, %v3788, 0
        %v3939 = vsel %vm874, %v3789, 0
        %v3942 = vsel %vm874, %v3790, 0
        %v3945 = vsel %vm874, %v3791, 0
        %v3948 = vsel %vm874, %v3792, 0
        %v3951 = vsel %vm874, %v3793, 0
        %v3954 = vsel %vm874, %v3794, 0
        %3956 = vmatpush.xpose.msra.mxu0 %v3906
        %3957 = vmatpush.xpose.msra.mxu0 %v3903
        %3958 = vmatpush.xpose.msra.mxu0 %v3900
        %3959 = vmatpush.xpose.msra.mxu0 %v3897
        %3960 = vmatpush.xpose.msra.mxu0 %v3894
        %3961 = vmatpush.xpose.msra.mxu0 %v3891
        %3962 = vmatpush.xpose.msra.mxu0 %v3888
        %3963 = vmatpush.xpose.msra.mxu0 %v3885
        %3964 = vmatpush.xpose.msra.mxu0 %v3882
        %3965 = vmatpush.xpose.msra.mxu0 %v3879
        %3966 = vmatpush.xpose.msra.mxu0 %v3876
        %3967 = vmatpush.xpose.msra.mxu0 %v3873
        %3968 = vmatpush.xpose.msra.mxu0 %v3870
        %3969 = vmatpush.xpose.msra.mxu0 %v3867
        %3970 = vmatpush.xpose.msra.mxu0 %v3864
        %3971 = vmatpush.xpose.msra.mxu0 %v3861
        %3972 = vmatmul.f32.gmra.mxu0 %v3858
        %v3973 = vpop.f32.mrf.mxu0
        %v3974 = vadd.f32 0.0, %v3973
        %3975 = vdwg.mxu0
        %3976 = vmatpush.xpose.msra.mxu0 %v3954
        %3977 = vmatpush.xpose.msra.mxu0 %v3951
        %3978 = vmatpush.xpose.msra.mxu0 %v3948
        %3979 = vmatpush.xpose.msra.mxu0 %v3945
        %3980 = vmatpush.xpose.msra.mxu0 %v3942
        %3981 = vmatpush.xpose.msra.mxu0 %v3939
        %3982 = vmatpush.xpose.msra.mxu0 %v3936
        %3983 = vmatpush.xpose.msra.mxu0 %v3933
        %3984 = vmatpush.xpose.msra.mxu0 %v3930
        %3985 = vmatpush.xpose.msra.mxu0 %v3927
        %3986 = vmatpush.xpose.msra.mxu0 %v3924
        %3987 = vmatpush.xpose.msra.mxu0 %v3921
        %3988 = vmatpush.xpose.msra.mxu0 %v3918
        %3989 = vmatpush.xpose.msra.mxu0 %v3915
        %3990 = vmatpush.xpose.msra.mxu0 %v3912
        %3991 = vmatpush.xpose.msra.mxu0 %v3909
        %3992 = vmatmul.f32.gmra.mxu0 %v3858
        %v3993 = vpop.f32.mrf.mxu0
        %v3994 = vadd.f32 0.0, %v3993
        %3995 = vdwg.mxu0
        %v3996 = vrot.slane %v3974, 4
        %v3997 = vmax.f32 %v3974, %v3996
        %v3998 = vrot.slane %v3997, 2
        %v3999 = vmax.f32 %v3997, %v3998
        %v4000 = vrot.slane %v3999, 1
        %v4001 = vmax.f32 %v3999, %v4000
        %v4002 = vrot.slane %v3994, 4
        %v4003 = vmax.f32 %v3994, %v4002
        %v4004 = vrot.slane %v4003, 2
        %v4005 = vmax.f32 %v4003, %v4004
        %v4006 = vrot.slane %v4005, 1
        %v4007 = vmax.f32 %v4005, %v4006
        %v4008 = vsub.f32 %v3974, %v4001
        %v4009 = vsub.f32 %v3994, %v4007
        %v4010 = vmul.f32 %v4008, 1.442695
        %v4011 = vpow.pop %v4010
        %v4012 = vmul.f32 %v4009, 1.442695
        %v4013 = vpow.pop %v4012
        %v4014 = vrot.slane %v4011, 4
        %v4015 = vadd.f32 %v4011, %v4014
        %v4016 = vrot.slane %v4015, 2
        %v4017 = vadd.f32 %v4015, %v4016
        %v4018 = vrot.slane %v4017, 1
        %v4019 = vadd.f32 %v4017, %v4018
        %v4020 = vrot.slane %v4013, 4
        %v4021 = vadd.f32 %v4013, %v4020
        %v4022 = vrot.slane %v4021, 2
        %v4023 = vadd.f32 %v4021, %v4022
        %v4024 = vrot.slane %v4023, 1
        %v4025 = vadd.f32 %v4023, %v4024
        %v4026 = vrcp.pop %v4019
        %v4027 = vrcp.pop %v4025
        %v4028 = vmul.f32 %v4011, %v4026
        %v4029 = vmul.f32 %v4013, %v4027
        %4030 = vxpose.xlu0.b32.start [1/16] %v4028, 128
        %4031 = vxpose.xlu0.b32.cont [2/16] 0.0, 128
        %4032 = vxpose.xlu0.b32.cont [3/16] 0.0, 128
        %4033 = vxpose.xlu0.b32.cont [4/16] 0.0, 128
        %4034 = vxpose.xlu0.b32.cont [5/16] 0.0, 128
        %4035 = vxpose.xlu0.b32.cont [6/16] 0.0, 128
        %4036 = vxpose.xlu0.b32.cont [7/16] 0.0, 128
        %4037 = vxpose.xlu0.b32.cont [8/16] 0.0, 128
        %4038 = vxpose.xlu0.b32.cont [9/16] 0.0, 128
        %4039 = vxpose.xlu0.b32.cont [10/16] 0.0, 128
        %4040 = vxpose.xlu0.b32.cont [11/16] 0.0, 128
        %4041 = vxpose.xlu0.b32.cont [12/16] 0.0, 128
        %4042 = vxpose.xlu0.b32.cont [13/16] 0.0, 128
        %4043 = vxpose.xlu0.b32.cont [14/16] 0.0, 128
        %4044 = vxpose.xlu0.b32.cont [15/16] 0.0, 128
        %4045 = vxpose.xlu0.b32.end [16/16] 0.0, 128
        %v4046 = vpop.trf.xlu0
        %v4047 = vpop.trf.xlu0
        %v4048 = vpop.trf.xlu0
        %v4049 = vpop.trf.xlu0
        %v4050 = vpop.trf.xlu0
        %v4051 = vpop.trf.xlu0
        %v4052 = vpop.trf.xlu0
        %v4053 = vpop.trf.xlu0
        %v4054 = vpop.trf.xlu0
        %v4055 = vpop.trf.xlu0
        %v4056 = vpop.trf.xlu0
        %v4057 = vpop.trf.xlu0
        %v4058 = vpop.trf.xlu0
        %v4059 = vpop.trf.xlu0
        %v4060 = vpop.trf.xlu0
        %v4061 = vpop.trf.xlu0
        %4062 = vxpose.xlu0.b32.start [1/16] %v4029, 128
        %4063 = vxpose.xlu0.b32.cont [2/16] 0.0, 128
        %4064 = vxpose.xlu0.b32.cont [3/16] 0.0, 128
        %4065 = vxpose.xlu0.b32.cont [4/16] 0.0, 128
        %4066 = vxpose.xlu0.b32.cont [5/16] 0.0, 128
        %4067 = vxpose.xlu0.b32.cont [6/16] 0.0, 128
        %4068 = vxpose.xlu0.b32.cont [7/16] 0.0, 128
        %4069 = vxpose.xlu0.b32.cont [8/16] 0.0, 128
        %4070 = vxpose.xlu0.b32.cont [9/16] 0.0, 128
        %4071 = vxpose.xlu0.b32.cont [10/16] 0.0, 128
        %4072 = vxpose.xlu0.b32.cont [11/16] 0.0, 128
        %4073 = vxpose.xlu0.b32.cont [12/16] 0.0, 128
        %4074 = vxpose.xlu0.b32.cont [13/16] 0.0, 128
        %4075 = vxpose.xlu0.b32.cont [14/16] 0.0, 128
        %4076 = vxpose.xlu0.b32.cont [15/16] 0.0, 128
        %4077 = vxpose.xlu0.b32.end [16/16] 0.0, 128
        %v4078 = vpop.trf.xlu0
        %v4079 = vpop.trf.xlu0
        %v4080 = vpop.trf.xlu0
        %v4081 = vpop.trf.xlu0
        %v4082 = vpop.trf.xlu0
        %v4083 = vpop.trf.xlu0
        %v4084 = vpop.trf.xlu0
        %v4085 = vpop.trf.xlu0
        %v4086 = vpop.trf.xlu0
        %v4087 = vpop.trf.xlu0
        %v4088 = vpop.trf.xlu0
        %v4089 = vpop.trf.xlu0
        %v4090 = vpop.trf.xlu0
        %v4091 = vpop.trf.xlu0
        %v4092 = vpop.trf.xlu0
        %v4093 = vpop.trf.xlu0
        %4094 = vrot.lane.b32.xlu0 %v3826, 112
        %v4095 = vpop.permute.xlu0 %4094
        %vm4097 = vcmask 64512
        %v4099 = vsel %vm4097, %v4046, 0
        %v4102 = vsel %vm4097, %v4047, 0
        %v4105 = vsel %vm4097, %v4048, 0
        %v4108 = vsel %vm4097, %v4049, 0
        %v4111 = vsel %vm4097, %v4050, 0
        %v4114 = vsel %vm4097, %v4051, 0
        %v4117 = vsel %vm4097, %v4052, 0
        %v4120 = vsel %vm4097, %v4053, 0
        %v4123 = vsel %vm4097, %v4054, 0
        %v4126 = vsel %vm4097, %v4055, 0
        %v4129 = vsel %vm4097, %v4056, 0
        %v4132 = vsel %vm4097, %v4057, 0
        %v4135 = vsel %vm4097, %v4058, 0
        %v4138 = vsel %vm4097, %v4059, 0
        %v4141 = vsel %vm4097, %v4060, 0
        %v4144 = vsel %vm4097, %v4061, 0
        %v4147 = vsel %vm4097, %v4078, 0
        %v4150 = vsel %vm4097, %v4079, 0
        %v4153 = vsel %vm4097, %v4080, 0
        %v4156 = vsel %vm4097, %v4081, 0
        %v4159 = vsel %vm4097, %v4082, 0
        %v4162 = vsel %vm4097, %v4083, 0
        %v4165 = vsel %vm4097, %v4084, 0
        %v4168 = vsel %vm4097, %v4085, 0
        %v4171 = vsel %vm4097, %v4086, 0
        %v4174 = vsel %vm4097, %v4087, 0
        %v4177 = vsel %vm4097, %v4088, 0
        %v4180 = vsel %vm4097, %v4089, 0
        %v4183 = vsel %vm4097, %v4090, 0
        %v4186 = vsel %vm4097, %v4091, 0
        %v4189 = vsel %vm4097, %v4092, 0
        %v4192 = vsel %vm4097, %v4093, 0
        %4194 = vmatpush.msra.mxu0 0.0
        %4195 = vmatpush.msra.mxu0 0.0
        %4196 = vmatpush.msra.mxu0 0.0
        %4197 = vmatpush.msra.mxu0 0.0
        %4198 = vmatpush.msra.mxu0 0.0
        %4199 = vmatpush.msra.mxu0 0.0
        %4200 = vmatpush.msra.mxu0 0.0
        %4201 = vmatpush.msra.mxu0 0.0
        %4202 = vmatpush.msra.mxu0 0.0
        %4203 = vmatpush.msra.mxu0 0.0
        %4204 = vmatpush.msra.mxu0 0.0
        %4205 = vmatpush.msra.mxu0 0.0
        %4206 = vmatpush.msra.mxu0 0.0
        %4207 = vmatpush.msra.mxu0 0.0
        %4208 = vmatpush.msra.mxu0 0.0
        %4209 = vmatpush.msra.mxu0 %v4095
        %4210 = vmatmul.f32.gmra.mxu0 %v4099
        %v4211 = vpop.f32.mrf.mxu0
        %v4212 = vadd.f32 0.0, %v4211
        %4213 = vmatmul.f32.gmra.mxu0 %v4102
        %v4214 = vpop.f32.mrf.mxu0
        %v4215 = vadd.f32 0.0, %v4214
        %4216 = vmatmul.f32.gmra.mxu0 %v4105
        %v4217 = vpop.f32.mrf.mxu0
        %v4218 = vadd.f32 0.0, %v4217
        %4219 = vmatmul.f32.gmra.mxu0 %v4108
        %v4220 = vpop.f32.mrf.mxu0
        %v4221 = vadd.f32 0.0, %v4220
        %4222 = vmatmul.f32.gmra.mxu0 %v4111
        %v4223 = vpop.f32.mrf.mxu0
        %v4224 = vadd.f32 0.0, %v4223
        %4225 = vmatmul.f32.gmra.mxu0 %v4114
        %v4226 = vpop.f32.mrf.mxu0
        %v4227 = vadd.f32 0.0, %v4226
        %4228 = vmatmul.f32.gmra.mxu0 %v4117
        %v4229 = vpop.f32.mrf.mxu0
        %v4230 = vadd.f32 0.0, %v4229
        %4231 = vmatmul.f32.gmra.mxu0 %v4120
        %v4232 = vpop.f32.mrf.mxu0
        %v4233 = vadd.f32 0.0, %v4232
        %4234 = vmatmul.f32.gmra.mxu0 %v4123
        %v4235 = vpop.f32.mrf.mxu0
        %v4236 = vadd.f32 0.0, %v4235
        %4237 = vmatmul.f32.gmra.mxu0 %v4126
        %v4238 = vpop.f32.mrf.mxu0
        %v4239 = vadd.f32 0.0, %v4238
        %4240 = vmatmul.f32.gmra.mxu0 %v4129
        %v4241 = vpop.f32.mrf.mxu0
        %v4242 = vadd.f32 0.0, %v4241
        %4243 = vmatmul.f32.gmra.mxu0 %v4132
        %v4244 = vpop.f32.mrf.mxu0
        %v4245 = vadd.f32 0.0, %v4244
        %4246 = vmatmul.f32.gmra.mxu0 %v4135
        %v4247 = vpop.f32.mrf.mxu0
        %v4248 = vadd.f32 0.0, %v4247
        %4249 = vmatmul.f32.gmra.mxu0 %v4138
        %v4250 = vpop.f32.mrf.mxu0
        %v4251 = vadd.f32 0.0, %v4250
        %4252 = vmatmul.f32.gmra.mxu0 %v4141
        %v4253 = vpop.f32.mrf.mxu0
        %v4254 = vadd.f32 0.0, %v4253
        %4255 = vmatmul.f32.gmra.mxu0 %v4144
        %v4256 = vpop.f32.mrf.mxu0
        %v4257 = vadd.f32 0.0, %v4256
        %4258 = vmatmul.f32.gmra.mxu0 %v4147
        %v4259 = vpop.f32.mrf.mxu0
        %v4260 = vadd.f32 0.0, %v4259
        %4261 = vmatmul.f32.gmra.mxu0 %v4150
        %v4262 = vpop.f32.mrf.mxu0
        %v4263 = vadd.f32 0.0, %v4262
        %4264 = vmatmul.f32.gmra.mxu0 %v4153
        %v4265 = vpop.f32.mrf.mxu0
        %v4266 = vadd.f32 0.0, %v4265
        %4267 = vmatmul.f32.gmra.mxu0 %v4156
        %v4268 = vpop.f32.mrf.mxu0
        %v4269 = vadd.f32 0.0, %v4268
        %4270 = vmatmul.f32.gmra.mxu0 %v4159
        %v4271 = vpop.f32.mrf.mxu0
        %v4272 = vadd.f32 0.0, %v4271
        %4273 = vmatmul.f32.gmra.mxu0 %v4162
        %v4274 = vpop.f32.mrf.mxu0
        %v4275 = vadd.f32 0.0, %v4274
        %4276 = vmatmul.f32.gmra.mxu0 %v4165
        %v4277 = vpop.f32.mrf.mxu0
        %v4278 = vadd.f32 0.0, %v4277
        %4279 = vmatmul.f32.gmra.mxu0 %v4168
        %v4280 = vpop.f32.mrf.mxu0
        %v4281 = vadd.f32 0.0, %v4280
        %4282 = vmatmul.f32.gmra.mxu0 %v4171
        %v4283 = vpop.f32.mrf.mxu0
        %v4284 = vadd.f32 0.0, %v4283
        %4285 = vmatmul.f32.gmra.mxu0 %v4174
        %v4286 = vpop.f32.mrf.mxu0
        %v4287 = vadd.f32 0.0, %v4286
        %4288 = vmatmul.f32.gmra.mxu0 %v4177
        %v4289 = vpop.f32.mrf.mxu0
        %v4290 = vadd.f32 0.0, %v4289
        %4291 = vmatmul.f32.gmra.mxu0 %v4180
        %v4292 = vpop.f32.mrf.mxu0
        %v4293 = vadd.f32 0.0, %v4292
        %4294 = vmatmul.f32.gmra.mxu0 %v4183
        %v4295 = vpop.f32.mrf.mxu0
        %v4296 = vadd.f32 0.0, %v4295
        %4297 = vmatmul.f32.gmra.mxu0 %v4186
        %v4298 = vpop.f32.mrf.mxu0
        %v4299 = vadd.f32 0.0, %v4298
        %4300 = vmatmul.f32.gmra.mxu0 %v4189
        %v4301 = vpop.f32.mrf.mxu0
        %v4302 = vadd.f32 0.0, %v4301
        %4303 = vmatmul.f32.gmra.mxu0 %v4192
        %v4304 = vpop.f32.mrf.mxu0
        %v4305 = vadd.f32 0.0, %v4304
        %4306 = vdwg.mxu0
        %v4307 = vld [vmem:[#allocation13] sm:$0xff]
        %v4308 = vld [vmem:[#allocation13 + $0x8] sm:$0xff]
        %v4309 = vld [vmem:[#allocation14] sm:$0x1]
        %v4311 = vperm.slane %v4309, 0
        %v4314 = vsel %vm874, %v4212, 0
        %v4317 = vsel %vm874, %v4215, 0
        %v4320 = vsel %vm874, %v4218, 0
        %v4323 = vsel %vm874, %v4221, 0
        %v4326 = vsel %vm874, %v4224, 0
        %v4329 = vsel %vm874, %v4227, 0
        %v4332 = vsel %vm874, %v4230, 0
        %v4335 = vsel %vm874, %v4233, 0
        %v4338 = vsel %vm874, %v4236, 0
        %v4341 = vsel %vm874, %v4239, 0
        %v4344 = vsel %vm874, %v4242, 0
        %v4347 = vsel %vm874, %v4245, 0
        %v4350 = vsel %vm874, %v4248, 0
        %v4353 = vsel %vm874, %v4251, 0
        %v4356 = vsel %vm874, %v4254, 0
        %v4359 = vsel %vm874, %v4257, 0
        %v4362 = vsel %vm874, %v4260, 0
        %v4365 = vsel %vm874, %v4263, 0
        %v4368 = vsel %vm874, %v4266, 0
        %v4371 = vsel %vm874, %v4269, 0
        %v4374 = vsel %vm874, %v4272, 0
        %v4377 = vsel %vm874, %v4275, 0
        %v4380 = vsel %vm874, %v4278, 0
        %v4383 = vsel %vm874, %v4281, 0
        %v4386 = vsel %vm874, %v4284, 0
        %v4389 = vsel %vm874, %v4287, 0
        %v4392 = vsel %vm874, %v4290, 0
        %v4395 = vsel %vm874, %v4293, 0
        %v4398 = vsel %vm874, %v4296, 0
        %v4401 = vsel %vm874, %v4299, 0
        %v4404 = vsel %vm874, %v4302, 0
        %v4407 = vsel %vm874, %v4305, 0
        %4409 = vmatpush.msra.mxu0 0.0
        %4410 = vmatpush.msra.mxu0 0.0
        %4411 = vmatpush.msra.mxu0 0.0
        %4412 = vmatpush.msra.mxu0 0.0
        %4413 = vmatpush.msra.mxu0 0.0
        %4414 = vmatpush.msra.mxu0 0.0
        %4415 = vmatpush.msra.mxu0 0.0
        %4416 = vmatpush.msra.mxu0 0.0
        %4417 = vmatpush.msra.mxu0 0.0
        %4418 = vmatpush.msra.mxu0 0.0
        %4419 = vmatpush.msra.mxu0 0.0
        %4420 = vmatpush.msra.mxu0 0.0
        %4421 = vmatpush.msra.mxu0 0.0
        %4422 = vmatpush.msra.mxu0 0.0
        %4423 = vmatpush.msra.mxu0 %v4308
        %4424 = vmatpush.msra.mxu0 %v4307
        %4425 = vmatmul.f32.gmra.mxu0 %v4314
        %v4426 = vpop.f32.mrf.mxu0
        %v4427 = vadd.f32 %v4311, %v4426
        %4428 = vmatmul.f32.gmra.mxu0 %v4317
        %v4429 = vpop.f32.mrf.mxu0
        %v4430 = vadd.f32 %v4311, %v4429
        %4431 = vmatmul.f32.gmra.mxu0 %v4320
        %v4432 = vpop.f32.mrf.mxu0
        %v4433 = vadd.f32 %v4311, %v4432
        %4434 = vmatmul.f32.gmra.mxu0 %v4323
        %v4435 = vpop.f32.mrf.mxu0
        %v4436 = vadd.f32 %v4311, %v4435
        %4437 = vmatmul.f32.gmra.mxu0 %v4326
        %v4438 = vpop.f32.mrf.mxu0
        %v4439 = vadd.f32 %v4311, %v4438
        %4440 = vmatmul.f32.gmra.mxu0 %v4329
        %v4441 = vpop.f32.mrf.mxu0
        %v4442 = vadd.f32 %v4311, %v4441
        %4443 = vmatmul.f32.gmra.mxu0 %v4332
        %v4444 = vpop.f32.mrf.mxu0
        %v4445 = vadd.f32 %v4311, %v4444
        %4446 = vmatmul.f32.gmra.mxu0 %v4335
        %v4447 = vpop.f32.mrf.mxu0
        %v4448 = vadd.f32 %v4311, %v4447
        %4449 = vmatmul.f32.gmra.mxu0 %v4338
        %v4450 = vpop.f32.mrf.mxu0
        %v4451 = vadd.f32 %v4311, %v4450
        %4452 = vmatmul.f32.gmra.mxu0 %v4341
        %v4453 = vpop.f32.mrf.mxu0
        %v4454 = vadd.f32 %v4311, %v4453
        %4455 = vmatmul.f32.gmra.mxu0 %v4344
        %v4456 = vpop.f32.mrf.mxu0
        %v4457 = vadd.f32 %v4311, %v4456
        %4458 = vmatmul.f32.gmra.mxu0 %v4347
        %v4459 = vpop.f32.mrf.mxu0
        %v4460 = vadd.f32 %v4311, %v4459
        %4461 = vmatmul.f32.gmra.mxu0 %v4350
        %v4462 = vpop.f32.mrf.mxu0
        %v4463 = vadd.f32 %v4311, %v4462
        %4464 = vmatmul.f32.gmra.mxu0 %v4353
        %v4465 = vpop.f32.mrf.mxu0
        %v4466 = vadd.f32 %v4311, %v4465
        %4467 = vmatmul.f32.gmra.mxu0 %v4356
        %v4468 = vpop.f32.mrf.mxu0
        %v4469 = vadd.f32 %v4311, %v4468
        %4470 = vmatmul.f32.gmra.mxu0 %v4359
        %v4471 = vpop.f32.mrf.mxu0
        %v4472 = vadd.f32 %v4311, %v4471
        %4473 = vmatmul.f32.gmra.mxu0 %v4362
        %v4474 = vpop.f32.mrf.mxu0
        %v4475 = vadd.f32 %v4311, %v4474
        %4476 = vmatmul.f32.gmra.mxu0 %v4365
        %v4477 = vpop.f32.mrf.mxu0
        %v4478 = vadd.f32 %v4311, %v4477
        %4479 = vmatmul.f32.gmra.mxu0 %v4368
        %v4480 = vpop.f32.mrf.mxu0
        %v4481 = vadd.f32 %v4311, %v4480
        %4482 = vmatmul.f32.gmra.mxu0 %v4371
        %v4483 = vpop.f32.mrf.mxu0
        %v4484 = vadd.f32 %v4311, %v4483
        %4485 = vmatmul.f32.gmra.mxu0 %v4374
        %v4486 = vpop.f32.mrf.mxu0
        %v4487 = vadd.f32 %v4311, %v4486
        %4488 = vmatmul.f32.gmra.mxu0 %v4377
        %v4489 = vpop.f32.mrf.mxu0
        %v4490 = vadd.f32 %v4311, %v4489
        %4491 = vmatmul.f32.gmra.mxu0 %v4380
        %v4492 = vpop.f32.mrf.mxu0
        %v4493 = vadd.f32 %v4311, %v4492
        %4494 = vmatmul.f32.gmra.mxu0 %v4383
        %v4495 = vpop.f32.mrf.mxu0
        %v4496 = vadd.f32 %v4311, %v4495
        %4497 = vmatmul.f32.gmra.mxu0 %v4386
        %v4498 = vpop.f32.mrf.mxu0
        %v4499 = vadd.f32 %v4311, %v4498
        %4500 = vmatmul.f32.gmra.mxu0 %v4389
        %v4501 = vpop.f32.mrf.mxu0
        %v4502 = vadd.f32 %v4311, %v4501
        %4503 = vmatmul.f32.gmra.mxu0 %v4392
        %v4504 = vpop.f32.mrf.mxu0
        %v4505 = vadd.f32 %v4311, %v4504
        %4506 = vmatmul.f32.gmra.mxu0 %v4395
        %v4507 = vpop.f32.mrf.mxu0
        %v4508 = vadd.f32 %v4311, %v4507
        %4509 = vmatmul.f32.gmra.mxu0 %v4398
        %v4510 = vpop.f32.mrf.mxu0
        %v4511 = vadd.f32 %v4311, %v4510
        %4512 = vmatmul.f32.gmra.mxu0 %v4401
        %v4513 = vpop.f32.mrf.mxu0
        %v4514 = vadd.f32 %v4311, %v4513
        %4515 = vmatmul.f32.gmra.mxu0 %v4404
        %v4516 = vpop.f32.mrf.mxu0
        %v4517 = vadd.f32 %v4311, %v4516
        %4518 = vmatmul.f32.gmra.mxu0 %v4407
        %v4519 = vpop.f32.mrf.mxu0
        %v4520 = vadd.f32 %v4311, %v4519
        %4521 = vdwg.mxu0
        %v4522 = vmax.f32 %v4427, 0.0
        %v4523 = vmax.f32 %v4430, 0.0
        %v4524 = vmax.f32 %v4433, 0.0
        %v4525 = vmax.f32 %v4436, 0.0
        %v4526 = vmax.f32 %v4439, 0.0
        %v4527 = vmax.f32 %v4442, 0.0
        %v4528 = vmax.f32 %v4445, 0.0
        %v4529 = vmax.f32 %v4448, 0.0
        %v4530 = vmax.f32 %v4451, 0.0
        %v4531 = vmax.f32 %v4454, 0.0
        %v4532 = vmax.f32 %v4457, 0.0
        %v4533 = vmax.f32 %v4460, 0.0
        %v4534 = vmax.f32 %v4463, 0.0
        %v4535 = vmax.f32 %v4466, 0.0
        %v4536 = vmax.f32 %v4469, 0.0
        %v4537 = vmax.f32 %v4472, 0.0
        %v4538 = vmax.f32 %v4475, 0.0
        %v4539 = vmax.f32 %v4478, 0.0
        %v4540 = vmax.f32 %v4481, 0.0
        %v4541 = vmax.f32 %v4484, 0.0
        %v4542 = vmax.f32 %v4487, 0.0
        %v4543 = vmax.f32 %v4490, 0.0
        %v4544 = vmax.f32 %v4493, 0.0
        %v4545 = vmax.f32 %v4496, 0.0
        %v4546 = vmax.f32 %v4499, 0.0
        %v4547 = vmax.f32 %v4502, 0.0
        %v4548 = vmax.f32 %v4505, 0.0
        %v4549 = vmax.f32 %v4508, 0.0
        %v4550 = vmax.f32 %v4511, 0.0
        %v4551 = vmax.f32 %v4514, 0.0
        %v4552 = vmax.f32 %v4517, 0.0
        %v4553 = vmax.f32 %v4520, 0.0
        %4554 = vrot.lane.b32.xlu0 %v2754, 32
        %v4555 = vpop.permute.xlu0 %4554
        %4556 = vrot.lane.b32.xlu0 %v2755, 32
        %v4557 = vpop.permute.xlu0 %4556
        %4558 = vrot.lane.b32.xlu0 %v2756, 32
        %v4559 = vpop.permute.xlu0 %4558
        %4560 = vrot.lane.b32.xlu0 %v2757, 32
        %v4561 = vpop.permute.xlu0 %4560
        %4562 = vrot.lane.b32.xlu0 %v2758, 32
        %v4563 = vpop.permute.xlu0 %4562
        %4564 = vrot.lane.b32.xlu0 %v2759, 32
        %v4565 = vpop.permute.xlu0 %4564
        %4566 = vrot.lane.b32.xlu0 %v2760, 32
        %v4567 = vpop.permute.xlu0 %4566
        %4568 = vrot.lane.b32.xlu0 %v2761, 32
        %v4569 = vpop.permute.xlu0 %4568
        %4570 = vrot.lane.b32.xlu0 %v2762, 32
        %v4571 = vpop.permute.xlu0 %4570
        %4572 = vrot.lane.b32.xlu0 %v2763, 32
        %v4573 = vpop.permute.xlu0 %4572
        %4574 = vrot.lane.b32.xlu0 %v2764, 32
        %v4575 = vpop.permute.xlu0 %4574
        %4576 = vrot.lane.b32.xlu0 %v2765, 32
        %v4577 = vpop.permute.xlu0 %4576
        %4578 = vrot.lane.b32.xlu0 %v2766, 32
        %v4579 = vpop.permute.xlu0 %4578
        %4580 = vrot.lane.b32.xlu0 %v2767, 32
        %v4581 = vpop.permute.xlu0 %4580
        %4582 = vrot.lane.b32.xlu0 %v2768, 32
        %v4583 = vpop.permute.xlu0 %4582
        %4584 = vrot.lane.b32.xlu0 %v2769, 32
        %v4585 = vpop.permute.xlu0 %4584
        %4586 = vrot.lane.b32.xlu0 %v2770, 32
        %v4587 = vpop.permute.xlu0 %4586
        %4588 = vrot.lane.b32.xlu0 %v2771, 32
        %v4589 = vpop.permute.xlu0 %4588
        %4590 = vrot.lane.b32.xlu0 %v2772, 32
        %v4591 = vpop.permute.xlu0 %4590
        %4592 = vrot.lane.b32.xlu0 %v2773, 32
        %v4593 = vpop.permute.xlu0 %4592
        %4594 = vrot.lane.b32.xlu0 %v2774, 32
        %v4595 = vpop.permute.xlu0 %4594
        %4596 = vrot.lane.b32.xlu0 %v2775, 32
        %v4597 = vpop.permute.xlu0 %4596
        %4598 = vrot.lane.b32.xlu0 %v2776, 32
        %v4599 = vpop.permute.xlu0 %4598
        %4600 = vrot.lane.b32.xlu0 %v2777, 32
        %v4601 = vpop.permute.xlu0 %4600
        %4602 = vrot.lane.b32.xlu0 %v2778, 32
        %v4603 = vpop.permute.xlu0 %4602
        %4604 = vrot.lane.b32.xlu0 %v2779, 32
        %v4605 = vpop.permute.xlu0 %4604
        %4606 = vrot.lane.b32.xlu0 %v2780, 32
        %v4607 = vpop.permute.xlu0 %4606
        %4608 = vrot.lane.b32.xlu0 %v2781, 32
        %v4609 = vpop.permute.xlu0 %4608
        %4610 = vrot.lane.b32.xlu0 %v2782, 32
        %v4611 = vpop.permute.xlu0 %4610
        %4612 = vrot.lane.b32.xlu0 %v2783, 32
        %v4613 = vpop.permute.xlu0 %4612
        %4614 = vrot.lane.b32.xlu0 %v2784, 32
        %v4615 = vpop.permute.xlu0 %4614
        %4616 = vrot.lane.b32.xlu0 %v2785, 32
        %v4617 = vpop.permute.xlu0 %4616
        %v4650 = vsel %vm2212, %v4522, %v4555
        %v4651 = vsel %vm2212, %v4523, %v4557
        %v4652 = vsel %vm2212, %v4524, %v4559
        %v4653 = vsel %vm2212, %v4525, %v4561
        %v4654 = vsel %vm2212, %v4526, %v4563
        %v4655 = vsel %vm2212, %v4527, %v4565
        %v4656 = vsel %vm2212, %v4528, %v4567
        %v4657 = vsel %vm2212, %v4529, %v4569
        %v4658 = vsel %vm2212, %v4530, %v4571
        %v4659 = vsel %vm2212, %v4531, %v4573
        %v4660 = vsel %vm2212, %v4532, %v4575
        %v4661 = vsel %vm2212, %v4533, %v4577
        %v4662 = vsel %vm2212, %v4534, %v4579
        %v4663 = vsel %vm2212, %v4535, %v4581
        %v4664 = vsel %vm2212, %v4536, %v4583
        %v4665 = vsel %vm2212, %v4537, %v4585
        %v4666 = vsel %vm2212, %v4538, %v4587
        %v4667 = vsel %vm2212, %v4539, %v4589
        %v4668 = vsel %vm2212, %v4540, %v4591
        %v4669 = vsel %vm2212, %v4541, %v4593
        %v4670 = vsel %vm2212, %v4542, %v4595
        %v4671 = vsel %vm2212, %v4543, %v4597
        %v4672 = vsel %vm2212, %v4544, %v4599
        %v4673 = vsel %vm2212, %v4545, %v4601
        %v4674 = vsel %vm2212, %v4546, %v4603
        %v4675 = vsel %vm2212, %v4547, %v4605
        %v4676 = vsel %vm2212, %v4548, %v4607
        %v4677 = vsel %vm2212, %v4549, %v4609
        %v4678 = vsel %vm2212, %v4550, %v4611
        %v4679 = vsel %vm2212, %v4551, %v4613
        %v4680 = vsel %vm2212, %v4552, %v4615
        %v4681 = vsel %vm2212, %v4553, %v4617
        %v4682 = vld [vmem:[%s19] sm:$0xff]
        %v4683 = vld [vmem:[%s19 + $0x8] sm:$0xff]
        %v4684 = vld [vmem:[%s19 + $0x10] sm:$0xff]
        %v4685 = vld [vmem:[%s19 + $0x18] sm:$0xff]
        %v4686 = vld [vmem:[%s19 + $0x20] sm:$0xff]
        %v4687 = vld [vmem:[%s19 + $0x28] sm:$0xff]
        %v4688 = vld [vmem:[%s19 + $0x30] sm:$0xff]
        %v4689 = vld [vmem:[%s19 + $0x38] sm:$0xff]
        %v4690 = vld [vmem:[#allocation16] sm:$0x1]
        %v4692 = vperm.slane %v4690, 0
        %v4695 = vsel %vm2278, %v4650, 0
        %v4698 = vsel %vm2278, %v4651, 0
        %v4701 = vsel %vm2278, %v4652, 0
        %v4704 = vsel %vm2278, %v4653, 0
        %v4707 = vsel %vm2278, %v4654, 0
        %v4710 = vsel %vm2278, %v4655, 0
        %v4713 = vsel %vm2278, %v4656, 0
        %v4716 = vsel %vm2278, %v4657, 0
        %v4719 = vsel %vm2278, %v4658, 0
        %v4722 = vsel %vm2278, %v4659, 0
        %v4725 = vsel %vm2278, %v4660, 0
        %v4728 = vsel %vm2278, %v4661, 0
        %v4731 = vsel %vm2278, %v4662, 0
        %v4734 = vsel %vm2278, %v4663, 0
        %v4737 = vsel %vm2278, %v4664, 0
        %v4740 = vsel %vm2278, %v4665, 0
        %v4743 = vsel %vm2278, %v4666, 0
        %v4746 = vsel %vm2278, %v4667, 0
        %v4749 = vsel %vm2278, %v4668, 0
        %v4752 = vsel %vm2278, %v4669, 0
        %v4755 = vsel %vm2278, %v4670, 0
        %v4758 = vsel %vm2278, %v4671, 0
        %v4761 = vsel %vm2278, %v4672, 0
        %v4764 = vsel %vm2278, %v4673, 0
        %v4767 = vsel %vm2278, %v4674, 0
        %v4770 = vsel %vm2278, %v4675, 0
        %v4773 = vsel %vm2278, %v4676, 0
        %v4776 = vsel %vm2278, %v4677, 0
        %v4779 = vsel %vm2278, %v4678, 0
        %v4782 = vsel %vm2278, %v4679, 0
        %v4785 = vsel %vm2278, %v4680, 0
        %v4788 = vsel %vm2278, %v4681, 0
        %4790 = vmatpush.msra.mxu0 0.0
        %4791 = vmatpush.msra.mxu0 0.0
        %4792 = vmatpush.msra.mxu0 0.0
        %4793 = vmatpush.msra.mxu0 0.0
        %4794 = vmatpush.msra.mxu0 0.0
        %4795 = vmatpush.msra.mxu0 0.0
        %4796 = vmatpush.msra.mxu0 0.0
        %4797 = vmatpush.msra.mxu0 0.0
        %4798 = vmatpush.msra.mxu0 %v4689
        %4799 = vmatpush.msra.mxu0 %v4688
        %4800 = vmatpush.msra.mxu0 %v4687
        %4801 = vmatpush.msra.mxu0 %v4686
        %4802 = vmatpush.msra.mxu0 %v4685
        %4803 = vmatpush.msra.mxu0 %v4684
        %4804 = vmatpush.msra.mxu0 %v4683
        %4805 = vmatpush.msra.mxu0 %v4682
        %4806 = vmatmul.f32.gmra.mxu0 %v4695
        %v4807 = vpop.f32.mrf.mxu0
        %v4808 = vadd.f32 %v4692, %v4807
        %4809 = vmatmul.f32.gmra.mxu0 %v4698
        %v4810 = vpop.f32.mrf.mxu0
        %v4811 = vadd.f32 %v4692, %v4810
        %4812 = vmatmul.f32.gmra.mxu0 %v4701
        %v4813 = vpop.f32.mrf.mxu0
        %v4814 = vadd.f32 %v4692, %v4813
        %4815 = vmatmul.f32.gmra.mxu0 %v4704
        %v4816 = vpop.f32.mrf.mxu0
        %v4817 = vadd.f32 %v4692, %v4816
        %4818 = vmatmul.f32.gmra.mxu0 %v4707
        %v4819 = vpop.f32.mrf.mxu0
        %v4820 = vadd.f32 %v4692, %v4819
        %4821 = vmatmul.f32.gmra.mxu0 %v4710
        %v4822 = vpop.f32.mrf.mxu0
        %v4823 = vadd.f32 %v4692, %v4822
        %4824 = vmatmul.f32.gmra.mxu0 %v4713
        %v4825 = vpop.f32.mrf.mxu0
        %v4826 = vadd.f32 %v4692, %v4825
        %4827 = vmatmul.f32.gmra.mxu0 %v4716
        %v4828 = vpop.f32.mrf.mxu0
        %v4829 = vadd.f32 %v4692, %v4828
        %4830 = vmatmul.f32.gmra.mxu0 %v4719
        %v4831 = vpop.f32.mrf.mxu0
        %v4832 = vadd.f32 %v4692, %v4831
        %4833 = vmatmul.f32.gmra.mxu0 %v4722
        %v4834 = vpop.f32.mrf.mxu0
        %v4835 = vadd.f32 %v4692, %v4834
        %4836 = vmatmul.f32.gmra.mxu0 %v4725
        %v4837 = vpop.f32.mrf.mxu0
        %v4838 = vadd.f32 %v4692, %v4837
        %4839 = vmatmul.f32.gmra.mxu0 %v4728
        %v4840 = vpop.f32.mrf.mxu0
        %v4841 = vadd.f32 %v4692, %v4840
        %4842 = vmatmul.f32.gmra.mxu0 %v4731
        %v4843 = vpop.f32.mrf.mxu0
        %v4844 = vadd.f32 %v4692, %v4843
        %4845 = vmatmul.f32.gmra.mxu0 %v4734
        %v4846 = vpop.f32.mrf.mxu0
        %v4847 = vadd.f32 %v4692, %v4846
        %4848 = vmatmul.f32.gmra.mxu0 %v4737
        %v4849 = vpop.f32.mrf.mxu0
        %v4850 = vadd.f32 %v4692, %v4849
        %4851 = vmatmul.f32.gmra.mxu0 %v4740
        %v4852 = vpop.f32.mrf.mxu0
        %v4853 = vadd.f32 %v4692, %v4852
        %4854 = vmatmul.f32.gmra.mxu0 %v4743
        %v4855 = vpop.f32.mrf.mxu0
        %v4856 = vadd.f32 %v4692, %v4855
        %4857 = vmatmul.f32.gmra.mxu0 %v4746
        %v4858 = vpop.f32.mrf.mxu0
        %v4859 = vadd.f32 %v4692, %v4858
        %4860 = vmatmul.f32.gmra.mxu0 %v4749
        %v4861 = vpop.f32.mrf.mxu0
        %v4862 = vadd.f32 %v4692, %v4861
        %4863 = vmatmul.f32.gmra.mxu0 %v4752
        %v4864 = vpop.f32.mrf.mxu0
        %v4865 = vadd.f32 %v4692, %v4864
        %4866 = vmatmul.f32.gmra.mxu0 %v4755
        %v4867 = vpop.f32.mrf.mxu0
        %v4868 = vadd.f32 %v4692, %v4867
        %4869 = vmatmul.f32.gmra.mxu0 %v4758
        %v4870 = vpop.f32.mrf.mxu0
        %v4871 = vadd.f32 %v4692, %v4870
        %4872 = vmatmul.f32.gmra.mxu0 %v4761
        %v4873 = vpop.f32.mrf.mxu0
        %v4874 = vadd.f32 %v4692, %v4873
        %4875 = vmatmul.f32.gmra.mxu0 %v4764
        %v4876 = vpop.f32.mrf.mxu0
        %v4877 = vadd.f32 %v4692, %v4876
        %4878 = vmatmul.f32.gmra.mxu0 %v4767
        %v4879 = vpop.f32.mrf.mxu0
        %v4880 = vadd.f32 %v4692, %v4879
        %4881 = vmatmul.f32.gmra.mxu0 %v4770
        %v4882 = vpop.f32.mrf.mxu0
        %v4883 = vadd.f32 %v4692, %v4882
        %4884 = vmatmul.f32.gmra.mxu0 %v4773
        %v4885 = vpop.f32.mrf.mxu0
        %v4886 = vadd.f32 %v4692, %v4885
        %4887 = vmatmul.f32.gmra.mxu0 %v4776
        %v4888 = vpop.f32.mrf.mxu0
        %v4889 = vadd.f32 %v4692, %v4888
        %4890 = vmatmul.f32.gmra.mxu0 %v4779
        %v4891 = vpop.f32.mrf.mxu0
        %v4892 = vadd.f32 %v4692, %v4891
        %4893 = vmatmul.f32.gmra.mxu0 %v4782
        %v4894 = vpop.f32.mrf.mxu0
        %v4895 = vadd.f32 %v4692, %v4894
        %4896 = vmatmul.f32.gmra.mxu0 %v4785
        %v4897 = vpop.f32.mrf.mxu0
        %v4898 = vadd.f32 %v4692, %v4897
        %4899 = vmatmul.f32.gmra.mxu0 %v4788
        %v4900 = vpop.f32.mrf.mxu0
        %v4901 = vadd.f32 %v4692, %v4900
        %4902 = vdwg.mxu0
        %v4903 = vmax.f32 %v4808, 0.0
        %v4904 = vmax.f32 %v4811, 0.0
        %v4905 = vmax.f32 %v4814, 0.0
        %v4906 = vmax.f32 %v4817, 0.0
        %v4907 = vmax.f32 %v4820, 0.0
        %v4908 = vmax.f32 %v4823, 0.0
        %v4909 = vmax.f32 %v4826, 0.0
        %v4910 = vmax.f32 %v4829, 0.0
        %v4911 = vmax.f32 %v4832, 0.0
        %v4912 = vmax.f32 %v4835, 0.0
        %v4913 = vmax.f32 %v4838, 0.0
        %v4914 = vmax.f32 %v4841, 0.0
        %v4915 = vmax.f32 %v4844, 0.0
        %v4916 = vmax.f32 %v4847, 0.0
        %v4917 = vmax.f32 %v4850, 0.0
        %v4918 = vmax.f32 %v4853, 0.0
        %v4919 = vmax.f32 %v4856, 0.0
        %v4920 = vmax.f32 %v4859, 0.0
        %v4921 = vmax.f32 %v4862, 0.0
        %v4922 = vmax.f32 %v4865, 0.0
        %v4923 = vmax.f32 %v4868, 0.0
        %v4924 = vmax.f32 %v4871, 0.0
        %v4925 = vmax.f32 %v4874, 0.0
        %v4926 = vmax.f32 %v4877, 0.0
        %v4927 = vmax.f32 %v4880, 0.0
        %v4928 = vmax.f32 %v4883, 0.0
        %v4929 = vmax.f32 %v4886, 0.0
        %v4930 = vmax.f32 %v4889, 0.0
        %v4931 = vmax.f32 %v4892, 0.0
        %v4932 = vmax.f32 %v4895, 0.0
        %v4933 = vmax.f32 %v4898, 0.0
        %v4934 = vmax.f32 %v4901, 0.0
        %v4935 = vld [vmem:[%s21] sm:$0xff]
        %v4936 = vld [vmem:[%s21 + $0x8] sm:$0xff]
        %v4937 = vld [vmem:[%s21 + $0x10] sm:$0xff]
        %v4938 = vld [vmem:[%s21 + $0x18] sm:$0xff]
        %v4939 = vld [vmem:[%s21 + $0x20] sm:$0xff]
        %v4940 = vld [vmem:[%s21 + $0x28] sm:$0xff]
        %v4941 = vld [vmem:[%s21 + $0x30] sm:$0xff]
        %v4942 = vld [vmem:[%s21 + $0x38] sm:$0xff]
        %v4943 = vld [vmem:[%s21 + $0x40] sm:$0xff]
        %v4944 = vld [vmem:[%s21 + $0x48] sm:$0xff]
        %v4945 = vld [vmem:[%s21 + $0x50] sm:$0xff]
        %v4946 = vld [vmem:[%s21 + $0x58] sm:$0xff]
        %v4947 = vld [vmem:[%s21 + $0x60] sm:$0xff]
        %v4948 = vld [vmem:[%s21 + $0x68] sm:$0xff]
        %v4949 = vld [vmem:[%s21 + $0x70] sm:$0xff]
        %v4950 = vld [vmem:[%s21 + $0x78] sm:$0xff]
        %v4951 = vld [vmem:[#allocation17] sm:$0x1]
        %v4953 = vperm.slane %v4951, 0
        %4955 = vmatpush.msra.mxu0 %v4950
        %4956 = vmatpush.msra.mxu0 %v4949
        %4957 = vmatpush.msra.mxu0 %v4948
        %4958 = vmatpush.msra.mxu0 %v4947
        %4959 = vmatpush.msra.mxu0 %v4946
        %4960 = vmatpush.msra.mxu0 %v4945
        %4961 = vmatpush.msra.mxu0 %v4944
        %4962 = vmatpush.msra.mxu0 %v4943
        %4963 = vmatpush.msra.mxu0 %v4942
        %4964 = vmatpush.msra.mxu0 %v4941
        %4965 = vmatpush.msra.mxu0 %v4940
        %4966 = vmatpush.msra.mxu0 %v4939
        %4967 = vmatpush.msra.mxu0 %v4938
        %4968 = vmatpush.msra.mxu0 %v4937
        %4969 = vmatpush.msra.mxu0 %v4936
        %4970 = vmatpush.msra.mxu0 %v4935
        %4971 = vmatmul.f32.gmra.mxu0 %v4903
        %v4972 = vpop.f32.mrf.mxu0
        %v4973 = vadd.f32 %v4953, %v4972
        %4974 = vmatmul.f32.gmra.mxu0 %v4904
        %v4975 = vpop.f32.mrf.mxu0
        %v4976 = vadd.f32 %v4953, %v4975
        %4977 = vmatmul.f32.gmra.mxu0 %v4905
        %v4978 = vpop.f32.mrf.mxu0
        %v4979 = vadd.f32 %v4953, %v4978
        %4980 = vmatmul.f32.gmra.mxu0 %v4906
        %v4981 = vpop.f32.mrf.mxu0
        %v4982 = vadd.f32 %v4953, %v4981
        %4983 = vmatmul.f32.gmra.mxu0 %v4907
        %v4984 = vpop.f32.mrf.mxu0
        %v4985 = vadd.f32 %v4953, %v4984
        %4986 = vmatmul.f32.gmra.mxu0 %v4908
        %v4987 = vpop.f32.mrf.mxu0
        %v4988 = vadd.f32 %v4953, %v4987
        %4989 = vmatmul.f32.gmra.mxu0 %v4909
        %v4990 = vpop.f32.mrf.mxu0
        %v4991 = vadd.f32 %v4953, %v4990
        %4992 = vmatmul.f32.gmra.mxu0 %v4910
        %v4993 = vpop.f32.mrf.mxu0
        %v4994 = vadd.f32 %v4953, %v4993
        %4995 = vmatmul.f32.gmra.mxu0 %v4911
        %v4996 = vpop.f32.mrf.mxu0
        %v4997 = vadd.f32 %v4953, %v4996
        %4998 = vmatmul.f32.gmra.mxu0 %v4912
        %v4999 = vpop.f32.mrf.mxu0
        %v5000 = vadd.f32 %v4953, %v4999
        %5001 = vmatmul.f32.gmra.mxu0 %v4913
        %v5002 = vpop.f32.mrf.mxu0
        %v5003 = vadd.f32 %v4953, %v5002
        %5004 = vmatmul.f32.gmra.mxu0 %v4914
        %v5005 = vpop.f32.mrf.mxu0
        %v5006 = vadd.f32 %v4953, %v5005
        %5007 = vmatmul.f32.gmra.mxu0 %v4915
        %v5008 = vpop.f32.mrf.mxu0
        %v5009 = vadd.f32 %v4953, %v5008
        %5010 = vmatmul.f32.gmra.mxu0 %v4916
        %v5011 = vpop.f32.mrf.mxu0
        %v5012 = vadd.f32 %v4953, %v5011
        %5013 = vmatmul.f32.gmra.mxu0 %v4917
        %v5014 = vpop.f32.mrf.mxu0
        %v5015 = vadd.f32 %v4953, %v5014
        %5016 = vmatmul.f32.gmra.mxu0 %v4918
        %v5017 = vpop.f32.mrf.mxu0
        %v5018 = vadd.f32 %v4953, %v5017
        %5019 = vmatmul.f32.gmra.mxu0 %v4919
        %v5020 = vpop.f32.mrf.mxu0
        %v5021 = vadd.f32 %v4953, %v5020
        %5022 = vmatmul.f32.gmra.mxu0 %v4920
        %v5023 = vpop.f32.mrf.mxu0
        %v5024 = vadd.f32 %v4953, %v5023
        %5025 = vmatmul.f32.gmra.mxu0 %v4921
        %v5026 = vpop.f32.mrf.mxu0
        %v5027 = vadd.f32 %v4953, %v5026
        %5028 = vmatmul.f32.gmra.mxu0 %v4922
        %v5029 = vpop.f32.mrf.mxu0
        %v5030 = vadd.f32 %v4953, %v5029
        %5031 = vmatmul.f32.gmra.mxu0 %v4923
        %v5032 = vpop.f32.mrf.mxu0
        %v5033 = vadd.f32 %v4953, %v5032
        %5034 = vmatmul.f32.gmra.mxu0 %v4924
        %v5035 = vpop.f32.mrf.mxu0
        %v5036 = vadd.f32 %v4953, %v5035
        %5037 = vmatmul.f32.gmra.mxu0 %v4925
        %v5038 = vpop.f32.mrf.mxu0
        %v5039 = vadd.f32 %v4953, %v5038
        %5040 = vmatmul.f32.gmra.mxu0 %v4926
        %v5041 = vpop.f32.mrf.mxu0
        %v5042 = vadd.f32 %v4953, %v5041
        %5043 = vmatmul.f32.gmra.mxu0 %v4927
        %v5044 = vpop.f32.mrf.mxu0
        %v5045 = vadd.f32 %v4953, %v5044
        %5046 = vmatmul.f32.gmra.mxu0 %v4928
        %v5047 = vpop.f32.mrf.mxu0
        %v5048 = vadd.f32 %v4953, %v5047
        %5049 = vmatmul.f32.gmra.mxu0 %v4929
        %v5050 = vpop.f32.mrf.mxu0
        %v5051 = vadd.f32 %v4953, %v5050
        %5052 = vmatmul.f32.gmra.mxu0 %v4930
        %v5053 = vpop.f32.mrf.mxu0
        %v5054 = vadd.f32 %v4953, %v5053
        %5055 = vmatmul.f32.gmra.mxu0 %v4931
        %v5056 = vpop.f32.mrf.mxu0
        %v5057 = vadd.f32 %v4953, %v5056
        %5058 = vmatmul.f32.gmra.mxu0 %v4932
        %v5059 = vpop.f32.mrf.mxu0
        %v5060 = vadd.f32 %v4953, %v5059
        %5061 = vmatmul.f32.gmra.mxu0 %v4933
        %v5062 = vpop.f32.mrf.mxu0
        %v5063 = vadd.f32 %v4953, %v5062
        %5064 = vmatmul.f32.gmra.mxu0 %v4934
        %v5065 = vpop.f32.mrf.mxu0
        %v5066 = vadd.f32 %v4953, %v5065
        %5067 = vdwg.mxu0
        %v5068 = vld [vmem:[#allocation5] sm:$0xff]
        %v5069 = vld [vmem:[#allocation5 + $0x8] sm:$0xff]
        %v5070 = vld [vmem:[%s8] sm:$0x1]
        %v5072 = vperm.slane %v5070, 0
        %5074 = vmatpush.msra.mxu0 0.0
        %5075 = vmatpush.msra.mxu0 0.0
        %5076 = vmatpush.msra.mxu0 0.0
        %5077 = vmatpush.msra.mxu0 0.0
        %5078 = vmatpush.msra.mxu0 0.0
        %5079 = vmatpush.msra.mxu0 0.0
        %5080 = vmatpush.msra.mxu0 0.0
        %5081 = vmatpush.msra.mxu0 0.0
        %5082 = vmatpush.msra.mxu0 0.0
        %5083 = vmatpush.msra.mxu0 0.0
        %5084 = vmatpush.msra.mxu0 0.0
        %5085 = vmatpush.msra.mxu0 0.0
        %5086 = vmatpush.msra.mxu0 0.0
        %5087 = vmatpush.msra.mxu0 0.0
        %5088 = vmatpush.msra.mxu0 %v5069
        %5089 = vmatpush.msra.mxu0 %v5068
        %5090 = vmatmul.f32.gmra.mxu0 %v3109
        %v5091 = vpop.f32.mrf.mxu0
        %v5092 = vadd.f32 %v5072, %v5091
        %5093 = vmatmul.f32.gmra.mxu0 %v3112
        %v5094 = vpop.f32.mrf.mxu0
        %v5095 = vadd.f32 %v5072, %v5094
        %5096 = vmatmul.f32.gmra.mxu0 %v3115
        %v5097 = vpop.f32.mrf.mxu0
        %v5098 = vadd.f32 %v5072, %v5097
        %5099 = vmatmul.f32.gmra.mxu0 %v3118
        %v5100 = vpop.f32.mrf.mxu0
        %v5101 = vadd.f32 %v5072, %v5100
        %5102 = vmatmul.f32.gmra.mxu0 %v3121
        %v5103 = vpop.f32.mrf.mxu0
        %v5104 = vadd.f32 %v5072, %v5103
        %5105 = vmatmul.f32.gmra.mxu0 %v3124
        %v5106 = vpop.f32.mrf.mxu0
        %v5107 = vadd.f32 %v5072, %v5106
        %5108 = vmatmul.f32.gmra.mxu0 %v3127
        %v5109 = vpop.f32.mrf.mxu0
        %v5110 = vadd.f32 %v5072, %v5109
        %5111 = vmatmul.f32.gmra.mxu0 %v3130
        %v5112 = vpop.f32.mrf.mxu0
        %v5113 = vadd.f32 %v5072, %v5112
        %5114 = vmatmul.f32.gmra.mxu0 %v3133
        %v5115 = vpop.f32.mrf.mxu0
        %v5116 = vadd.f32 %v5072, %v5115
        %5117 = vmatmul.f32.gmra.mxu0 %v3136
        %v5118 = vpop.f32.mrf.mxu0
        %v5119 = vadd.f32 %v5072, %v5118
        %5120 = vmatmul.f32.gmra.mxu0 %v3139
        %v5121 = vpop.f32.mrf.mxu0
        %v5122 = vadd.f32 %v5072, %v5121
        %5123 = vmatmul.f32.gmra.mxu0 %v3142
        %v5124 = vpop.f32.mrf.mxu0
        %v5125 = vadd.f32 %v5072, %v5124
        %5126 = vmatmul.f32.gmra.mxu0 %v3145
        %v5127 = vpop.f32.mrf.mxu0
        %v5128 = vadd.f32 %v5072, %v5127
        %5129 = vmatmul.f32.gmra.mxu0 %v3148
        %v5130 = vpop.f32.mrf.mxu0
        %v5131 = vadd.f32 %v5072, %v5130
        %5132 = vmatmul.f32.gmra.mxu0 %v3151
        %v5133 = vpop.f32.mrf.mxu0
        %v5134 = vadd.f32 %v5072, %v5133
        %5135 = vmatmul.f32.gmra.mxu0 %v3154
        %v5136 = vpop.f32.mrf.mxu0
        %v5137 = vadd.f32 %v5072, %v5136
        %5138 = vmatmul.f32.gmra.mxu0 %v3157
        %v5139 = vpop.f32.mrf.mxu0
        %v5140 = vadd.f32 %v5072, %v5139
        %5141 = vmatmul.f32.gmra.mxu0 %v3160
        %v5142 = vpop.f32.mrf.mxu0
        %v5143 = vadd.f32 %v5072, %v5142
        %5144 = vmatmul.f32.gmra.mxu0 %v3163
        %v5145 = vpop.f32.mrf.mxu0
        %v5146 = vadd.f32 %v5072, %v5145
        %5147 = vmatmul.f32.gmra.mxu0 %v3166
        %v5148 = vpop.f32.mrf.mxu0
        %v5149 = vadd.f32 %v5072, %v5148
        %5150 = vmatmul.f32.gmra.mxu0 %v3169
        %v5151 = vpop.f32.mrf.mxu0
        %v5152 = vadd.f32 %v5072, %v5151
        %5153 = vmatmul.f32.gmra.mxu0 %v3172
        %v5154 = vpop.f32.mrf.mxu0
        %v5155 = vadd.f32 %v5072, %v5154
        %5156 = vmatmul.f32.gmra.mxu0 %v3175
        %v5157 = vpop.f32.mrf.mxu0
        %v5158 = vadd.f32 %v5072, %v5157
        %5159 = vmatmul.f32.gmra.mxu0 %v3178
        %v5160 = vpop.f32.mrf.mxu0
        %v5161 = vadd.f32 %v5072, %v5160
        %5162 = vmatmul.f32.gmra.mxu0 %v3181
        %v5163 = vpop.f32.mrf.mxu0
        %v5164 = vadd.f32 %v5072, %v5163
        %5165 = vmatmul.f32.gmra.mxu0 %v3184
        %v5166 = vpop.f32.mrf.mxu0
        %v5167 = vadd.f32 %v5072, %v5166
        %5168 = vmatmul.f32.gmra.mxu0 %v3187
        %v5169 = vpop.f32.mrf.mxu0
        %v5170 = vadd.f32 %v5072, %v5169
        %5171 = vmatmul.f32.gmra.mxu0 %v3190
        %v5172 = vpop.f32.mrf.mxu0
        %v5173 = vadd.f32 %v5072, %v5172
        %5174 = vmatmul.f32.gmra.mxu0 %v3193
        %v5175 = vpop.f32.mrf.mxu0
        %v5176 = vadd.f32 %v5072, %v5175
        %5177 = vmatmul.f32.gmra.mxu0 %v3196
        %v5178 = vpop.f32.mrf.mxu0
        %v5179 = vadd.f32 %v5072, %v5178
        %5180 = vmatmul.f32.gmra.mxu0 %v3199
        %v5181 = vpop.f32.mrf.mxu0
        %v5182 = vadd.f32 %v5072, %v5181
        %5183 = vmatmul.f32.gmra.mxu0 %v3202
        %v5184 = vpop.f32.mrf.mxu0
        %v5185 = vadd.f32 %v5072, %v5184
        %5186 = vdwg.mxu0
        %v5187 = vadd.f32 %v4903, %v4973
        %v5188 = vadd.f32 %v4904, %v4976
        %v5189 = vadd.f32 %v4905, %v4979
        %v5190 = vadd.f32 %v4906, %v4982
        %v5191 = vadd.f32 %v4907, %v4985
        %v5192 = vadd.f32 %v4908, %v4988
        %v5193 = vadd.f32 %v4909, %v4991
        %v5194 = vadd.f32 %v4910, %v4994
        %v5195 = vadd.f32 %v4911, %v4997
        %v5196 = vadd.f32 %v4912, %v5000
        %v5197 = vadd.f32 %v4913, %v5003
        %v5198 = vadd.f32 %v4914, %v5006
        %v5199 = vadd.f32 %v4915, %v5009
        %v5200 = vadd.f32 %v4916, %v5012
        %v5201 = vadd.f32 %v4917, %v5015
        %v5202 = vadd.f32 %v4918, %v5018
        %v5203 = vadd.f32 %v4919, %v5021
        %v5204 = vadd.f32 %v4920, %v5024
        %v5205 = vadd.f32 %v4921, %v5027
        %v5206 = vadd.f32 %v4922, %v5030
        %v5207 = vadd.f32 %v4923, %v5033
        %v5208 = vadd.f32 %v4924, %v5036
        %v5209 = vadd.f32 %v4925, %v5039
        %v5210 = vadd.f32 %v4926, %v5042
        %v5211 = vadd.f32 %v4927, %v5045
        %v5212 = vadd.f32 %v4928, %v5048
        %v5213 = vadd.f32 %v4929, %v5051
        %v5214 = vadd.f32 %v4930, %v5054
        %v5215 = vadd.f32 %v4931, %v5057
        %v5216 = vadd.f32 %v4932, %v5060
        %v5217 = vadd.f32 %v4933, %v5063
        %v5218 = vadd.f32 %v4934, %v5066
        %v5219 = vadd.f32 %v5187, %v5092
        %v5220 = vadd.f32 %v5188, %v5095
        %v5221 = vadd.f32 %v5189, %v5098
        %v5222 = vadd.f32 %v5190, %v5101
        %v5223 = vadd.f32 %v5191, %v5104
        %v5224 = vadd.f32 %v5192, %v5107
        %v5225 = vadd.f32 %v5193, %v5110
        %v5226 = vadd.f32 %v5194, %v5113
        %v5227 = vadd.f32 %v5195, %v5116
        %v5228 = vadd.f32 %v5196, %v5119
        %v5229 = vadd.f32 %v5197, %v5122
        %v5230 = vadd.f32 %v5198, %v5125
        %v5231 = vadd.f32 %v5199, %v5128
        %v5232 = vadd.f32 %v5200, %v5131
        %v5233 = vadd.f32 %v5201, %v5134
        %v5234 = vadd.f32 %v5202, %v5137
        %v5235 = vadd.f32 %v5203, %v5140
        %v5236 = vadd.f32 %v5204, %v5143
        %v5237 = vadd.f32 %v5205, %v5146
        %v5238 = vadd.f32 %v5206, %v5149
        %v5239 = vadd.f32 %v5207, %v5152
        %v5240 = vadd.f32 %v5208, %v5155
        %v5241 = vadd.f32 %v5209, %v5158
        %v5242 = vadd.f32 %v5210, %v5161
        %v5243 = vadd.f32 %v5211, %v5164
        %v5244 = vadd.f32 %v5212, %v5167
        %v5245 = vadd.f32 %v5213, %v5170
        %v5246 = vadd.f32 %v5214, %v5173
        %v5247 = vadd.f32 %v5215, %v5176
        %v5248 = vadd.f32 %v5216, %v5179
        %v5249 = vadd.f32 %v5217, %v5182
        %v5250 = vadd.f32 %v5218, %v5185
        %5251 = vst [vmem:[%s873] sm:$0xff] %v5219
        %5252 = vst [vmem:[%s873 + $0x8] sm:$0xff] %v5220
        %5253 = vst [vmem:[%s873 + $0x10] sm:$0xff] %v5221
        %5254 = vst [vmem:[%s873 + $0x18] sm:$0xff] %v5222
        %5255 = vst [vmem:[%s873 + $0x20] sm:$0xff] %v5223
        %5256 = vst [vmem:[%s873 + $0x28] sm:$0xff] %v5224
        %5257 = vst [vmem:[%s873 + $0x30] sm:$0xff] %v5225
        %5258 = vst [vmem:[%s873 + $0x38] sm:$0xff] %v5226
        %5259 = vst [vmem:[%s873 + $0x40] sm:$0xff] %v5227
        %5260 = vst [vmem:[%s873 + $0x48] sm:$0xff] %v5228
        %5261 = vst [vmem:[%s873 + $0x50] sm:$0xff] %v5229
        %5262 = vst [vmem:[%s873 + $0x58] sm:$0xff] %v5230
        %5263 = vst [vmem:[%s873 + $0x60] sm:$0xff] %v5231
        %5264 = vst [vmem:[%s873 + $0x68] sm:$0xff] %v5232
        %5265 = vst [vmem:[%s873 + $0x70] sm:$0xff] %v5233
        %5266 = vst [vmem:[%s873 + $0x78] sm:$0xff] %v5234
        %5267 = vst [vmem:[%s873 + $0x80] sm:$0xff] %v5235
        %5268 = vst [vmem:[%s873 + $0x88] sm:$0xff] %v5236
        %5269 = vst [vmem:[%s873 + $0x90] sm:$0xff] %v5237
        %5270 = vst [vmem:[%s873 + $0x98] sm:$0xff] %v5238
        %5271 = vst [vmem:[%s873 + $0xa0] sm:$0xff] %v5239
        %5272 = vst [vmem:[%s873 + $0xa8] sm:$0xff] %v5240
        %5273 = vst [vmem:[%s873 + $0xb0] sm:$0xff] %v5241
        %5274 = vst [vmem:[%s873 + $0xb8] sm:$0xff] %v5242
        %5275 = vst [vmem:[%s873 + $0xc0] sm:$0xff] %v5243
        %5276 = vst [vmem:[%s873 + $0xc8] sm:$0xff] %v5244
        %5277 = vst [vmem:[%s873 + $0xd0] sm:$0xff] %v5245
        %5278 = vst [vmem:[%s873 + $0xd8] sm:$0xff] %v5246
        %5279 = vst [vmem:[%s873 + $0xe0] sm:$0xff] %v5247
        %5280 = vst [vmem:[%s873 + $0xe8] sm:$0xff] %v5248
        %5281 = vst [vmem:[%s873 + $0xf0] sm:$0xff] %v5249
        %5282 = vst [vmem:[%s873 + $0xf8] sm:$0xff] %v5250
        %p5283 = scmp.lt.s32.totalorder %s42, 1
        %s5284 = scalar_select %p5283, %s42, 1
        %s5285 = smul.addr %s5284, 32
        %s5286 = smul.addr %s5285, 8
        %s5287 = scalar_lea.vmem %s23, %s5286
        // Predicated region
        $region153: #{ocr_block_forward.1} parent=111 // pred_check
          %p5288 = pneg %p548
        $region154: #{ocr_block_forward.1} parent=111 // pred_check_branch
          %5290 = sbr.rel (%p5288) target = $region156
        $region155: #{ocr_block_forward.1} parent=111 // pred_region
          _
        $region156: #{ocr_block_forward.1} parent=111 // pred_fallthru
          _
      $region112: #{ocr_block_forward.1} parent=5 // pred_fallthru
        _
      %p5291 = scmp.le.s32.totalorder 2, %s37
      // Predicated region
      $region157: #{ocr_block_forward.1} parent=5 // pred_check
        %p5292 = pneg %p5291
      $region158: #{ocr_block_forward.1} parent=5 // pred_check_branch
        %5294 = sbr.rel (%p5292) target = $region160
      $region159: #{ocr_block_forward.1} parent=5 // pred_region
        %s5295 = ssub.s32 %s37, 2
        // Predicated region
        $region161: #{ocr_block_forward.1} parent=159 // pred_check
          %p5296 = pneg %p554
        $region162: #{ocr_block_forward.1} parent=159 // pred_check_branch
          %5298 = sbr.rel (%p5296) target = $region164
        $region163: #{ocr_block_forward.1} parent=159 // pred_region
          %p5299 = scmp.lt.s32.totalorder %s43, 1
          %s5300 = scalar_select %p5299, %s43, 1
          %s5301 = smul.addr %s5300, 32
          %s5302 = smul.addr %s5301, 8
          %s5303 = scalar_lea.vmem %s23, %s5302
        $region164: #{ocr_block_forward.1} parent=159 // pred_fallthru
          _
      $region160: #{ocr_block_forward.1} parent=5 // pred_fallthru
        _
    $region6: #{ocr_block_forward.1} parent=1 // loop_footer
      %s41 = sadd.s32 1, %s37
    $region7: #{ocr_block_forward.1} parent=1 // loop_footer_branch
      %36 = sbr.rel target = $region3
    $region8: #{ocr_block_forward.1} parent=1 // loop_exit
      _
    %5304 = vsyncpa [#allocation4], 1
    %s5305 = scalar_lea.sflag [#allocation4], 1
    %5306 = vsyncpa %s5305, 1
    %5307 = vsyncpa [#allocation6], 1
    %5308 = vsyncpa [#allocation9], 1
    %5309 = vsyncpa [#allocation12], 1
    %5310 = vsyncpa [#allocation15], 1
    %5311 = vsyncpa [#allocation18], 1

</llo_original>
